<compile_context>
chip_gen: v5e
topology: v5e:2x2
jax: 0.10.0
libtpu: 0.0.40
codegen_flags: <defaults>
</compile_context>

<pallas_src>
import functools

import jax
import jax.numpy as jnp
from jax.experimental import pallas as pl
from jax.experimental.pallas import tpu as pltpu


# ----------------------------------------------------------------------------
# Per-generation tuning. v5e/v6e have 128 MiB physical VMEM, v7x only 64 MiB
# per TensorCore; v5e and older have no bf16 EUP so softmax exp stays f32 there.
# ----------------------------------------------------------------------------
def _device_kind():
    try:
        return jax.devices()[0].device_kind.lower()
    except Exception:
        return ""


_KIND = _device_kind()
_IS_V7X = "7" in _KIND
_IS_PRE_V6 = any(v in _KIND for v in ("v2", "v3", "v4", "v5"))

if _IS_V7X:
    _VMEM_LIMIT = 48 * 1024 * 1024        # headroom under v7x's 64 MiB / TC
elif any(v in _KIND for v in ("v5e", "v5 lite", "v5lite", "v6")):
    _VMEM_LIMIT = 96 * 1024 * 1024        # 128 MiB physical on v5e / v6e
else:
    _VMEM_LIMIT = 64 * 1024 * 1024        # conservative default

_EXP_DTYPE = jnp.float32 if _IS_PRE_V6 else jnp.bfloat16   # bf16 EUP on v6e/v7x

_TM, _TN, _TK = 512, 1024, 512        # generic matmul tiles (fewer restreams)
_TM_LN = 256                          # row tile of fused matmul+residual+LN
_TK_LN = 1024 if _IS_V7X else 2048    # K tile of fused matmul+residual+LN
_TQ, _TKV = 512, 512                  # flash-attn: full-seq q tile for S<=512
_LN_TM = 512                          # plain layernorm row tile


def _pick_tile(dim, target, align):
    """Largest multiple of `align` that is <= target and divides dim, else dim."""
    if dim <= target:
        return dim
    t = (target // align) * align
    while t >= align:
        if dim % t == 0:
            return t
        t -= align
    return dim


def _gelu_new(x):
    # HF "gelu_new" (tanh approximation), ALBERT default activation.
    return 0.5 * x * (1.0 + jnp.tanh(
        jnp.sqrt(2.0 / jnp.pi) * (x + 0.044715 * x * x * x)))


# ----------------------------------------------------------------------------
# Tiled linear: y = act(x @ w + b)
# ----------------------------------------------------------------------------
def _linear_kernel(x_ref, w_ref, b_ref, o_ref, acc_ref, *, activation):
    @pl.when(pl.program_id(2) == 0)
    def _():
        acc_ref[...] = jnp.zeros(acc_ref.shape, jnp.float32)

    acc_ref[...] += jnp.dot(x_ref[...], w_ref[...],
                            preferred_element_type=jnp.float32)

    @pl.when(pl.program_id(2) == pl.num_programs(2) - 1)
    def _():
        y = acc_ref[...] + b_ref[...].astype(jnp.float32)
        if activation == "gelu_new":
            y = _gelu_new(y)
        elif activation == "tanh":
            y = jnp.tanh(y)
        o_ref[...] = y.astype(o_ref.dtype)


def linear(x, w, b, activation="none", out_dtype=None):
    """y = act(x @ w + b); x:(M,K) w:(K,N) b:(N,). bf16 MXU inputs, f32 acc."""
    M, K = x.shape
    N = w.shape[1]
    tm = _pick_tile(M, _TM, 16)          # 16-row alignment for bf16 packing
    tn = _pick_tile(N, _TN, 128)
    tk = _pick_tile(K, _TK, 128)
    out_dtype = x.dtype if out_dtype is None else out_dtype
    return pl.pallas_call(
        functools.partial(_linear_kernel, activation=activation),
        out_shape=jax.ShapeDtypeStruct((M, N), out_dtype),
        grid_spec=pltpu.PrefetchScalarGridSpec(
            num_scalar_prefetch=0,
            grid=(M // tm, N // tn, K // tk),
            in_specs=[
                pl.BlockSpec((tm, tk), lambda i, j, k: (i, k)),
                pl.BlockSpec((tk, tn), lambda i, j, k: (k, j)),
                pl.BlockSpec((1, tn), lambda i, j, k: (0, j)),
            ],
            out_specs=pl.BlockSpec((tm, tn), lambda i, j, k: (i, j)),
            scratch_shapes=[pltpu.VMEM((tm, tn), jnp.float32)]),
        compiler_params=pltpu.CompilerParams(
            dimension_semantics=("parallel", "parallel", "arbitrary"),
            vmem_limit_bytes=_VMEM_LIMIT),
    )(x, w, b.reshape(1, N))


# ----------------------------------------------------------------------------
# Fused tiled linear + residual add + LayerNorm: y = LN(x @ w + b + resid)
# Output block spans the full feature dim so the LN reduction stays in-kernel.
# ----------------------------------------------------------------------------
def _linear_res_ln_kernel(x_ref, w_ref, b_ref, r_ref, g_ref, bt_ref, o_ref,
                          acc_ref, *, eps):
    @pl.when(pl.program_id(1) == 0)
    def _():
        acc_ref[...] = jnp.zeros(acc_ref.shape, jnp.float32)

    acc_ref[...] += jnp.dot(x_ref[...], w_ref[...],
                            preferred_element_type=jnp.float32)

    @pl.when(pl.program_id(1) == pl.num_programs(1) - 1)
    def _():
        h = (acc_ref[...] + b_ref[...].astype(jnp.float32)
             + r_ref[...].astype(jnp.float32))
        mu = jnp.mean(h, axis=-1, keepdims=True)
        var = jnp.mean(jnp.square(h - mu), axis=-1, keepdims=True)
        y = (h - mu) * jax.lax.rsqrt(var + eps)
        o_ref[...] = (y * g_ref[...].astype(jnp.float32)
                      + bt_ref[...].astype(jnp.float32)).astype(o_ref.dtype)


def linear_residual_ln(x, w, b, resid, gamma, beta, eps=1e-12, out_dtype=None):
    """LN((x @ w + b) + resid); x:(M,K) w:(K,N) resid:(M,N)."""
    M, K = x.shape
    N = w.shape[1]
    tm = _pick_tile(M, _TM_LN, 16)
    tk = _pick_tile(K, _TK_LN, 128)
    out_dtype = resid.dtype if out_dtype is None else out_dtype
    return pl.pallas_call(
        functools.partial(_linear_res_ln_kernel, eps=eps),
        out_shape=jax.ShapeDtypeStruct((M, N), out_dtype),
        grid_spec=pltpu.PrefetchScalarGridSpec(
            num_scalar_prefetch=0,
            grid=(M // tm, K // tk),
            in_specs=[
                pl.BlockSpec((tm, tk), lambda i, k: (i, k)),
                pl.BlockSpec((tk, N), lambda i, k: (k, 0)),
                pl.BlockSpec((1, N), lambda i, k: (0, 0)),
                pl.BlockSpec((tm, N), lambda i, k: (i, 0)),
                pl.BlockSpec((1, N), lambda i, k: (0, 0)),
                pl.BlockSpec((1, N), lambda i, k: (0, 0)),
            ],
            out_specs=pl.BlockSpec((tm, N), lambda i, k: (i, 0)),
            scratch_shapes=[pltpu.VMEM((tm, N), jnp.float32)]),
        compiler_params=pltpu.CompilerParams(
            dimension_semantics=("parallel", "arbitrary"),
            vmem_limit_bytes=_VMEM_LIMIT),
    )(x, w, b.reshape(1, N), resid, gamma.reshape(1, N), beta.reshape(1, N))


# ----------------------------------------------------------------------------
# Plain row-tiled LayerNorm (no residual, used for the embedding LN)
# ----------------------------------------------------------------------------
def _ln_kernel(x_ref, g_ref, b_ref, o_ref, *, eps):
    h = x_ref[...].astype(jnp.float32)
    mu = jnp.mean(h, axis=-1, keepdims=True)
    var = jnp.mean(jnp.square(h - mu), axis=-1, keepdims=True)
    y = (h - mu) * jax.lax.rsqrt(var + eps)
    o_ref[...] = (y * g_ref[...] + b_ref[...]).astype(o_ref.dtype)


def layernorm(x, gamma, beta, eps=1e-12, out_dtype=None):
    M, H = x.shape
    tm = _pick_tile(M, _LN_TM, 16)
    out_dtype = x.dtype if out_dtype is None else out_dtype
    return pl.pallas_call(
        functools.partial(_ln_kernel, eps=eps),
        out_shape=jax.ShapeDtypeStruct((M, H), out_dtype),
        grid_spec=pltpu.PrefetchScalarGridSpec(
            num_scalar_prefetch=0,
            grid=(M // tm,),
            in_specs=[
                pl.BlockSpec((tm, H), lambda i: (i, 0)),
                pl.BlockSpec((1, H), lambda i: (0, 0)),
                pl.BlockSpec((1, H), lambda i: (0, 0)),
            ],
            out_specs=pl.BlockSpec((tm, H), lambda i: (i, 0))),
        compiler_params=pltpu.CompilerParams(
            dimension_semantics=("parallel",),
            vmem_limit_bytes=_VMEM_LIMIT),
    )(x, gamma.reshape(1, H), beta.reshape(1, H))


# ----------------------------------------------------------------------------
# Flash-style attention reading Q/K/V straight from the fused (B*S, 3H) qkv
# buffer via head-column BlockSpecs and writing the context straight into a
# (B*S, H) buffer in [head, dh] feature order -- no XLA transposes on either
# side.  Grid = (batch, head, q_tile, kv_tile) with the kv reduction innermost;
# running max / sum / accumulator live in VMEM scratch.  Never materializes
# the full score matrix.  Q is expected to be pre-scaled by 1/sqrt(Dh).
# ----------------------------------------------------------------------------
def _flash_attn_kernel(q_ref, k_ref, v_ref, mask_ref, o_ref,
                       m_sc, l_sc, acc_sc, *, exp_dtype):
    kv = pl.program_id(3)

    @pl.when(kv == 0)
    def _():
        m_sc[...] = jnp.full(m_sc.shape, -jnp.inf, jnp.float32)
        l_sc[...] = jnp.zeros(l_sc.shape, jnp.float32)
        acc_sc[...] = jnp.zeros(acc_sc.shape, jnp.float32)

    q = q_ref[...]                     # (tq, Dh)  bf16, pre-scaled by 1/sqrt(Dh)
    k = k_ref[...]                     # (tkv, Dh) bf16
    s = jax.lax.dot_general(q, k, (((1,), (1,)), ((), ())),
                            preferred_element_type=jnp.float32)
    s = s + mask_ref[0].astype(jnp.float32)          # (1, tkv) broadcast

    m_prev = m_sc[...]                               # (tq, 1)
    m_new = jnp.maximum(m_prev, jnp.max(s, axis=-1, keepdims=True))
    alpha = jnp.exp(m_prev - m_new)
    # bf16 exponentials on v6e/v7x (bf16 EUP); f32 on <=v5.  p feeds the bf16
    # PV matmul anyway; the l accumulation stays in f32.
    p = jnp.exp((s - m_new).astype(exp_dtype))
    l_sc[...] = alpha * l_sc[...] + jnp.sum(p.astype(jnp.float32),
                                            axis=-1, keepdims=True)
    acc_sc[...] = alpha * acc_sc[...] + jnp.dot(
        p.astype(v_ref.dtype), v_ref[...], preferred_element_type=jnp.float32)
    m_sc[...] = m_new

    @pl.when(kv == pl.num_programs(3) - 1)
    def _():
        o_ref[...] = (acc_sc[...] * pl.reciprocal(l_sc[...], approx=True)
                      ).astype(o_ref.dtype)


def flash_attention(qkv, mask, *, num_heads, head_dim, seq_len):
    """qkv:(B*S, 3H) with [Q|K|V] head-major columns (Q pre-scaled);
    mask:(B,1,S) additive  ->  ctx:(B*S, H) in [head, dh] feature order."""
    M, threeH = qkv.shape
    H = threeH // 3
    NH, Dh, S = num_heads, head_dim, seq_len
    B = M // S
    assert NH * Dh == H and B * S == M
    assert (S % 8 == 0) or (B == 1), "sequence length must be 8-aligned"

    tq = _pick_tile(S, _TQ, 8)         # full sequence for S <= 512
    tkv = _pick_tile(S, _TKV, 128)
    nq, nkv = S // tq, S // tkv

    q_map = lambda b, h, qi, ki: (b * nq + qi, h)
    k_map = lambda b, h, qi, ki: (b * nkv + ki, NH + h)
    v_map = lambda b, h, qi, ki: (b * nkv + ki, 2 * NH + h)
    m_map = lambda b, h, qi, ki: (b, 0, ki)
    o_map = lambda b, h, qi, ki: (b * nq + qi, h)

    return pl.pallas_call(
        functools.partial(_flash_attn_kernel, exp_dtype=_EXP_DTYPE),
        out_shape=jax.ShapeDtypeStruct((M, H), qkv.dtype),
        grid_spec=pltpu.PrefetchScalarGridSpec(
            num_scalar_prefetch=0,
            grid=(B, NH, nq, nkv),             # kv reduction axis last/innermost
            in_specs=[
                pl.BlockSpec((tq, Dh), q_map),
                pl.BlockSpec((tkv, Dh), k_map),
                pl.BlockSpec((tkv, Dh), v_map),
                pl.BlockSpec((1, 1, tkv), m_map),
            ],
            out_specs=pl.BlockSpec((tq, Dh), o_map),
            scratch_shapes=[pltpu.VMEM((tq, 1), jnp.float32),
                            pltpu.VMEM((tq, 1), jnp.float32),
                            pltpu.VMEM((tq, Dh), jnp.float32)]),
        compiler_params=pltpu.CompilerParams(
            dimension_semantics=("parallel", "parallel", "parallel", "arbitrary"),
            vmem_limit_bytes=_VMEM_LIMIT),
    )(qkv, qkv, qkv, mask)


# ----------------------------------------------------------------------------
# Fused pooler + classification head (single grid-less kernel):
#   logits = tanh(cls @ Wp + bp) @ Wout + bout
# ----------------------------------------------------------------------------
def _pool_head_kernel(cls_ref, pw_ref, pb_ref, ow_ref, ob_ref, o_ref):
    pooled = jnp.tanh(
        jnp.dot(cls_ref[...], pw_ref[...], preferred_element_type=jnp.float32)
        + pb_ref[...].astype(jnp.float32))
    logits = (jnp.dot(pooled.astype(ow_ref.dtype), ow_ref[...],
                      preferred_element_type=jnp.float32)
              + ob_ref[...].astype(jnp.float32))
    o_ref[...] = logits.astype(o_ref.dtype)


def pool_and_classify(cls, pool_w, pool_b, out_w, out_b):
    B, H = cls.shape
    O = out_w.shape[1]
    return pl.pallas_call(
        _pool_head_kernel,
        out_shape=jax.ShapeDtypeStruct((B, O), jnp.float32),
        compiler_params=pltpu.CompilerParams(vmem_limit_bytes=_VMEM_LIMIT),
    )(cls, pool_w, pool_b.reshape(1, H), out_w, out_b.reshape(1, O))


# ----------------------------------------------------------------------------
# Parameter init (deterministic, synthetic) + forward
# ----------------------------------------------------------------------------
def init_params(key, cfg):
    E, H, I = cfg["emb"], cfg["hidden"], cfg["intermediate"]
    V, P, T, O = cfg["vocab"], cfg["max_pos"], cfg["type_vocab"], cfg["out_dim"]

    def nrm(k, shape, dtype=jnp.bfloat16):
        return (0.02 * jax.random.normal(k, shape)).astype(dtype)

    ks = jax.random.split(key, 16)
    return {
        "word_emb": nrm(ks[0], (V, E), jnp.float32),
        "pos_emb": nrm(ks[1], (P, E), jnp.float32),
        "type_emb": nrm(ks[2], (T, E), jnp.float32),
        "emb_ln_g": jnp.ones((E,), jnp.float32),
        "emb_ln_b": jnp.zeros((E,), jnp.float32),
        "emb_proj_w": nrm(ks[3], (E, H)),
        "emb_proj_b": jnp.zeros((H,), jnp.float32),
        "layer": {  # single shared ALBERT layer
            "qkv_w": nrm(ks[4], (H, 3 * H)),            # fused [Q|K|V] weight
            "qkv_b": jnp.zeros((3 * H,), jnp.float32),
            "o_w": nrm(ks[5], (H, H)), "o_b": jnp.zeros((H,), jnp.float32),
            "attn_ln_g": jnp.ones((H,), jnp.float32),
            "attn_ln_b": jnp.zeros((H,), jnp.float32),
            "ffn_w": nrm(ks[6], (H, I)), "ffn_b": jnp.zeros((I,), jnp.float32),
            "ffn_out_w": nrm(ks[7], (I, H)),
            "ffn_out_b": jnp.zeros((H,), jnp.float32),
            "ffn_ln_g": jnp.ones((H,), jnp.float32),
            "ffn_ln_b": jnp.zeros((H,), jnp.float32),
        },
        "pool_w": nrm(ks[8], (H, H)), "pool_b": jnp.zeros((H,), jnp.float32),
        "out_w": nrm(ks[9], (H, O)), "out_b": jnp.zeros((O,), jnp.float32),
    }


def infer_bert_forward(params, input_ids, attention_mask, token_type_ids, cfg):
    B, S = input_ids.shape
    E, H, NH = cfg["emb"], cfg["hidden"], cfg["heads"]
    Dh = H // NH

    # --- embeddings: gathers are XLA glue; LN + projection are Pallas ---
    pos_ids = jnp.arange(S)[None, :]
    emb = (params["word_emb"][input_ids]
           + params["pos_emb"][pos_ids]
           + params["type_emb"][token_type_ids])               # (B, S, E) f32
    emb2 = layernorm(emb.reshape(B * S, E),
                     params["emb_ln_g"], params["emb_ln_b"],
                     out_dtype=jnp.bfloat16)
    x = linear(emb2, params["emb_proj_w"], params["emb_proj_b"])  # (B*S,H) bf16

    # additive attention mask, shared across heads: (B, 1, S)
    ext_mask = ((1.0 - attention_mask.astype(jnp.float32)) * -1e9
                ).reshape(B, 1, S)

    lyr = params["layer"]
    # Fold 1/sqrt(Dh) into the Q third of the shared QKV weight/bias once,
    # outside the layer loop, so the flash kernel does no per-step scaling.
    scale = 1.0 / (Dh ** 0.5)
    col_scale = jnp.concatenate([jnp.full((H,), scale, jnp.float32),
                                 jnp.ones((2 * H,), jnp.float32)])
    qkv_w = (lyr["qkv_w"].astype(jnp.float32) * col_scale[None, :]
             ).astype(lyr["qkv_w"].dtype)
    qkv_b = (lyr["qkv_b"].astype(jnp.float32) * col_scale
             ).astype(lyr["qkv_b"].dtype)

    def layer_body(_, x):
        # fused QKV projection -> attention reads/writes flat (B*S, .) buffers
        qkv = linear(x, qkv_w, qkv_b)                          # (B*S, 3H) bf16
        ctx = flash_attention(qkv, ext_mask,
                              num_heads=NH, head_dim=Dh, seq_len=S)  # (B*S, H)
        # fused o-proj + residual + LayerNorm
        x = linear_residual_ln(ctx, lyr["o_w"], lyr["o_b"], x,
                               lyr["attn_ln_g"], lyr["attn_ln_b"])
        # FFN: gelu matmul, then fused out-proj + residual + LayerNorm
        h = linear(x, lyr["ffn_w"], lyr["ffn_b"], activation="gelu_new")
        x = linear_residual_ln(h, lyr["ffn_out_w"], lyr["ffn_out_b"], x,
                               lyr["ffn_ln_g"], lyr["ffn_ln_b"])
        return x

    # ALBERT reuses one layer's weights; fori_loop keeps a single trace of each
    # pallas_call instead of re-emitting it per repetition.
    x = jax.lax.fori_loop(0, cfg["layers"], layer_body, x)

    # --- pooler (CLS token) + classification head, fused (dropout = identity) ---
    cls = x.reshape(B, S, H)[:, 0, :]                           # (B, H) bf16
    logits = pool_and_classify(cls, params["pool_w"], params["pool_b"],
                               params["out_w"], params["out_b"])  # (B, 1) f32
    probs = jax.nn.sigmoid(logits)     # tiny (B,1) elementwise -> plain JAX glue
    return {"logits": logits, "probs": probs}


# ----------------------------------------------------------------------------
if __name__ == "__main__":
    # head_dim = hidden/heads = 128 keeps the attention head-column blocks and
    # the context output lane-dense (128 lanes).
    CFG = dict(vocab=128, max_pos=64, type_vocab=2,
               emb=128, hidden=256, intermediate=512,
               heads=2, layers=2, out_dim=1)

    B, S = 2, 8
    key = jax.random.PRNGKey(0)
    k_param, k_ids, k_type = jax.random.split(key, 3)

    params = init_params(k_param, CFG)
    input_ids = jax.random.randint(k_ids, (B, S), 0, CFG["vocab"], jnp.int32)
    token_type_ids = jax.random.randint(k_type, (B, S), 0, 2, jnp.int32)
    attention_mask = jnp.ones((B, S), jnp.int32).at[1, 6:].set(0)  # pad tail

    fwd = jax.jit(lambda p, ids, am, tt: infer_bert_forward(p, ids, am, tt, CFG))
    out = fwd(params, input_ids, attention_mask, token_type_ids)
    jax.block_until_ready(out)

    assert out["logits"].shape == (B, 1) and out["probs"].shape == (B, 1)
    assert bool(jnp.all(jnp.isfinite(out["logits"])))
    assert bool(jnp.all((out["probs"] >= 0) & (out["probs"] <= 1)))
    print("KERNEL_OK")
</pallas_src>

<mosaic_0001>
module attributes {stable_mosaic.version = 11 : i64} {
  func.func @_ln_kernel(%arg0: i32, %arg1: memref<16x128xf32, #tpu.memory_space<vmem>>, %arg2: memref<1x128xf32, #tpu.memory_space<vmem>>, %arg3: memref<1x128xf32, #tpu.memory_space<vmem>>, %arg4: memref<16x128xbf16, #tpu.memory_space<vmem>>) attributes {dimension_semantics = [#tpu.dimension_semantics<parallel>], iteration_bounds = array<i64: 1>, scalar_prefetch = 0 : i64, scratch_operands = 0 : i64, tpu.core_type = #tpu.core_type<tc>, window_params = [{transform_indices = @transform_0, window_bounds = array<i64: 16, 128>}, {pipeline_mode = #tpu.pipeline_mode<synchronous>, transform_indices = @transform_1, window_bounds = array<i64: 1, 128>}, {pipeline_mode = #tpu.pipeline_mode<synchronous>, transform_indices = @transform_2, window_bounds = array<i64: 1, 128>}, {transform_indices = @transform_3, window_bounds = array<i64: 16, 128>}]} {
    %c0 = arith.constant 0 : index
    %c0_0 = arith.constant 0 : index
    %0 = vector.load %arg1[%c0, %c0_0] : memref<16x128xf32, #tpu.memory_space<vmem>>, vector<16x128xf32>
    %cst = arith.constant dense<0.000000e+00> : vector<16xf32>
    %1 = vector.multi_reduction <add>, %0, %cst [1] : vector<16x128xf32> to vector<16xf32>
    %2 = vector.shape_cast %1 : vector<16xf32> to vector<16x1xf32>
    %cst_1 = arith.constant 1.280000e+02 : f32
    %3 = vector.broadcast %cst_1 : f32 to vector<16x1xf32>
    %4 = arith.divf %2, %3 : vector<16x1xf32>
    %5 = vector.broadcast %4 : vector<16x1xf32> to vector<16x128xf32>
    %6 = arith.subf %0, %5 : vector<16x128xf32>
    %7 = arith.mulf %6, %6 : vector<16x128xf32>
    %cst_2 = arith.constant dense<0.000000e+00> : vector<16xf32>
    %8 = vector.multi_reduction <add>, %7, %cst_2 [1] : vector<16x128xf32> to vector<16xf32>
    %9 = vector.shape_cast %8 : vector<16xf32> to vector<16x1xf32>
    %cst_3 = arith.constant 1.280000e+02 : f32
    %10 = vector.broadcast %cst_3 : f32 to vector<16x1xf32>
    %11 = arith.divf %9, %10 : vector<16x1xf32>
    %12 = vector.broadcast %4 : vector<16x1xf32> to vector<16x128xf32>
    %13 = arith.subf %0, %12 : vector<16x128xf32>
    %cst_4 = arith.constant 9.99999996E-13 : f32
    %14 = vector.broadcast %cst_4 : f32 to vector<16x1xf32>
    %15 = arith.addf %11, %14 : vector<16x1xf32>
    %16 = math.rsqrt %15 : vector<16x1xf32>
    %17 = vector.broadcast %16 : vector<16x1xf32> to vector<16x128xf32>
    %18 = arith.mulf %13, %17 : vector<16x128xf32>
    %c0_5 = arith.constant 0 : index
    %c0_6 = arith.constant 0 : index
    %19 = vector.load %arg2[%c0_5, %c0_6] : memref<1x128xf32, #tpu.memory_space<vmem>>, vector<1x128xf32>
    %20 = vector.broadcast %19 : vector<1x128xf32> to vector<16x128xf32>
    %21 = arith.mulf %18, %20 : vector<16x128xf32>
    %c0_7 = arith.constant 0 : index
    %c0_8 = arith.constant 0 : index
    %22 = vector.load %arg3[%c0_7, %c0_8] : memref<1x128xf32, #tpu.memory_space<vmem>>, vector<1x128xf32>
    %23 = vector.broadcast %22 : vector<1x128xf32> to vector<16x128xf32>
    %24 = arith.addf %21, %23 : vector<16x128xf32>
    %25 = arith.truncf %24 : vector<16x128xf32> to vector<16x128xbf16>
    %c0_9 = arith.constant 0 : index
    %c0_10 = arith.constant 0 : index
    %26 = vector.load %arg4[%c0_9, %c0_10] : memref<16x128xbf16, #tpu.memory_space<vmem>>, vector<16x128xbf16>
    tpu.vector_store %arg4[%c0_9, %c0_10], %25 {strides = array<i32>} : memref<16x128xbf16, #tpu.memory_space<vmem>>, vector<16x128xbf16>,
    return
  }
  func.func @transform_0(%arg0: i32) -> (i32, i32) {
    %c0_i32 = arith.constant 0 : i32
    %c0_i32_0 = arith.constant 0 : i32
    return %arg0, %c0_i32 : i32, i32
  }
  func.func @transform_1(%arg0: i32) -> (i32, i32) {
    %c0_i32 = arith.constant 0 : i32
    %c0_i32_0 = arith.constant 0 : i32
    %c0_i32_1 = arith.constant 0 : i32
    return %c0_i32, %c0_i32_0 : i32, i32
  }
  func.func @transform_2(%arg0: i32) -> (i32, i32) {
    %c0_i32 = arith.constant 0 : i32
    %c0_i32_0 = arith.constant 0 : i32
    %c0_i32_1 = arith.constant 0 : i32
    return %c0_i32, %c0_i32_0 : i32, i32
  }
  func.func @transform_3(%arg0: i32) -> (i32, i32) {
    %c0_i32 = arith.constant 0 : i32
    %c0_i32_0 = arith.constant 0 : i32
    return %arg0, %c0_i32 : i32, i32
  }
}

module attributes {stable_mosaic.version = 11 : i64} {
  func.func @_linear_kernel(%arg0: i32, %arg1: i32, %arg2: i32, %arg3: memref<16x128xbf16, #tpu.memory_space<vmem>>, %arg4: memref<128x256xbf16, #tpu.memory_space<vmem>>, %arg5: memref<1x256xf32, #tpu.memory_space<vmem>>, %arg6: memref<16x256xbf16, #tpu.memory_space<vmem>>, %arg7: memref<16x256xf32, #tpu.memory_space<vmem>>) attributes {dimension_semantics = [#tpu.dimension_semantics<parallel>, #tpu.dimension_semantics<parallel>, #tpu.dimension_semantics<arbitrary>], iteration_bounds = array<i64: 1, 1, 1>, scalar_prefetch = 0 : i64, scratch_operands = 1 : i64, tpu.core_type = #tpu.core_type<tc>, window_params = [{transform_indices = @transform_0, window_bounds = array<i64: 16, 128>}, {transform_indices = @transform_1, window_bounds = array<i64: 128, 256>}, {transform_indices = @transform_2, window_bounds = array<i64: 1, 256>}, {transform_indices = @transform_3, window_bounds = array<i64: 16, 256>}]} {
    %c0_i32 = arith.constant 0 : i32
    %0 = arith.cmpi eq, %arg2, %c0_i32 : i32
    %1 = arith.extui %0 : i1 to i32
    %c0_i32_0 = arith.constant 0 : i32
    %2 = arith.cmpi ne, %1, %c0_i32_0 : i32
    scf.if %2 {
      %cst_10 = arith.constant 0.000000e+00 : f32
      %12 = vector.broadcast %cst_10 : f32 to vector<16x256xf32>
      %c0_11 = arith.constant 0 : index
      %c0_12 = arith.constant 0 : index
      %13 = vector.load %arg7[%c0_11, %c0_12] : memref<16x256xf32, #tpu.memory_space<vmem>>, vector<16x256xf32>
      tpu.vector_store %arg7[%c0_11, %c0_12], %12 {strides = array<i32>} : memref<16x256xf32, #tpu.memory_space<vmem>>, vector<16x256xf32>,
    } else {
    }
    %c0 = arith.constant 0 : index
    %c0_1 = arith.constant 0 : index
    %3 = vector.load %arg7[%c0, %c0_1] : memref<16x256xf32, #tpu.memory_space<vmem>>, vector<16x256xf32>
    %c0_2 = arith.constant 0 : index
    %c0_3 = arith.constant 0 : index
    %4 = vector.load %arg3[%c0_2, %c0_3] : memref<16x128xbf16, #tpu.memory_space<vmem>>, vector<16x128xbf16>
    %c0_4 = arith.constant 0 : index
    %c0_5 = arith.constant 0 : index
    %5 = vector.load %arg4[%c0_4, %c0_5] : memref<128x256xbf16, #tpu.memory_space<vmem>>, vector<128x256xbf16>
    %cst = arith.constant dense<0.000000e+00> : vector<16x256xf32>
    %6 = tpu.matmul %4, %5, %cst {dimension_numbers = #tpu.dot_dimension_numbers<[1], [0], [0], [1], [0, 0, 1, 1], [], []>} : vector<16x128xbf16>, vector<128x256xbf16>, vector<16x256xf32> -> vector<16x256xf32>
    %7 = arith.addf %3, %6 : vector<16x256xf32>
    %c0_6 = arith.constant 0 : index
    %c0_7 = arith.constant 0 : index
    %8 = vector.load %arg7[%c0_6, %c0_7] : memref<16x256xf32, #tpu.memory_space<vmem>>, vector<16x256xf32>
    tpu.vector_store %arg7[%c0_6, %c0_7], %7 {strides = array<i32>} : memref<16x256xf32, #tpu.memory_space<vmem>>, vector<16x256xf32>,
    %c0_i32_8 = arith.constant 0 : i32
    %9 = arith.cmpi eq, %arg2, %c0_i32_8 : i32
    %10 = arith.extui %9 : i1 to i32
    %c0_i32_9 = arith.constant 0 : i32
    %11 = arith.cmpi ne, %10, %c0_i32_9 : i32
    scf.if %11 {
      %c0_10 = arith.constant 0 : index
      %c0_11 = arith.constant 0 : index
      %12 = vector.load %arg7[%c0_10, %c0_11] : memref<16x256xf32, #tpu.memory_space<vmem>>, vector<16x256xf32>
      %c0_12 = arith.constant 0 : index
      %c0_13 = arith.constant 0 : index
      %13 = vector.load %arg5[%c0_12, %c0_13] : memref<1x256xf32, #tpu.memory_space<vmem>>, vector<1x256xf32>
      %14 = vector.broadcast %13 : vector<1x256xf32> to vector<16x256xf32>
      %15 = arith.addf %12, %14 : vector<16x256xf32>
      %16 = arith.truncf %15 : vector<16x256xf32> to vector<16x256xbf16>
      %c0_14 = arith.constant 0 : index
      %c0_15 = arith.constant 0 : index
      %17 = vector.load %arg6[%c0_14, %c0_15] : memref<16x256xbf16, #tpu.memory_space<vmem>>, vector<16x256xbf16>
      tpu.vector_store %arg6[%c0_14, %c0_15], %16 {strides = array<i32>} : memref<16x256xbf16, #tpu.memory_space<vmem>>, vector<16x256xbf16>,
    } else {
    }
    return
  }
  func.func @transform_0(%arg0: i32, %arg1: i32, %arg2: i32) -> (i32, i32) {
    %c0_i32 = arith.constant 0 : i32
    return %arg0, %arg2 : i32, i32
  }
  func.func @transform_1(%arg0: i32, %arg1: i32, %arg2: i32) -> (i32, i32) {
    %c0_i32 = arith.constant 0 : i32
    return %arg2, %arg1 : i32, i32
  }
  func.func @transform_2(%arg0: i32, %arg1: i32, %arg2: i32) -> (i32, i32) {
    %c0_i32 = arith.constant 0 : i32
    %c0_i32_0 = arith.constant 0 : i32
    return %c0_i32, %arg1 : i32, i32
  }
  func.func @transform_3(%arg0: i32, %arg1: i32, %arg2: i32) -> (i32, i32) {
    %c0_i32 = arith.constant 0 : i32
    return %arg0, %arg1 : i32, i32
  }
}

module attributes {stable_mosaic.version = 11 : i64} {
  func.func @_linear_kernel(%arg0: i32, %arg1: i32, %arg2: i32, %arg3: memref<16x256xbf16, #tpu.memory_space<vmem>>, %arg4: memref<256x768xbf16, #tpu.memory_space<vmem>>, %arg5: memref<1x768xf32, #tpu.memory_space<vmem>>, %arg6: memref<16x768xbf16, #tpu.memory_space<vmem>>, %arg7: memref<16x768xf32, #tpu.memory_space<vmem>>) attributes {dimension_semantics = [#tpu.dimension_semantics<parallel>, #tpu.dimension_semantics<parallel>, #tpu.dimension_semantics<arbitrary>], iteration_bounds = array<i64: 1, 1, 1>, scalar_prefetch = 0 : i64, scratch_operands = 1 : i64, tpu.core_type = #tpu.core_type<tc>, window_params = [{transform_indices = @transform_0, window_bounds = array<i64: 16, 256>}, {transform_indices = @transform_1, window_bounds = array<i64: 256, 768>}, {transform_indices = @transform_2, window_bounds = array<i64: 1, 768>}, {transform_indices = @transform_3, window_bounds = array<i64: 16, 768>}]} {
    %c0_i32 = arith.constant 0 : i32
    %0 = arith.cmpi eq, %arg2, %c0_i32 : i32
    %1 = arith.extui %0 : i1 to i32
    %c0_i32_0 = arith.constant 0 : i32
    %2 = arith.cmpi ne, %1, %c0_i32_0 : i32
    scf.if %2 {
      %cst_10 = arith.constant 0.000000e+00 : f32
      %12 = vector.broadcast %cst_10 : f32 to vector<16x768xf32>
      %c0_11 = arith.constant 0 : index
      %c0_12 = arith.constant 0 : index
      %13 = vector.load %arg7[%c0_11, %c0_12] : memref<16x768xf32, #tpu.memory_space<vmem>>, vector<16x768xf32>
      tpu.vector_store %arg7[%c0_11, %c0_12], %12 {strides = array<i32>} : memref<16x768xf32, #tpu.memory_space<vmem>>, vector<16x768xf32>,
    } else {
    }
    %c0 = arith.constant 0 : index
    %c0_1 = arith.constant 0 : index
    %3 = vector.load %arg7[%c0, %c0_1] : memref<16x768xf32, #tpu.memory_space<vmem>>, vector<16x768xf32>
    %c0_2 = arith.constant 0 : index
    %c0_3 = arith.constant 0 : index
    %4 = vector.load %arg3[%c0_2, %c0_3] : memref<16x256xbf16, #tpu.memory_space<vmem>>, vector<16x256xbf16>
    %c0_4 = arith.constant 0 : index
    %c0_5 = arith.constant 0 : index
    %5 = vector.load %arg4[%c0_4, %c0_5] : memref<256x768xbf16, #tpu.memory_space<vmem>>, vector<256x768xbf16>
    %cst = arith.constant dense<0.000000e+00> : vector<16x768xf32>
    %6 = tpu.matmul %4, %5, %cst {dimension_numbers = #tpu.dot_dimension_numbers<[1], [0], [0], [1], [0, 0, 1, 1], [], []>} : vector<16x256xbf16>, vector<256x768xbf16>, vector<16x768xf32> -> vector<16x768xf32>
    %7 = arith.addf %3, %6 : vector<16x768xf32>
    %c0_6 = arith.constant 0 : index
    %c0_7 = arith.constant 0 : index
    %8 = vector.load %arg7[%c0_6, %c0_7] : memref<16x768xf32, #tpu.memory_space<vmem>>, vector<16x768xf32>
    tpu.vector_store %arg7[%c0_6, %c0_7], %7 {strides = array<i32>} : memref<16x768xf32, #tpu.memory_space<vmem>>, vector<16x768xf32>,
    %c0_i32_8 = arith.constant 0 : i32
    %9 = arith.cmpi eq, %arg2, %c0_i32_8 : i32
    %10 = arith.extui %9 : i1 to i32
    %c0_i32_9 = arith.constant 0 : i32
    %11 = arith.cmpi ne, %10, %c0_i32_9 : i32
    scf.if %11 {
      %c0_10 = arith.constant 0 : index
      %c0_11 = arith.constant 0 : index
      %12 = vector.load %arg7[%c0_10, %c0_11] : memref<16x768xf32, #tpu.memory_space<vmem>>, vector<16x768xf32>
      %c0_12 = arith.constant 0 : index
      %c0_13 = arith.constant 0 : index
      %13 = vector.load %arg5[%c0_12, %c0_13] : memref<1x768xf32, #tpu.memory_space<vmem>>, vector<1x768xf32>
      %14 = vector.broadcast %13 : vector<1x768xf32> to vector<16x768xf32>
      %15 = arith.addf %12, %14 : vector<16x768xf32>
      %16 = arith.truncf %15 : vector<16x768xf32> to vector<16x768xbf16>
      %c0_14 = arith.constant 0 : index
      %c0_15 = arith.constant 0 : index
      %17 = vector.load %arg6[%c0_14, %c0_15] : memref<16x768xbf16, #tpu.memory_space<vmem>>, vector<16x768xbf16>
      tpu.vector_store %arg6[%c0_14, %c0_15], %16 {strides = array<i32>} : memref<16x768xbf16, #tpu.memory_space<vmem>>, vector<16x768xbf16>,
    } else {
    }
    return
  }
  func.func @transform_0(%arg0: i32, %arg1: i32, %arg2: i32) -> (i32, i32) {
    %c0_i32 = arith.constant 0 : i32
    return %arg0, %arg2 : i32, i32
  }
  func.func @transform_1(%arg0: i32, %arg1: i32, %arg2: i32) -> (i32, i32) {
    %c0_i32 = arith.constant 0 : i32
    return %arg2, %arg1 : i32, i32
  }
  func.func @transform_2(%arg0: i32, %arg1: i32, %arg2: i32) -> (i32, i32) {
    %c0_i32 = arith.constant 0 : i32
    %c0_i32_0 = arith.constant 0 : i32
    return %c0_i32, %arg1 : i32, i32
  }
  func.func @transform_3(%arg0: i32, %arg1: i32, %arg2: i32) -> (i32, i32) {
    %c0_i32 = arith.constant 0 : i32
    return %arg0, %arg1 : i32, i32
  }
}

module attributes {stable_mosaic.version = 11 : i64} {
  func.func @_flash_attn_kernel(%arg0: i32, %arg1: i32, %arg2: i32, %arg3: i32, %arg4: memref<8x128xbf16, #tpu.memory_space<vmem>>, %arg5: memref<8x128xbf16, #tpu.memory_space<vmem>>, %arg6: memref<8x128xbf16, #tpu.memory_space<vmem>>, %arg7: memref<1x1x8xf32, #tpu.memory_space<vmem>>, %arg8: memref<8x128xbf16, #tpu.memory_space<vmem>>, %arg9: memref<8x1xf32, #tpu.memory_space<vmem>>, %arg10: memref<8x1xf32, #tpu.memory_space<vmem>>, %arg11: memref<8x128xf32, #tpu.memory_space<vmem>>) attributes {dimension_semantics = [#tpu.dimension_semantics<parallel>, #tpu.dimension_semantics<parallel>, #tpu.dimension_semantics<parallel>, #tpu.dimension_semantics<arbitrary>], iteration_bounds = array<i64: 2, 2, 1, 1>, scalar_prefetch = 0 : i64, scratch_operands = 3 : i64, tpu.core_type = #tpu.core_type<tc>, window_params = [{transform_indices = @transform_0, window_bounds = array<i64: 8, 128>}, {transform_indices = @transform_1, window_bounds = array<i64: 8, 128>}, {transform_indices = @transform_2, window_bounds = array<i64: 8, 128>}, {transform_indices = @transform_3, window_bounds = array<i64: 1, 1, 8>}, {transform_indices = @transform_4, window_bounds = array<i64: 8, 128>}]} {
    %c0_i32 = arith.constant 0 : i32
    %0 = arith.cmpi eq, %arg3, %c0_i32 : i32
    %1 = arith.extui %0 : i1 to i32
    %c0_i32_0 = arith.constant 0 : i32
    %2 = arith.cmpi ne, %1, %c0_i32_0 : i32
    scf.if %2 {
      %cst_26 = arith.constant 0xFF800000 : f32
      %38 = vector.broadcast %cst_26 : f32 to vector<8x1xf32>
      %c0_27 = arith.constant 0 : index
      %c0_28 = arith.constant 0 : index
      %39 = vector.load %arg9[%c0_27, %c0_28] : memref<8x1xf32, #tpu.memory_space<vmem>>, vector<8x1xf32>
      tpu.vector_store %arg9[%c0_27, %c0_28], %38 {strides = array<i32>} : memref<8x1xf32, #tpu.memory_space<vmem>>, vector<8x1xf32>,
      %cst_29 = arith.constant 0.000000e+00 : f32
      %40 = vector.broadcast %cst_29 : f32 to vector<8x1xf32>
      %c0_30 = arith.constant 0 : index
      %c0_31 = arith.constant 0 : index
      %41 = vector.load %arg10[%c0_30, %c0_31] : memref<8x1xf32, #tpu.memory_space<vmem>>, vector<8x1xf32>
      tpu.vector_store %arg10[%c0_30, %c0_31], %40 {strides = array<i32>} : memref<8x1xf32, #tpu.memory_space<vmem>>, vector<8x1xf32>,
      %cst_32 = arith.constant 0.000000e+00 : f32
      %42 = vector.broadcast %cst_32 : f32 to vector<8x128xf32>
      %c0_33 = arith.constant 0 : index
      %c0_34 = arith.constant 0 : index
      %43 = vector.load %arg11[%c0_33, %c0_34] : memref<8x128xf32, #tpu.memory_space<vmem>>, vector<8x128xf32>
      tpu.vector_store %arg11[%c0_33, %c0_34], %42 {strides = array<i32>} : memref<8x128xf32, #tpu.memory_space<vmem>>, vector<8x128xf32>,
    } else {
    }
    %c0 = arith.constant 0 : index
    %c0_1 = arith.constant 0 : index
    %3 = vector.load %arg4[%c0, %c0_1] : memref<8x128xbf16, #tpu.memory_space<vmem>>, vector<8x128xbf16>
    %c0_2 = arith.constant 0 : index
    %c0_3 = arith.constant 0 : index
    %4 = vector.load %arg5[%c0_2, %c0_3] : memref<8x128xbf16, #tpu.memory_space<vmem>>, vector<8x128xbf16>
    %cst = arith.constant dense<0.000000e+00> : vector<8x8xf32>
    %5 = tpu.matmul %3, %4, %cst {dimension_numbers = #tpu.dot_dimension_numbers<[1], [1], [0], [0], [0, 0, 1, 0], [], []>} : vector<8x128xbf16>, vector<8x128xbf16>, vector<8x8xf32> -> vector<8x8xf32>
    %c0_4 = arith.constant 0 : index
    %c0_5 = arith.constant 0 : index
    %c0_6 = arith.constant 0 : index
    %6 = vector.load %arg7[%c0_4, %c0_5, %c0_6] : memref<1x1x8xf32, #tpu.memory_space<vmem>>, vector<1x1x8xf32>
    %7 = vector.shape_cast %6 : vector<1x1x8xf32> to vector<1x8xf32>
    %8 = vector.broadcast %7 : vector<1x8xf32> to vector<8x8xf32>
    %9 = arith.addf %5, %8 : vector<8x8xf32>
    %c0_7 = arith.constant 0 : index
    %c0_8 = arith.constant 0 : index
    %10 = vector.load %arg9[%c0_7, %c0_8] : memref<8x1xf32, #tpu.memory_space<vmem>>, vector<8x1xf32>
    %cst_9 = arith.constant dense<0xFF800000> : vector<8xf32>
    %11 = vector.multi_reduction <maximumf>, %9, %cst_9 [1] : vector<8x8xf32> to vector<8xf32>
    %12 = vector.shape_cast %11 : vector<8xf32> to vector<8x1xf32>
    %13 = arith.maximumf %10, %12 : vector<8x1xf32>
    %14 = arith.subf %10, %13 : vector<8x1xf32>
    %15 = math.exp %14 : vector<8x1xf32>
    %16 = vector.broadcast %13 : vector<8x1xf32> to vector<8x8xf32>
    %17 = arith.subf %9, %16 : vector<8x8xf32>
    %18 = arith.truncf %17 : vector<8x8xf32> to vector<8x8xbf16>
    %19 = math.exp %18 : vector<8x8xbf16>
    %c0_10 = arith.constant 0 : index
    %c0_11 = arith.constant 0 : index
    %20 = vector.load %arg10[%c0_10, %c0_11] : memref<8x1xf32, #tpu.memory_space<vmem>>, vector<8x1xf32>
    %21 = arith.mulf %15, %20 : vector<8x1xf32>
    %22 = arith.extf %19 : vector<8x8xbf16> to vector<8x8xf32>
    %cst_12 = arith.constant dense<0.000000e+00> : vector<8xf32>
    %23 = vector.multi_reduction <add>, %22, %cst_12 [1] : vector<8x8xf32> to vector<8xf32>
    %24 = vector.shape_cast %23 : vector<8xf32> to vector<8x1xf32>
    %25 = arith.addf %21, %24 : vector<8x1xf32>
    %c0_13 = arith.constant 0 : index
    %c0_14 = arith.constant 0 : index
    %26 = vector.load %arg10[%c0_13, %c0_14] : memref<8x1xf32, #tpu.memory_space<vmem>>, vector<8x1xf32>
    tpu.vector_store %arg10[%c0_13, %c0_14], %25 {strides = array<i32>} : memref<8x1xf32, #tpu.memory_space<vmem>>, vector<8x1xf32>,
    %c0_15 = arith.constant 0 : index
    %c0_16 = arith.constant 0 : index
    %27 = vector.load %arg11[%c0_15, %c0_16] : memref<8x128xf32, #tpu.memory_space<vmem>>, vector<8x128xf32>
    %28 = vector.broadcast %15 : vector<8x1xf32> to vector<8x128xf32>
    %29 = arith.mulf %28, %27 : vector<8x128xf32>
    %c0_17 = arith.constant 0 : index
    %c0_18 = arith.constant 0 : index
    %30 = vector.load %arg6[%c0_17, %c0_18] : memref<8x128xbf16, #tpu.memory_space<vmem>>, vector<8x128xbf16>
    %cst_19 = arith.constant dense<0.000000e+00> : vector<8x128xf32>
    %31 = tpu.matmul %19, %30, %cst_19 {dimension_numbers = #tpu.dot_dimension_numbers<[1], [0], [0], [1], [0, 0, 1, 1], [], []>} : vector<8x8xbf16>, vector<8x128xbf16>, vector<8x128xf32> -> vector<8x128xf32>
    %32 = arith.addf %29, %31 : vector<8x128xf32>
    %c0_20 = arith.constant 0 : index
    %c0_21 = arith.constant 0 : index
    %33 = vector.load %arg11[%c0_20, %c0_21] : memref<8x128xf32, #tpu.memory_space<vmem>>, vector<8x128xf32>
    tpu.vector_store %arg11[%c0_20, %c0_21], %32 {strides = array<i32>} : memref<8x128xf32, #tpu.memory_space<vmem>>, vector<8x128xf32>,
    %c0_22 = arith.constant 0 : index
    %c0_23 = arith.constant 0 : index
    %34 = vector.load %arg9[%c0_22, %c0_23] : memref<8x1xf32, #tpu.memory_space<vmem>>, vector<8x1xf32>
    tpu.vector_store %arg9[%c0_22, %c0_23], %13 {strides = array<i32>} : memref<8x1xf32, #tpu.memory_space<vmem>>, vector<8x1xf32>,
    %c0_i32_24 = arith.constant 0 : i32
    %35 = arith.cmpi eq, %arg3, %c0_i32_24 : i32
    %36 = arith.extui %35 : i1 to i32
    %c0_i32_25 = arith.constant 0 : i32
    %37 = arith.cmpi ne, %36, %c0_i32_25 : i32
    scf.if %37 {
      %c0_26 = arith.constant 0 : index
      %c0_27 = arith.constant 0 : index
      %38 = vector.load %arg11[%c0_26, %c0_27] : memref<8x128xf32, #tpu.memory_space<vmem>>, vector<8x128xf32>
      %c0_28 = arith.constant 0 : index
      %c0_29 = arith.constant 0 : index
      %39 = vector.load %arg10[%c0_28, %c0_29] : memref<8x1xf32, #tpu.memory_space<vmem>>, vector<8x1xf32>
      %40 = tpu.reciprocal %39 {approx = true} : vector<8x1xf32> -> vector<8x1xf32>
      %41 = vector.broadcast %40 : vector<8x1xf32> to vector<8x128xf32>
      %42 = arith.mulf %38, %41 : vector<8x128xf32>
      %43 = arith.truncf %42 : vector<8x128xf32> to vector<8x128xbf16>
      %c0_30 = arith.constant 0 : index
      %c0_31 = arith.constant 0 : index
      %44 = vector.load %arg8[%c0_30, %c0_31] : memref<8x128xbf16, #tpu.memory_space<vmem>>, vector<8x128xbf16>
      tpu.vector_store %arg8[%c0_30, %c0_31], %43 {strides = array<i32>} : memref<8x128xbf16, #tpu.memory_space<vmem>>, vector<8x128xbf16>,
    } else {
    }
    return
  }
  func.func @transform_0(%arg0: i32, %arg1: i32, %arg2: i32, %arg3: i32) -> (i32, i32) {
    %c1_i32 = arith.constant 1 : i32
    %0 = arith.muli %arg0, %c1_i32 : i32
    %1 = arith.addi %0, %arg2 : i32
    %c0_i32 = arith.constant 0 : i32
    return %1, %arg1 : i32, i32
  }
  func.func @transform_1(%arg0: i32, %arg1: i32, %arg2: i32, %arg3: i32) -> (i32, i32) {
    %c1_i32 = arith.constant 1 : i32
    %0 = arith.muli %arg0, %c1_i32 : i32
    %1 = arith.addi %0, %arg3 : i32
    %c2_i32 = arith.constant 2 : i32
    %2 = arith.addi %c2_i32, %arg1 : i32
    %c0_i32 = arith.constant 0 : i32
    return %1, %2 : i32, i32
  }
  func.func @transform_2(%arg0: i32, %arg1: i32, %arg2: i32, %arg3: i32) -> (i32, i32) {
    %c1_i32 = arith.constant 1 : i32
    %0 = arith.muli %arg0, %c1_i32 : i32
    %1 = arith.addi %0, %arg3 : i32
    %c4_i32 = arith.constant 4 : i32
    %2 = arith.addi %c4_i32, %arg1 : i32
    %c0_i32 = arith.constant 0 : i32
    return %1, %2 : i32, i32
  }
  func.func @transform_3(%arg0: i32, %arg1: i32, %arg2: i32, %arg3: i32) -> (i32, i32, i32) {
    %c0_i32 = arith.constant 0 : i32
    %c0_i32_0 = arith.constant 0 : i32
    return %arg0, %c0_i32, %arg3 : i32, i32, i32
  }
  func.func @transform_4(%arg0: i32, %arg1: i32, %arg2: i32, %arg3: i32) -> (i32, i32) {
    %c1_i32 = arith.constant 1 : i32
    %0 = arith.muli %arg0, %c1_i32 : i32
    %1 = arith.addi %0, %arg2 : i32
    %c0_i32 = arith.constant 0 : i32
    return %1, %arg1 : i32, i32
  }
}

module attributes {stable_mosaic.version = 11 : i64} {
  func.func @_linear_kernel(%arg0: i32, %arg1: i32, %arg2: i32, %arg3: memref<16x256xbf16, #tpu.memory_space<vmem>>, %arg4: memref<256x512xbf16, #tpu.memory_space<vmem>>, %arg5: memref<1x512xf32, #tpu.memory_space<vmem>>, %arg6: memref<16x512xbf16, #tpu.memory_space<vmem>>, %arg7: memref<16x512xf32, #tpu.memory_space<vmem>>) attributes {dimension_semantics = [#tpu.dimension_semantics<parallel>, #tpu.dimension_semantics<parallel>, #tpu.dimension_semantics<arbitrary>], iteration_bounds = array<i64: 1, 1, 1>, scalar_prefetch = 0 : i64, scratch_operands = 1 : i64, tpu.core_type = #tpu.core_type<tc>, window_params = [{transform_indices = @transform_0, window_bounds = array<i64: 16, 256>}, {transform_indices = @transform_1, window_bounds = array<i64: 256, 512>}, {transform_indices = @transform_2, window_bounds = array<i64: 1, 512>}, {transform_indices = @transform_3, window_bounds = array<i64: 16, 512>}]} {
    %c0_i32 = arith.constant 0 : i32
    %0 = arith.cmpi eq, %arg2, %c0_i32 : i32
    %1 = arith.extui %0 : i1 to i32
    %c0_i32_0 = arith.constant 0 : i32
    %2 = arith.cmpi ne, %1, %c0_i32_0 : i32
    scf.if %2 {
      %cst_10 = arith.constant 0.000000e+00 : f32
      %12 = vector.broadcast %cst_10 : f32 to vector<16x512xf32>
      %c0_11 = arith.constant 0 : index
      %c0_12 = arith.constant 0 : index
      %13 = vector.load %arg7[%c0_11, %c0_12] : memref<16x512xf32, #tpu.memory_space<vmem>>, vector<16x512xf32>
      tpu.vector_store %arg7[%c0_11, %c0_12], %12 {strides = array<i32>} : memref<16x512xf32, #tpu.memory_space<vmem>>, vector<16x512xf32>,
    } else {
    }
    %c0 = arith.constant 0 : index
    %c0_1 = arith.constant 0 : index
    %3 = vector.load %arg7[%c0, %c0_1] : memref<16x512xf32, #tpu.memory_space<vmem>>, vector<16x512xf32>
    %c0_2 = arith.constant 0 : index
    %c0_3 = arith.constant 0 : index
    %4 = vector.load %arg3[%c0_2, %c0_3] : memref<16x256xbf16, #tpu.memory_space<vmem>>, vector<16x256xbf16>
    %c0_4 = arith.constant 0 : index
    %c0_5 = arith.constant 0 : index
    %5 = vector.load %arg4[%c0_4, %c0_5] : memref<256x512xbf16, #tpu.memory_space<vmem>>, vector<256x512xbf16>
    %cst = arith.constant dense<0.000000e+00> : vector<16x512xf32>
    %6 = tpu.matmul %4, %5, %cst {dimension_numbers = #tpu.dot_dimension_numbers<[1], [0], [0], [1], [0, 0, 1, 1], [], []>} : vector<16x256xbf16>, vector<256x512xbf16>, vector<16x512xf32> -> vector<16x512xf32>
    %7 = arith.addf %3, %6 : vector<16x512xf32>
    %c0_6 = arith.constant 0 : index
    %c0_7 = arith.constant 0 : index
    %8 = vector.load %arg7[%c0_6, %c0_7] : memref<16x512xf32, #tpu.memory_space<vmem>>, vector<16x512xf32>
    tpu.vector_store %arg7[%c0_6, %c0_7], %7 {strides = array<i32>} : memref<16x512xf32, #tpu.memory_space<vmem>>, vector<16x512xf32>,
    %c0_i32_8 = arith.constant 0 : i32
    %9 = arith.cmpi eq, %arg2, %c0_i32_8 : i32
    %10 = arith.extui %9 : i1 to i32
    %c0_i32_9 = arith.constant 0 : i32
    %11 = arith.cmpi ne, %10, %c0_i32_9 : i32
    scf.if %11 {
      %c0_10 = arith.constant 0 : index
      %c0_11 = arith.constant 0 : index
      %12 = vector.load %arg7[%c0_10, %c0_11] : memref<16x512xf32, #tpu.memory_space<vmem>>, vector<16x512xf32>
      %c0_12 = arith.constant 0 : index
      %c0_13 = arith.constant 0 : index
      %13 = vector.load %arg5[%c0_12, %c0_13] : memref<1x512xf32, #tpu.memory_space<vmem>>, vector<1x512xf32>
      %14 = vector.broadcast %13 : vector<1x512xf32> to vector<16x512xf32>
      %15 = arith.addf %12, %14 : vector<16x512xf32>
      %cst_14 = arith.constant 5.000000e-01 : f32
      %16 = vector.broadcast %cst_14 : f32 to vector<16x512xf32>
      %17 = arith.mulf %16, %15 : vector<16x512xf32>
      %cst_15 = arith.constant 0.636619746 : f32
      %18 = math.sqrt %cst_15 : f32
      %cst_16 = arith.constant 4.471500e-02 : f32
      %19 = vector.broadcast %cst_16 : f32 to vector<16x512xf32>
      %20 = arith.mulf %19, %15 : vector<16x512xf32>
      %21 = arith.mulf %20, %15 : vector<16x512xf32>
      %22 = arith.mulf %21, %15 : vector<16x512xf32>
      %23 = arith.addf %15, %22 : vector<16x512xf32>
      %24 = vector.broadcast %18 : f32 to vector<16x512xf32>
      %25 = arith.mulf %24, %23 : vector<16x512xf32>
      %26 = math.tanh %25 : vector<16x512xf32>
      %cst_17 = arith.constant 1.000000e+00 : f32
      %27 = vector.broadcast %cst_17 : f32 to vector<16x512xf32>
      %28 = arith.addf %27, %26 : vector<16x512xf32>
      %29 = arith.mulf %17, %28 : vector<16x512xf32>
      %30 = arith.truncf %29 : vector<16x512xf32> to vector<16x512xbf16>
      %c0_18 = arith.constant 0 : index
      %c0_19 = arith.constant 0 : index
      %31 = vector.load %arg6[%c0_18, %c0_19] : memref<16x512xbf16, #tpu.memory_space<vmem>>, vector<16x512xbf16>
      tpu.vector_store %arg6[%c0_18, %c0_19], %30 {strides = array<i32>} : memref<16x512xbf16, #tpu.memory_space<vmem>>, vector<16x512xbf16>,
    } else {
    }
    return
  }
  func.func @transform_0(%arg0: i32, %arg1: i32, %arg2: i32) -> (i32, i32) {
    %c0_i32 = arith.constant 0 : i32
    return %arg0, %arg2 : i32, i32
  }
  func.func @transform_1(%arg0: i32, %arg1: i32, %arg2: i32) -> (i32, i32) {
    %c0_i32 = arith.constant 0 : i32
    return %arg2, %arg1 : i32, i32
  }
  func.func @transform_2(%arg0: i32, %arg1: i32, %arg2: i32) -> (i32, i32) {
    %c0_i32 = arith.constant 0 : i32
    %c0_i32_0 = arith.constant 0 : i32
    return %c0_i32, %arg1 : i32, i32
  }
  func.func @transform_3(%arg0: i32, %arg1: i32, %arg2: i32) -> (i32, i32) {
    %c0_i32 = arith.constant 0 : i32
    return %arg0, %arg1 : i32, i32
  }
}

module attributes {stable_mosaic.version = 11 : i64} {
  func.func @_linear_res_ln_kernel(%arg0: i32, %arg1: i32, %arg2: memref<16x256xbf16, #tpu.memory_space<vmem>>, %arg3: memref<256x256xbf16, #tpu.memory_space<vmem>>, %arg4: memref<1x256xf32, #tpu.memory_space<vmem>>, %arg5: memref<16x256xbf16, #tpu.memory_space<vmem>>, %arg6: memref<1x256xf32, #tpu.memory_space<vmem>>, %arg7: memref<1x256xf32, #tpu.memory_space<vmem>>, %arg8: memref<16x256xbf16, #tpu.memory_space<vmem>>, %arg9: memref<16x256xf32, #tpu.memory_space<vmem>>) attributes {dimension_semantics = [#tpu.dimension_semantics<parallel>, #tpu.dimension_semantics<arbitrary>], iteration_bounds = array<i64: 1, 1>, scalar_prefetch = 0 : i64, scratch_operands = 1 : i64, tpu.core_type = #tpu.core_type<tc>, window_params = [{transform_indices = @transform_0, window_bounds = array<i64: 16, 256>}, {transform_indices = @transform_1, window_bounds = array<i64: 256, 256>}, {pipeline_mode = #tpu.pipeline_mode<synchronous>, transform_indices = @transform_2, window_bounds = array<i64: 1, 256>}, {transform_indices = @transform_3, window_bounds = array<i64: 16, 256>}, {pipeline_mode = #tpu.pipeline_mode<synchronous>, transform_indices = @transform_4, window_bounds = array<i64: 1, 256>}, {pipeline_mode = #tpu.pipeline_mode<synchronous>, transform_indices = @transform_5, window_bounds = array<i64: 1, 256>}, {transform_indices = @transform_6, window_bounds = array<i64: 16, 256>}]} {
    %c0_i32 = arith.constant 0 : i32
    %0 = arith.cmpi eq, %arg1, %c0_i32 : i32
    %1 = arith.extui %0 : i1 to i32
    %c0_i32_0 = arith.constant 0 : i32
    %2 = arith.cmpi ne, %1, %c0_i32_0 : i32
    scf.if %2 {
      %cst_10 = arith.constant 0.000000e+00 : f32
      %12 = vector.broadcast %cst_10 : f32 to vector<16x256xf32>
      %c0_11 = arith.constant 0 : index
      %c0_12 = arith.constant 0 : index
      %13 = vector.load %arg9[%c0_11, %c0_12] : memref<16x256xf32, #tpu.memory_space<vmem>>, vector<16x256xf32>
      tpu.vector_store %arg9[%c0_11, %c0_12], %12 {strides = array<i32>} : memref<16x256xf32, #tpu.memory_space<vmem>>, vector<16x256xf32>,
    } else {
    }
    %c0 = arith.constant 0 : index
    %c0_1 = arith.constant 0 : index
    %3 = vector.load %arg9[%c0, %c0_1] : memref<16x256xf32, #tpu.memory_space<vmem>>, vector<16x256xf32>
    %c0_2 = arith.constant 0 : index
    %c0_3 = arith.constant 0 : index
    %4 = vector.load %arg2[%c0_2, %c0_3] : memref<16x256xbf16, #tpu.memory_space<vmem>>, vector<16x256xbf16>
    %c0_4 = arith.constant 0 : index
    %c0_5 = arith.constant 0 : index
    %5 = vector.load %arg3[%c0_4, %c0_5] : memref<256x256xbf16, #tpu.memory_space<vmem>>, vector<256x256xbf16>
    %cst = arith.constant dense<0.000000e+00> : vector<16x256xf32>
    %6 = tpu.matmul %4, %5, %cst {dimension_numbers = #tpu.dot_dimension_numbers<[1], [0], [0], [1], [0, 0, 1, 1], [], []>} : vector<16x256xbf16>, vector<256x256xbf16>, vector<16x256xf32> -> vector<16x256xf32>
    %7 = arith.addf %3, %6 : vector<16x256xf32>
    %c0_6 = arith.constant 0 : index
    %c0_7 = arith.constant 0 : index
    %8 = vector.load %arg9[%c0_6, %c0_7] : memref<16x256xf32, #tpu.memory_space<vmem>>, vector<16x256xf32>
    tpu.vector_store %arg9[%c0_6, %c0_7], %7 {strides = array<i32>} : memref<16x256xf32, #tpu.memory_space<vmem>>, vector<16x256xf32>,
    %c0_i32_8 = arith.constant 0 : i32
    %9 = arith.cmpi eq, %arg1, %c0_i32_8 : i32
    %10 = arith.extui %9 : i1 to i32
    %c0_i32_9 = arith.constant 0 : i32
    %11 = arith.cmpi ne, %10, %c0_i32_9 : i32
    scf.if %11 {
      %c0_10 = arith.constant 0 : index
      %c0_11 = arith.constant 0 : index
      %12 = vector.load %arg9[%c0_10, %c0_11] : memref<16x256xf32, #tpu.memory_space<vmem>>, vector<16x256xf32>
      %c0_12 = arith.constant 0 : index
      %c0_13 = arith.constant 0 : index
      %13 = vector.load %arg4[%c0_12, %c0_13] : memref<1x256xf32, #tpu.memory_space<vmem>>, vector<1x256xf32>
      %14 = vector.broadcast %13 : vector<1x256xf32> to vector<16x256xf32>
      %15 = arith.addf %12, %14 : vector<16x256xf32>
      %c0_14 = arith.constant 0 : index
      %c0_15 = arith.constant 0 : index
      %16 = vector.load %arg5[%c0_14, %c0_15] : memref<16x256xbf16, #tpu.memory_space<vmem>>, vector<16x256xbf16>
      %17 = arith.extf %16 : vector<16x256xbf16> to vector<16x256xf32>
      %18 = arith.addf %15, %17 : vector<16x256xf32>
      %cst_16 = arith.constant dense<0.000000e+00> : vector<16xf32>
      %19 = vector.multi_reduction <add>, %18, %cst_16 [1] : vector<16x256xf32> to vector<16xf32>
      %20 = vector.shape_cast %19 : vector<16xf32> to vector<16x1xf32>
      %cst_17 = arith.constant 2.560000e+02 : f32
      %21 = vector.broadcast %cst_17 : f32 to vector<16x1xf32>
      %22 = arith.divf %20, %21 : vector<16x1xf32>
      %23 = vector.broadcast %22 : vector<16x1xf32> to vector<16x256xf32>
      %24 = arith.subf %18, %23 : vector<16x256xf32>
      %25 = arith.mulf %24, %24 : vector<16x256xf32>
      %cst_18 = arith.constant dense<0.000000e+00> : vector<16xf32>
      %26 = vector.multi_reduction <add>, %25, %cst_18 [1] : vector<16x256xf32> to vector<16xf32>
      %27 = vector.shape_cast %26 : vector<16xf32> to vector<16x1xf32>
      %cst_19 = arith.constant 2.560000e+02 : f32
      %28 = vector.broadcast %cst_19 : f32 to vector<16x1xf32>
      %29 = arith.divf %27, %28 : vector<16x1xf32>
      %30 = vector.broadcast %22 : vector<16x1xf32> to vector<16x256xf32>
      %31 = arith.subf %18, %30 : vector<16x256xf32>
      %cst_20 = arith.constant 9.99999996E-13 : f32
      %32 = vector.broadcast %cst_20 : f32 to vector<16x1xf32>
      %33 = arith.addf %29, %32 : vector<16x1xf32>
      %34 = math.rsqrt %33 : vector<16x1xf32>
      %35 = vector.broadcast %34 : vector<16x1xf32> to vector<16x256xf32>
      %36 = arith.mulf %31, %35 : vector<16x256xf32>
      %c0_21 = arith.constant 0 : index
      %c0_22 = arith.constant 0 : index
      %37 = vector.load %arg6[%c0_21, %c0_22] : memref<1x256xf32, #tpu.memory_space<vmem>>, vector<1x256xf32>
      %38 = vector.broadcast %37 : vector<1x256xf32> to vector<16x256xf32>
      %39 = arith.mulf %36, %38 : vector<16x256xf32>
      %c0_23 = arith.constant 0 : index
      %c0_24 = arith.constant 0 : index
      %40 = vector.load %arg7[%c0_23, %c0_24] : memref<1x256xf32, #tpu.memory_space<vmem>>, vector<1x256xf32>
      %41 = vector.broadcast %40 : vector<1x256xf32> to vector<16x256xf32>
      %42 = arith.addf %39, %41 : vector<16x256xf32>
      %43 = arith.truncf %42 : vector<16x256xf32> to vector<16x256xbf16>
      %c0_25 = arith.constant 0 : index
      %c0_26 = arith.constant 0 : index
      %44 = vector.load %arg8[%c0_25, %c0_26] : memref<16x256xbf16, #tpu.memory_space<vmem>>, vector<16x256xbf16>
      tpu.vector_store %arg8[%c0_25, %c0_26], %43 {strides = array<i32>} : memref<16x256xbf16, #tpu.memory_space<vmem>>, vector<16x256xbf16>,
    } else {
    }
    return
  }
  func.func @transform_0(%arg0: i32, %arg1: i32) -> (i32, i32) {
    %c0_i32 = arith.constant 0 : i32
    return %arg0, %arg1 : i32, i32
  }
  func.func @transform_1(%arg0: i32, %arg1: i32) -> (i32, i32) {
    %c0_i32 = arith.constant 0 : i32
    %c0_i32_0 = arith.constant 0 : i32
    return %arg1, %c0_i32 : i32, i32
  }
  func.func @transform_2(%arg0: i32, %arg1: i32) -> (i32, i32) {
    %c0_i32 = arith.constant 0 : i32
    %c0_i32_0 = arith.constant 0 : i32
    %c0_i32_1 = arith.constant 0 : i32
    return %c0_i32, %c0_i32_0 : i32, i32
  }
  func.func @transform_3(%arg0: i32, %arg1: i32) -> (i32, i32) {
    %c0_i32 = arith.constant 0 : i32
    %c0_i32_0 = arith.constant 0 : i32
    return %arg0, %c0_i32 : i32, i32
  }
  func.func @transform_4(%arg0: i32, %arg1: i32) -> (i32, i32) {
    %c0_i32 = arith.constant 0 : i32
    %c0_i32_0 = arith.constant 0 : i32
    %c0_i32_1 = arith.constant 0 : i32
    return %c0_i32, %c0_i32_0 : i32, i32
  }
  func.func @transform_5(%arg0: i32, %arg1: i32) -> (i32, i32) {
    %c0_i32 = arith.constant 0 : i32
    %c0_i32_0 = arith.constant 0 : i32
    %c0_i32_1 = arith.constant 0 : i32
    return %c0_i32, %c0_i32_0 : i32, i32
  }
  func.func @transform_6(%arg0: i32, %arg1: i32) -> (i32, i32) {
    %c0_i32 = arith.constant 0 : i32
    %c0_i32_0 = arith.constant 0 : i32
    return %arg0, %c0_i32 : i32, i32
  }
}

module attributes {stable_mosaic.version = 11 : i64} {
  func.func @_linear_res_ln_kernel(%arg0: i32, %arg1: i32, %arg2: memref<16x512xbf16, #tpu.memory_space<vmem>>, %arg3: memref<512x256xbf16, #tpu.memory_space<vmem>>, %arg4: memref<1x256xf32, #tpu.memory_space<vmem>>, %arg5: memref<16x256xbf16, #tpu.memory_space<vmem>>, %arg6: memref<1x256xf32, #tpu.memory_space<vmem>>, %arg7: memref<1x256xf32, #tpu.memory_space<vmem>>, %arg8: memref<16x256xbf16, #tpu.memory_space<vmem>>, %arg9: memref<16x256xf32, #tpu.memory_space<vmem>>) attributes {dimension_semantics = [#tpu.dimension_semantics<parallel>, #tpu.dimension_semantics<arbitrary>], iteration_bounds = array<i64: 1, 1>, scalar_prefetch = 0 : i64, scratch_operands = 1 : i64, tpu.core_type = #tpu.core_type<tc>, window_params = [{transform_indices = @transform_0, window_bounds = array<i64: 16, 512>}, {transform_indices = @transform_1, window_bounds = array<i64: 512, 256>}, {pipeline_mode = #tpu.pipeline_mode<synchronous>, transform_indices = @transform_2, window_bounds = array<i64: 1, 256>}, {transform_indices = @transform_3, window_bounds = array<i64: 16, 256>}, {pipeline_mode = #tpu.pipeline_mode<synchronous>, transform_indices = @transform_4, window_bounds = array<i64: 1, 256>}, {pipeline_mode = #tpu.pipeline_mode<synchronous>, transform_indices = @transform_5, window_bounds = array<i64: 1, 256>}, {transform_indices = @transform_6, window_bounds = array<i64: 16, 256>}]} {
    %c0_i32 = arith.constant 0 : i32
    %0 = arith.cmpi eq, %arg1, %c0_i32 : i32
    %1 = arith.extui %0 : i1 to i32
    %c0_i32_0 = arith.constant 0 : i32
    %2 = arith.cmpi ne, %1, %c0_i32_0 : i32
    scf.if %2 {
      %cst_10 = arith.constant 0.000000e+00 : f32
      %12 = vector.broadcast %cst_10 : f32 to vector<16x256xf32>
      %c0_11 = arith.constant 0 : index
      %c0_12 = arith.constant 0 : index
      %13 = vector.load %arg9[%c0_11, %c0_12] : memref<16x256xf32, #tpu.memory_space<vmem>>, vector<16x256xf32>
      tpu.vector_store %arg9[%c0_11, %c0_12], %12 {strides = array<i32>} : memref<16x256xf32, #tpu.memory_space<vmem>>, vector<16x256xf32>,
    } else {
    }
    %c0 = arith.constant 0 : index
    %c0_1 = arith.constant 0 : index
    %3 = vector.load %arg9[%c0, %c0_1] : memref<16x256xf32, #tpu.memory_space<vmem>>, vector<16x256xf32>
    %c0_2 = arith.constant 0 : index
    %c0_3 = arith.constant 0 : index
    %4 = vector.load %arg2[%c0_2, %c0_3] : memref<16x512xbf16, #tpu.memory_space<vmem>>, vector<16x512xbf16>
    %c0_4 = arith.constant 0 : index
    %c0_5 = arith.constant 0 : index
    %5 = vector.load %arg3[%c0_4, %c0_5] : memref<512x256xbf16, #tpu.memory_space<vmem>>, vector<512x256xbf16>
    %cst = arith.constant dense<0.000000e+00> : vector<16x256xf32>
    %6 = tpu.matmul %4, %5, %cst {dimension_numbers = #tpu.dot_dimension_numbers<[1], [0], [0], [1], [0, 0, 1, 1], [], []>} : vector<16x512xbf16>, vector<512x256xbf16>, vector<16x256xf32> -> vector<16x256xf32>
    %7 = arith.addf %3, %6 : vector<16x256xf32>
    %c0_6 = arith.constant 0 : index
    %c0_7 = arith.constant 0 : index
    %8 = vector.load %arg9[%c0_6, %c0_7] : memref<16x256xf32, #tpu.memory_space<vmem>>, vector<16x256xf32>
    tpu.vector_store %arg9[%c0_6, %c0_7], %7 {strides = array<i32>} : memref<16x256xf32, #tpu.memory_space<vmem>>, vector<16x256xf32>,
    %c0_i32_8 = arith.constant 0 : i32
    %9 = arith.cmpi eq, %arg1, %c0_i32_8 : i32
    %10 = arith.extui %9 : i1 to i32
    %c0_i32_9 = arith.constant 0 : i32
    %11 = arith.cmpi ne, %10, %c0_i32_9 : i32
    scf.if %11 {
      %c0_10 = arith.constant 0 : index
      %c0_11 = arith.constant 0 : index
      %12 = vector.load %arg9[%c0_10, %c0_11] : memref<16x256xf32, #tpu.memory_space<vmem>>, vector<16x256xf32>
      %c0_12 = arith.constant 0 : index
      %c0_13 = arith.constant 0 : index
      %13 = vector.load %arg4[%c0_12, %c0_13] : memref<1x256xf32, #tpu.memory_space<vmem>>, vector<1x256xf32>
      %14 = vector.broadcast %13 : vector<1x256xf32> to vector<16x256xf32>
      %15 = arith.addf %12, %14 : vector<16x256xf32>
      %c0_14 = arith.constant 0 : index
      %c0_15 = arith.constant 0 : index
      %16 = vector.load %arg5[%c0_14, %c0_15] : memref<16x256xbf16, #tpu.memory_space<vmem>>, vector<16x256xbf16>
      %17 = arith.extf %16 : vector<16x256xbf16> to vector<16x256xf32>
      %18 = arith.addf %15, %17 : vector<16x256xf32>
      %cst_16 = arith.constant dense<0.000000e+00> : vector<16xf32>
      %19 = vector.multi_reduction <add>, %18, %cst_16 [1] : vector<16x256xf32> to vector<16xf32>
      %20 = vector.shape_cast %19 : vector<16xf32> to vector<16x1xf32>
      %cst_17 = arith.constant 2.560000e+02 : f32
      %21 = vector.broadcast %cst_17 : f32 to vector<16x1xf32>
      %22 = arith.divf %20, %21 : vector<16x1xf32>
      %23 = vector.broadcast %22 : vector<16x1xf32> to vector<16x256xf32>
      %24 = arith.subf %18, %23 : vector<16x256xf32>
      %25 = arith.mulf %24, %24 : vector<16x256xf32>
      %cst_18 = arith.constant dense<0.000000e+00> : vector<16xf32>
      %26 = vector.multi_reduction <add>, %25, %cst_18 [1] : vector<16x256xf32> to vector<16xf32>
      %27 = vector.shape_cast %26 : vector<16xf32> to vector<16x1xf32>
      %cst_19 = arith.constant 2.560000e+02 : f32
      %28 = vector.broadcast %cst_19 : f32 to vector<16x1xf32>
      %29 = arith.divf %27, %28 : vector<16x1xf32>
      %30 = vector.broadcast %22 : vector<16x1xf32> to vector<16x256xf32>
      %31 = arith.subf %18, %30 : vector<16x256xf32>
      %cst_20 = arith.constant 9.99999996E-13 : f32
      %32 = vector.broadcast %cst_20 : f32 to vector<16x1xf32>
      %33 = arith.addf %29, %32 : vector<16x1xf32>
      %34 = math.rsqrt %33 : vector<16x1xf32>
      %35 = vector.broadcast %34 : vector<16x1xf32> to vector<16x256xf32>
      %36 = arith.mulf %31, %35 : vector<16x256xf32>
      %c0_21 = arith.constant 0 : index
      %c0_22 = arith.constant 0 : index
      %37 = vector.load %arg6[%c0_21, %c0_22] : memref<1x256xf32, #tpu.memory_space<vmem>>, vector<1x256xf32>
      %38 = vector.broadcast %37 : vector<1x256xf32> to vector<16x256xf32>
      %39 = arith.mulf %36, %38 : vector<16x256xf32>
      %c0_23 = arith.constant 0 : index
      %c0_24 = arith.constant 0 : index
      %40 = vector.load %arg7[%c0_23, %c0_24] : memref<1x256xf32, #tpu.memory_space<vmem>>, vector<1x256xf32>
      %41 = vector.broadcast %40 : vector<1x256xf32> to vector<16x256xf32>
      %42 = arith.addf %39, %41 : vector<16x256xf32>
      %43 = arith.truncf %42 : vector<16x256xf32> to vector<16x256xbf16>
      %c0_25 = arith.constant 0 : index
      %c0_26 = arith.constant 0 : index
      %44 = vector.load %arg8[%c0_25, %c0_26] : memref<16x256xbf16, #tpu.memory_space<vmem>>, vector<16x256xbf16>
      tpu.vector_store %arg8[%c0_25, %c0_26], %43 {strides = array<i32>} : memref<16x256xbf16, #tpu.memory_space<vmem>>, vector<16x256xbf16>,
    } else {
    }
    return
  }
  func.func @transform_0(%arg0: i32, %arg1: i32) -> (i32, i32) {
    %c0_i32 = arith.constant 0 : i32
    return %arg0, %arg1 : i32, i32
  }
  func.func @transform_1(%arg0: i32, %arg1: i32) -> (i32, i32) {
    %c0_i32 = arith.constant 0 : i32
    %c0_i32_0 = arith.constant 0 : i32
    return %arg1, %c0_i32 : i32, i32
  }
  func.func @transform_2(%arg0: i32, %arg1: i32) -> (i32, i32) {
    %c0_i32 = arith.constant 0 : i32
    %c0_i32_0 = arith.constant 0 : i32
    %c0_i32_1 = arith.constant 0 : i32
    return %c0_i32, %c0_i32_0 : i32, i32
  }
  func.func @transform_3(%arg0: i32, %arg1: i32) -> (i32, i32) {
    %c0_i32 = arith.constant 0 : i32
    %c0_i32_0 = arith.constant 0 : i32
    return %arg0, %c0_i32 : i32, i32
  }
  func.func @transform_4(%arg0: i32, %arg1: i32) -> (i32, i32) {
    %c0_i32 = arith.constant 0 : i32
    %c0_i32_0 = arith.constant 0 : i32
    %c0_i32_1 = arith.constant 0 : i32
    return %c0_i32, %c0_i32_0 : i32, i32
  }
  func.func @transform_5(%arg0: i32, %arg1: i32) -> (i32, i32) {
    %c0_i32 = arith.constant 0 : i32
    %c0_i32_0 = arith.constant 0 : i32
    %c0_i32_1 = arith.constant 0 : i32
    return %c0_i32, %c0_i32_0 : i32, i32
  }
  func.func @transform_6(%arg0: i32, %arg1: i32) -> (i32, i32) {
    %c0_i32 = arith.constant 0 : i32
    %c0_i32_0 = arith.constant 0 : i32
    return %arg0, %c0_i32 : i32, i32
  }
}

module attributes {stable_mosaic.version = 11 : i64} {
  func.func @_pool_head_kernel(%arg0: memref<2x256xbf16, #tpu.memory_space<vmem>>, %arg1: memref<256x256xbf16, #tpu.memory_space<vmem>>, %arg2: memref<1x256xf32, #tpu.memory_space<vmem>>, %arg3: memref<256x1xbf16, #tpu.memory_space<vmem>>, %arg4: memref<1x1xf32, #tpu.memory_space<vmem>>, %arg5: memref<2x1xf32, #tpu.memory_space<vmem>>) attributes {dimension_semantics = [], scalar_prefetch = 0 : i64, scratch_operands = 0 : i64, tpu.core_type = #tpu.core_type<tc>} {
    %c0 = arith.constant 0 : index
    %c0_0 = arith.constant 0 : index
    %0 = vector.load %arg0[%c0, %c0_0] : memref<2x256xbf16, #tpu.memory_space<vmem>>, vector<2x256xbf16>
    %c0_1 = arith.constant 0 : index
    %c0_2 = arith.constant 0 : index
    %1 = vector.load %arg1[%c0_1, %c0_2] : memref<256x256xbf16, #tpu.memory_space<vmem>>, vector<256x256xbf16>
    %cst = arith.constant dense<0.000000e+00> : vector<2x256xf32>
    %2 = tpu.matmul %0, %1, %cst {dimension_numbers = #tpu.dot_dimension_numbers<[1], [0], [0], [1], [0, 0, 1, 1], [], []>} : vector<2x256xbf16>, vector<256x256xbf16>, vector<2x256xf32> -> vector<2x256xf32>
    %c0_3 = arith.constant 0 : index
    %c0_4 = arith.constant 0 : index
    %3 = vector.load %arg2[%c0_3, %c0_4] : memref<1x256xf32, #tpu.memory_space<vmem>>, vector<1x256xf32>
    %4 = vector.broadcast %3 : vector<1x256xf32> to vector<2x256xf32>
    %5 = arith.addf %2, %4 : vector<2x256xf32>
    %6 = math.tanh %5 : vector<2x256xf32>
    %7 = arith.truncf %6 : vector<2x256xf32> to vector<2x256xbf16>
    %c0_5 = arith.constant 0 : index
    %c0_6 = arith.constant 0 : index
    %8 = vector.load %arg3[%c0_5, %c0_6] : memref<256x1xbf16, #tpu.memory_space<vmem>>, vector<256x1xbf16>
    %cst_7 = arith.constant dense<0.000000e+00> : vector<2x1xf32>
    %9 = tpu.matmul %7, %8, %cst_7 {dimension_numbers = #tpu.dot_dimension_numbers<[1], [0], [0], [1], [0, 0, 1, 1], [], []>} : vector<2x256xbf16>, vector<256x1xbf16>, vector<2x1xf32> -> vector<2x1xf32>
    %c0_8 = arith.constant 0 : index
    %c0_9 = arith.constant 0 : index
    %10 = vector.load %arg4[%c0_8, %c0_9] : memref<1x1xf32, #tpu.memory_space<vmem>>, vector<1x1xf32>
    %11 = vector.broadcast %10 : vector<1x1xf32> to vector<2x1xf32>
    %12 = arith.addf %9, %11 : vector<2x1xf32>
    %c0_10 = arith.constant 0 : index
    %c0_11 = arith.constant 0 : index
    %13 = vector.load %arg5[%c0_10, %c0_11] : memref<2x1xf32, #tpu.memory_space<vmem>>, vector<2x1xf32>
    tpu.vector_store %arg5[%c0_10, %c0_11], %12 {strides = array<i32>} : memref<2x1xf32, #tpu.memory_space<vmem>>, vector<2x1xf32>,
    return
  }
}

</mosaic_0001>

<llo_original>
// kernel: mul.11
$region0: #{mul.11}
  #allocation0 [shape = 's32[1]{0}', space=sflag, size = 0x4, scoped, tag = 'scoped memory for mul.11']
  %s0 = inlined_call_operand.vmem [shape: f32[768], index: 0, kind: input, shape index: {}]
  %s1 = inlined_call_operand.vmem [shape: f32[768], index: 1, kind: input, shape index: {}]
  %s2 = inlined_call_operand.vmem [shape: f32[768], index: 2, kind: output, shape index: {}]
  %v3 = vld [vmem:[%s0] sm:$0x3f]
  %v4 = vld [vmem:[%s1] sm:$0x3f]
  %5 = xla_tuple %v3, %v4
  %6 = xla_tuple %5
  %v7 = vmul.f32 %v3, %v4
  %8 = xla_tuple %v7
  %9 = vst [vmem:[%s2] sm:$0xff] %v7

// kernel: _lambda_.3
$region0: #{_lambda_.3}
  #allocation0 [shape = 'u32[]', space=smem, size = 0x4, offset = 0x4, fixed_abs, tag = 'smem constant byte address 0x4 - core index']
  #allocation1 [shape = 'u32[72,128]{1,0:T(1,128)}', space=vmem, size = 0x9000, scoped, tag = 'internal scratch']
  %s0 = inlined_call_operand.vmem [shape: f32[16,128], index: 0, kind: input, shape index: {}]
  %s1 = inlined_call_operand.vmem [shape: f32[1,128], index: 1, kind: input, shape index: {}]
  %s2 = inlined_call_operand.vmem [shape: f32[1,128], index: 2, kind: input, shape index: {}]
  %s3 = inlined_call_operand.vmem [shape: bf16[16,128], index: 3, kind: output, shape index: {}]
  %s4 = sld [smem:[#allocation0]]
  $region22: #{_lambda_.3} parent=0
    _
  %s6 = ssub.s32 1, %s4
  %s7 = scalar_select 0, %s6, %s4
  // Predicated region
  $region2: #{_lambda_.3} parent=0 // pred_check
    _
  $region3: #{_lambda_.3} parent=0 // pred_check_branch
    %9 = sbr.rel (0) target = $region5
  $region4: #{_lambda_.3} parent=0 // pred_region
    _
  $region5: #{_lambda_.3} parent=0 // pred_fallthru
    _
  // Predicated region
  $region6: #{_lambda_.3} parent=0 // pred_check
    _
  $region7: #{_lambda_.3} parent=0 // pred_check_branch
    %11 = sbr.rel (0) target = $region9
  $region8: #{_lambda_.3} parent=0 // pred_region
    _
  $region9: #{_lambda_.3} parent=0 // pred_fallthru
    _
  // Predicated region
  $region10: #{_lambda_.3} parent=0 // pred_check
    _
  $region11: #{_lambda_.3} parent=0 // pred_check_branch
    %13 = sbr.rel (0) target = $region13
  $region12: #{_lambda_.3} parent=0 // pred_region
    _
  $region13: #{_lambda_.3} parent=0 // pred_fallthru
    _
  %v14 = vld [vmem:[%s0] sm:$0xff]
  %v15 = vld [vmem:[%s0 + $0x8] sm:$0xff]
  %16 = vadd.xlane.f32.xlu0 %v14
  %v17 = vpop.xlane.xlu0 %16
  %18 = vadd.xlane.f32.xlu0 %v15
  %v19 = vpop.xlane.xlu0 %18
  %v20 = vrcp.pop 128.0
  %v21 = vmul.f32 128.0, %v20
  %v22 = vsub.f32 1.0, %v21
  %v23 = vmul.f32 %v20, %v22
  %v24 = vadd.f32 %v20, %v23
  %vm25 = vweird.f32 %v20
  %v26 = vsel %vm25, %v20, %v24
  %v27 = vmul.f32 %v17, %v26
  %v28 = vmul.f32 %v19, %v26
  %v29 = vsub.f32 %v14, %v27
  %v30 = vsub.f32 %v15, %v28
  %v31 = vmul.f32 %v29, %v29
  %v32 = vmul.f32 %v30, %v30
  %33 = vadd.xlane.f32.xlu0 %v31
  %v34 = vpop.xlane.xlu0 %33
  %35 = vadd.xlane.f32.xlu0 %v32
  %v36 = vpop.xlane.xlu0 %35
  %v37 = vmul.f32 %v34, %v26
  %v38 = vmul.f32 %v36, %v26
  %v39 = vadd.f32 %v37, 1e-12
  %v40 = vadd.f32 %v38, 1e-12
  %v41 = vrsqrt.pop %v39
  %v42 = vmul.f32 %v41, %v39
  %v43 = vmul.f32 %v42, %v41
  %v44 = vmul.f32 0.5, %v43
  %v45 = vsub.f32 1.5, %v44
  %v46 = vmul.f32 %v41, %v45
  %vm47 = vweird.f32 %v39
  %vm48 = vweird.f32 %v41
  %vm49 = vmor %vm47, %vm48
  %v50 = vsel %vm49, %v41, %v46
  %v51 = vrsqrt.pop %v40
  %v52 = vmul.f32 %v51, %v40
  %v53 = vmul.f32 %v52, %v51
  %v54 = vmul.f32 0.5, %v53
  %v55 = vsub.f32 1.5, %v54
  %v56 = vmul.f32 %v51, %v55
  %vm57 = vweird.f32 %v40
  %vm58 = vweird.f32 %v51
  %vm59 = vmor %vm57, %vm58
  %v60 = vsel %vm59, %v51, %v56
  %v61 = vmul.f32 %v29, %v50
  %v62 = vmul.f32 %v30, %v60
  %v63 = vld [vmem:[%s1] sm:$0x1]
  %v65 = vperm.slane %v63, 0
  %v67 = vmul.f32 %v61, %v65
  %v68 = vmul.f32 %v62, %v65
  %v69 = vld [vmem:[%s2] sm:$0x1]
  %v71 = vperm.slane %v69, 0
  %v73 = vadd.f32 %v67, %v71
  %v74 = vadd.f32 %v68, %v71
  %v75 = vpack.c.bf16 %v73, %v73
  %v76 = vpack.c.bf16 %v74, %v74
  %77 = vst [vmem:[%s3] sm:$0xf] %v75
  %78 = vst [vmem:[%s3 + $0x4] sm:$0xf] %v76
  // Predicated region
  $region14: #{_lambda_.3} parent=0 // pred_check
    _
  $region15: #{_lambda_.3} parent=0 // pred_check_branch
    %80 = sbr.rel (0) target = $region17
  $region16: #{_lambda_.3} parent=0 // pred_region
    _
  $region17: #{_lambda_.3} parent=0 // pred_fallthru
    _
  // Predicated region
  $region18: #{_lambda_.3} parent=0 // pred_check
    _
  $region19: #{_lambda_.3} parent=0 // pred_check_branch
    %82 = sbr.rel (0) target = $region21
  $region20: #{_lambda_.3} parent=0 // pred_region
    _
  $region21: #{_lambda_.3} parent=0 // pred_fallthru
    _

// kernel: _lambda_.4
$region0: #{_lambda_.4}
  #allocation0 [shape = 'u32[]', space=smem, size = 0x4, offset = 0x4, fixed_abs, tag = 'smem constant byte address 0x4 - core index']
  #allocation1 [shape = 'u32[72,128]{1,0:T(1,128)}', space=vmem, size = 0x9000, scoped, tag = 'internal scratch']
  #allocation2 [shape = 'f32[16,256]{1,0:T(8,128)}', space=vmem, size = 0x4000, scoped, tag = 'scratch operand']
  %s0 = inlined_call_operand.vmem [shape: bf16[16,128], index: 0, kind: input, shape index: {}]
  %s1 = inlined_call_operand.vmem [shape: bf16[128,256], index: 1, kind: input, shape index: {}]
  %s2 = inlined_call_operand.vmem [shape: f32[1,256], index: 2, kind: input, shape index: {}]
  %s3 = inlined_call_operand.vmem [shape: bf16[16,256], index: 3, kind: output, shape index: {}]
  %s4 = sld [smem:[#allocation0]]
  $region30: #{_lambda_.4} parent=0
    _
  %s6 = ssub.s32 1, %s4
  %s7 = scalar_select 0, %s6, %s4
  // Predicated region
  $region2: #{_lambda_.4} parent=0 // pred_check
    _
  $region3: #{_lambda_.4} parent=0 // pred_check_branch
    %9 = sbr.rel (0) target = $region5
  $region4: #{_lambda_.4} parent=0 // pred_region
    _
  $region5: #{_lambda_.4} parent=0 // pred_fallthru
    _
  // Predicated region
  $region6: #{_lambda_.4} parent=0 // pred_check
    _
  $region7: #{_lambda_.4} parent=0 // pred_check_branch
    %11 = sbr.rel (0) target = $region9
  $region8: #{_lambda_.4} parent=0 // pred_region
    _
  $region9: #{_lambda_.4} parent=0 // pred_fallthru
    _
  // Predicated region
  $region10: #{_lambda_.4} parent=0 // pred_check
    _
  $region11: #{_lambda_.4} parent=0 // pred_check_branch
    %13 = sbr.rel (0) target = $region13
  $region12: #{_lambda_.4} parent=0 // pred_region
    _
  $region13: #{_lambda_.4} parent=0 // pred_fallthru
    _
  %p14 = scmp.eq.s32.totalorder 0, 0
  // Predicated region
  $region14: #{_lambda_.4} parent=0 // pred_check
    %p15 = pneg %p14
  $region15: #{_lambda_.4} parent=0 // pred_check_branch
    %17 = sbr.rel (%p15) target = $region17
  $region16: #{_lambda_.4} parent=0 // pred_region
    %18 = vst [vmem:[#allocation2] sm:$0xff] 0.0
    %19 = vst [vmem:[#allocation2 + $0x8] sm:$0xff] 0.0
    %20 = vst [vmem:[#allocation2 + $0x10] sm:$0xff] 0.0
    %21 = vst [vmem:[#allocation2 + $0x18] sm:$0xff] 0.0
  $region17: #{_lambda_.4} parent=0 // pred_fallthru
    _
  %v22 = vld [vmem:[#allocation2] sm:$0xff]
  %v23 = vld [vmem:[#allocation2 + $0x8] sm:$0xff]
  %v24 = vld [vmem:[#allocation2 + $0x10] sm:$0xff]
  %v25 = vld [vmem:[#allocation2 + $0x18] sm:$0xff]
  %v26 = vld [vmem:[%s0] sm:$0xf]
  %v27 = vld [vmem:[%s0 + $0x4] sm:$0xf]
  %v28 = vld [vmem:[%s1] sm:$0xff]
  %v29 = vld [vmem:[%s1 + $0x8] sm:$0xff]
  %v30 = vld [vmem:[%s1 + $0x10] sm:$0xff]
  %v31 = vld [vmem:[%s1 + $0x18] sm:$0xff]
  %v32 = vld [vmem:[%s1 + $0x20] sm:$0xff]
  %v33 = vld [vmem:[%s1 + $0x28] sm:$0xff]
  %v34 = vld [vmem:[%s1 + $0x30] sm:$0xff]
  %v35 = vld [vmem:[%s1 + $0x38] sm:$0xff]
  %v36 = vld [vmem:[%s1 + $0x40] sm:$0xff]
  %v37 = vld [vmem:[%s1 + $0x48] sm:$0xff]
  %v38 = vld [vmem:[%s1 + $0x50] sm:$0xff]
  %v39 = vld [vmem:[%s1 + $0x58] sm:$0xff]
  %v40 = vld [vmem:[%s1 + $0x60] sm:$0xff]
  %v41 = vld [vmem:[%s1 + $0x68] sm:$0xff]
  %v42 = vld [vmem:[%s1 + $0x70] sm:$0xff]
  %v43 = vld [vmem:[%s1 + $0x78] sm:$0xff]
  %v46 = vunpack.c.l.b16 %v26
  %v47 = vunpack.c.l.b16 %v27
  %v48 = vpack.c.b16 %v47, %v46
  %v66 = vunpack.c.l.b16 %v28
  %v67 = vunpack.c.h.b16 %v28
  %v68 = vunpack.c.l.b16 %v29
  %v69 = vunpack.c.h.b16 %v29
  %v70 = vunpack.c.l.b16 %v30
  %v71 = vunpack.c.h.b16 %v30
  %v72 = vunpack.c.l.b16 %v31
  %v73 = vunpack.c.h.b16 %v31
  %v74 = vunpack.c.l.b16 %v32
  %v75 = vunpack.c.h.b16 %v32
  %v76 = vunpack.c.l.b16 %v33
  %v77 = vunpack.c.h.b16 %v33
  %v78 = vunpack.c.l.b16 %v34
  %v79 = vunpack.c.h.b16 %v34
  %v80 = vunpack.c.l.b16 %v35
  %v81 = vunpack.c.h.b16 %v35
  %v82 = vunpack.c.l.b16 %v36
  %v83 = vunpack.c.h.b16 %v36
  %v84 = vunpack.c.l.b16 %v37
  %v85 = vunpack.c.h.b16 %v37
  %v86 = vunpack.c.l.b16 %v38
  %v87 = vunpack.c.h.b16 %v38
  %v88 = vunpack.c.l.b16 %v39
  %v89 = vunpack.c.h.b16 %v39
  %v90 = vunpack.c.l.b16 %v40
  %v91 = vunpack.c.h.b16 %v40
  %v92 = vunpack.c.l.b16 %v41
  %v93 = vunpack.c.h.b16 %v41
  %v94 = vunpack.c.l.b16 %v42
  %v95 = vunpack.c.h.b16 %v42
  %v96 = vunpack.c.l.b16 %v43
  %v97 = vunpack.c.h.b16 %v43
  %v98 = vpack.c.b16 %v68, %v66
  %v99 = vpack.c.b16 %v69, %v67
  %v100 = vpack.c.b16 %v72, %v70
  %v101 = vpack.c.b16 %v73, %v71
  %v102 = vpack.c.b16 %v76, %v74
  %v103 = vpack.c.b16 %v77, %v75
  %v104 = vpack.c.b16 %v80, %v78
  %v105 = vpack.c.b16 %v81, %v79
  %v106 = vpack.c.b16 %v84, %v82
  %v107 = vpack.c.b16 %v85, %v83
  %v108 = vpack.c.b16 %v88, %v86
  %v109 = vpack.c.b16 %v89, %v87
  %v110 = vpack.c.b16 %v92, %v90
  %v111 = vpack.c.b16 %v93, %v91
  %v112 = vpack.c.b16 %v96, %v94
  %v113 = vpack.c.b16 %v97, %v95
  %130 = vmatpush.bf16.msra.mxu0 %v112
  %131 = vmatpush.bf16.msra.mxu0 %v110
  %132 = vmatpush.bf16.msra.mxu0 %v108
  %133 = vmatpush.bf16.msra.mxu0 %v106
  %134 = vmatpush.bf16.msra.mxu0 %v104
  %135 = vmatpush.bf16.msra.mxu0 %v102
  %136 = vmatpush.bf16.msra.mxu0 %v100
  %137 = vmatpush.bf16.msra.mxu0 %v98
  %138 = vmatmul.bf16.gmra.mxu0 %v48
  %v139 = vpop.f32.mrf.mxu0
  %v140 = vadd.f32 0.0, %v139
  %v141 = vpop.f32.mrf.mxu0
  %v142 = vadd.f32 0.0, %v141
  %143 = vdwg.mxu0
  %144 = vmatpush.bf16.msra.mxu0 %v113
  %145 = vmatpush.bf16.msra.mxu0 %v111
  %146 = vmatpush.bf16.msra.mxu0 %v109
  %147 = vmatpush.bf16.msra.mxu0 %v107
  %148 = vmatpush.bf16.msra.mxu0 %v105
  %149 = vmatpush.bf16.msra.mxu0 %v103
  %150 = vmatpush.bf16.msra.mxu0 %v101
  %151 = vmatpush.bf16.msra.mxu0 %v99
  %152 = vmatmul.bf16.gmra.mxu0 %v48
  %v153 = vpop.f32.mrf.mxu0
  %v154 = vadd.f32 0.0, %v153
  %v155 = vpop.f32.mrf.mxu0
  %v156 = vadd.f32 0.0, %v155
  %157 = vdwg.mxu0
  %v158 = vadd.f32 %v22, %v140
  %v159 = vadd.f32 %v23, %v154
  %v160 = vadd.f32 %v24, %v142
  %v161 = vadd.f32 %v25, %v156
  %162 = vst [vmem:[#allocation2] sm:$0xff] %v158
  %163 = vst [vmem:[#allocation2 + $0x8] sm:$0xff] %v159
  %164 = vst [vmem:[#allocation2 + $0x10] sm:$0xff] %v160
  %165 = vst [vmem:[#allocation2 + $0x18] sm:$0xff] %v161
  // Predicated region
  $region18: #{_lambda_.4} parent=0 // pred_check
    %p166 = pneg %p14
  $region19: #{_lambda_.4} parent=0 // pred_check_branch
    %168 = sbr.rel (%p166) target = $region21
  $region20: #{_lambda_.4} parent=0 // pred_region
    %v169 = vld [vmem:[#allocation2] sm:$0xff]
    %v170 = vld [vmem:[#allocation2 + $0x8] sm:$0xff]
    %v171 = vld [vmem:[#allocation2 + $0x10] sm:$0xff]
    %v172 = vld [vmem:[#allocation2 + $0x18] sm:$0xff]
    %v173 = vld [vmem:[%s2] sm:$0x3]
    %v175 = vperm.slane %v173, 0
    %v176 = vperm.slane %v173, 1
    %v179 = vadd.f32 %v169, %v175
    %v180 = vadd.f32 %v170, %v176
    %v181 = vadd.f32 %v171, %v175
    %v182 = vadd.f32 %v172, %v176
    %v183 = vpack.c.bf16 %v180, %v179
    %v184 = vpack.c.bf16 %v182, %v181
    %185 = vst [vmem:[%s3] sm:$0xff] %v183
    %186 = vst [vmem:[%s3 + $0x8] sm:$0xff] %v184
  $region21: #{_lambda_.4} parent=0 // pred_fallthru
    _
  // Predicated region
  $region22: #{_lambda_.4} parent=0 // pred_check
    _
  $region23: #{_lambda_.4} parent=0 // pred_check_branch
    %188 = sbr.rel (0) target = $region25
  $region24: #{_lambda_.4} parent=0 // pred_region
    _
  $region25: #{_lambda_.4} parent=0 // pred_fallthru
    _
  // Predicated region
  $region26: #{_lambda_.4} parent=0 // pred_check
    _
  $region27: #{_lambda_.4} parent=0 // pred_check_branch
    %190 = sbr.rel (0) target = $region29
  $region28: #{_lambda_.4} parent=0 // pred_region
    _
  $region29: #{_lambda_.4} parent=0 // pred_fallthru
    _

// kernel: closed_call.22
$region0: #{closed_call.22}
  #allocation0 [shape = 'u32[]', space=smem, size = 0x4, offset = 0x4, fixed_abs, tag = 'smem constant byte address 0x4 - core index']
  #allocation1 [shape = 'u32[72,128]{1,0:T(1,128)}', space=vmem, size = 0x9000, scoped, tag = 'internal scratch']
  #allocation2 [shape = 'f32[8,1]{1,0:T(8,128)}', space=vmem, size = 0x1000, scoped, tag = 'scratch operand']
  #allocation3 [shape = 'f32[8,1]{1,0:T(8,128)}', space=vmem, size = 0x1000, scoped, tag = 'scratch operand']
  #allocation4 [shape = 'f32[8,128]{1,0:T(8,128)}', space=vmem, size = 0x1000, scoped, tag = 'scratch operand']
  %s0 = inlined_call_operand.vmem [shape: bf16[16,768], index: 0, kind: input, shape index: {}, may-alias: {0,1,2}]
  %s1 = inlined_call_operand.vmem [shape: bf16[16,768], index: 1, kind: input, shape index: {}, may-alias: {0,1,2}]
  %s2 = inlined_call_operand.vmem [shape: bf16[16,768], index: 2, kind: input, shape index: {}, may-alias: {0,1,2}]
  %s3 = inlined_call_operand.vmem [shape: f32[2,1,8], index: 3, kind: input, shape index: {}]
  %s4 = inlined_call_operand.vmem [shape: bf16[16,256], index: 4, kind: output, shape index: {}]
  %s5 = sld [smem:[#allocation0]]
  $region57: #{closed_call.22} parent=0
    _
  %s7 = ssub.s32 1, %s5
  %s8 = scalar_select 0, %s7, %s5
  loop: start=0, step=1, limit=6
  $region2: #{closed_call.22} parent=0 // loop_pre_header
    _
  $region3: #{closed_call.22} parent=0 // loop_header
    %s10 = sphi 0, %s14
    %p11 = scmp.ge.s32.totalorder %s10, 6
    %s17 = sphi 0, %s43
    %s18 = sphi 0, %s39
    %s19 = sphi 0, %s35
    %s20 = sphi 0, %s31
    %s21 = sphi 0, %s17
    %s22 = sphi 0, %s18
    %s23 = sphi 0, %s19
    %s24 = sphi 0, %s20
    %s25 = sphi 0, %s21
    %s26 = sphi 0, %s22
    %s27 = sphi 0, %s23
    %s28 = sphi 0, %s24
    %s50 = sphi 0, %s52
    %s53 = sphi 0, %s50
    %s54 = sphi 0, %s53
    %s70 = sphi 0, %s54
    %s82 = sphi 0, %s84
    %s85 = sphi 0, %s82
    %s86 = sphi 0, %s85
    %s102 = sphi 0, %s86
    %s114 = sphi 0, %s116
    %s117 = sphi 0, %s114
    %s118 = sphi 0, %s117
    %s134 = sphi 0, %s118
    %s142 = sphi 0, %s144
    %s145 = sphi 0, %s142
    %s146 = sphi 0, %s145
    %s162 = sphi 0, %s146
    %s172 = sphi 0, %s174
    %s175 = sphi 0, %s172
    %s176 = sphi 0, %s175
    %s192 = sphi 0, %s176
  $region4: #{closed_call.22} parent=0 // loop_header_branch
    %13 = sbr.rel (%p11) target = $region8
  $region5: #{closed_call.22} parent=0 // loop_body
    %s15 = ssub.s32 %s10, 1
    %s16 = ssub.s32 %s10, 2
    %s29 = sadd.s32 1, %s20
    %p30 = scmp.ge.s32.totalorder %s29, 1
    %s31 = scalar_select %p30, 0, %s29
    %s32 = sadd.s32 1, %s19
    %s33 = scalar_select %p30, %s32, %s19
    %p34 = scmp.ge.s32.totalorder %s33, 1
    %s35 = scalar_select %p34, 0, %s33
    %s36 = sadd.s32 1, %s18
    %s37 = scalar_select %p34, %s36, %s18
    %p38 = scmp.ge.s32.totalorder %s37, 2
    %s39 = scalar_select %p38, 0, %s37
    %s40 = sadd.s32 1, %s17
    %s41 = scalar_select %p38, %s40, %s17
    %p42 = scmp.ge.s32.totalorder %s41, 2
    %s43 = scalar_select %p42, 0, %s41
    %s44 = sadd.s32 %s17, %s19
    %s45 = sadd.s32 %s43, %s35
    %s46 = ssub.s32 %s44, %s45
    %s47 = ssub.s32 %s18, %s39
    %s48 = sor.u32 %s46, %s47
    %p49 = scmp.eq.s32.totalorder %s48, 0
    %s51 = sadd.s32 %s50, 1
    %s52 = scalar_select %p49, %s50, %s51
    %p55 = pneg %p49
    %p56 = scmp.eq.s32.totalorder %s10, 3
    %p57 = por %p55, %p56
    %p58 = scmp.ne.s32.totalorder %s50, %s53
    %p59 = scmp.eq.s32.totalorder %s10, 0
    %p60 = por %p58, %p59
    %p61 = scmp.ne.s32.totalorder %s50, %s53
    %p62 = scmp.eq.s32.totalorder %s15, 3
    %p63 = por %p61, %p62
    %p64 = scmp.ne.s32.totalorder %s53, %s54
    %p65 = scmp.eq.s32.totalorder %s15, 0
    %p66 = por %p64, %p65
    %p67 = scmp.ne.s32.totalorder %s53, %s54
    %p68 = scmp.eq.s32.totalorder %s16, 3
    %p69 = por %p67, %p68
    %p71 = scmp.ne.s32.totalorder %s54, %s70
    %p72 = scmp.eq.s32.totalorder %s16, 0
    %p73 = por %p71, %p72
    %s74 = sadd.s32 %s17, %s20
    %s75 = sadd.s32 %s18, 2
    %s76 = sadd.s32 %s43, %s31
    %s77 = sadd.s32 %s39, 2
    %s78 = ssub.s32 %s74, %s76
    %s79 = ssub.s32 %s75, %s77
    %s80 = sor.u32 %s78, %s79
    %p81 = scmp.eq.s32.totalorder %s80, 0
    %s83 = sadd.s32 %s82, 1
    %s84 = scalar_select %p81, %s82, %s83
    %p87 = pneg %p81
    %p88 = scmp.eq.s32.totalorder %s10, 3
    %p89 = por %p87, %p88
    %p90 = scmp.ne.s32.totalorder %s82, %s85
    %p91 = scmp.eq.s32.totalorder %s10, 0
    %p92 = por %p90, %p91
    %p93 = scmp.ne.s32.totalorder %s82, %s85
    %p94 = scmp.eq.s32.totalorder %s15, 3
    %p95 = por %p93, %p94
    %p96 = scmp.ne.s32.totalorder %s85, %s86
    %p97 = scmp.eq.s32.totalorder %s15, 0
    %p98 = por %p96, %p97
    %p99 = scmp.ne.s32.totalorder %s85, %s86
    %p100 = scmp.eq.s32.totalorder %s16, 3
    %p101 = por %p99, %p100
    %p103 = scmp.ne.s32.totalorder %s86, %s102
    %p104 = scmp.eq.s32.totalorder %s16, 0
    %p105 = por %p103, %p104
    %s106 = sadd.s32 %s17, %s20
    %s107 = sadd.s32 %s18, 4
    %s108 = sadd.s32 %s43, %s31
    %s109 = sadd.s32 %s39, 4
    %s110 = ssub.s32 %s106, %s108
    %s111 = ssub.s32 %s107, %s109
    %s112 = sor.u32 %s110, %s111
    %p113 = scmp.eq.s32.totalorder %s112, 0
    %s115 = sadd.s32 %s114, 1
    %s116 = scalar_select %p113, %s114, %s115
    %p119 = pneg %p113
    %p120 = scmp.eq.s32.totalorder %s10, 3
    %p121 = por %p119, %p120
    %p122 = scmp.ne.s32.totalorder %s114, %s117
    %p123 = scmp.eq.s32.totalorder %s10, 0
    %p124 = por %p122, %p123
    %p125 = scmp.ne.s32.totalorder %s114, %s117
    %p126 = scmp.eq.s32.totalorder %s15, 3
    %p127 = por %p125, %p126
    %p128 = scmp.ne.s32.totalorder %s117, %s118
    %p129 = scmp.eq.s32.totalorder %s15, 0
    %p130 = por %p128, %p129
    %p131 = scmp.ne.s32.totalorder %s117, %s118
    %p132 = scmp.eq.s32.totalorder %s16, 3
    %p133 = por %p131, %p132
    %p135 = scmp.ne.s32.totalorder %s118, %s134
    %p136 = scmp.eq.s32.totalorder %s16, 0
    %p137 = por %p135, %p136
    %s138 = ssub.s32 %s17, %s43
    %s139 = ssub.s32 %s20, %s31
    %s140 = sor.u32 %s138, %s139
    %p141 = scmp.eq.s32.totalorder %s140, 0
    %s143 = sadd.s32 %s142, 1
    %s144 = scalar_select %p141, %s142, %s143
    %p147 = pneg %p141
    %p148 = scmp.eq.s32.totalorder %s10, 3
    %p149 = por %p147, %p148
    %p150 = scmp.ne.s32.totalorder %s142, %s145
    %p151 = scmp.eq.s32.totalorder %s10, 0
    %p152 = por %p150, %p151
    %p153 = scmp.ne.s32.totalorder %s142, %s145
    %p154 = scmp.eq.s32.totalorder %s15, 3
    %p155 = por %p153, %p154
    %p156 = scmp.ne.s32.totalorder %s145, %s146
    %p157 = scmp.eq.s32.totalorder %s15, 0
    %p158 = por %p156, %p157
    %p159 = scmp.ne.s32.totalorder %s145, %s146
    %p160 = scmp.eq.s32.totalorder %s16, 3
    %p161 = por %p159, %p160
    %p163 = scmp.ne.s32.totalorder %s146, %s162
    %p164 = scmp.eq.s32.totalorder %s16, 0
    %p165 = por %p163, %p164
    %s166 = sadd.s32 %s17, %s19
    %s167 = sadd.s32 %s43, %s35
    %s168 = ssub.s32 %s166, %s167
    %s169 = ssub.s32 %s18, %s39
    %s170 = sor.u32 %s168, %s169
    %p171 = scmp.eq.s32.totalorder %s170, 0
    %s173 = sadd.s32 %s172, 1
    %s174 = scalar_select %p171, %s172, %s173
    %p177 = pneg %p171
    %p178 = scmp.eq.s32.totalorder %s10, 3
    %p179 = por %p177, %p178
    %p180 = scmp.ne.s32.totalorder %s172, %s175
    %p181 = scmp.eq.s32.totalorder %s10, 0
    %p182 = por %p180, %p181
    %p183 = scmp.ne.s32.totalorder %s172, %s175
    %p184 = scmp.eq.s32.totalorder %s15, 3
    %p185 = por %p183, %p184
    %p186 = scmp.ne.s32.totalorder %s175, %s176
    %p187 = scmp.eq.s32.totalorder %s15, 0
    %p188 = por %p186, %p187
    %p189 = scmp.ne.s32.totalorder %s175, %s176
    %p190 = scmp.eq.s32.totalorder %s16, 3
    %p191 = por %p189, %p190
    %p193 = scmp.ne.s32.totalorder %s176, %s192
    %p194 = scmp.eq.s32.totalorder %s16, 0
    %p195 = por %p193, %p194
    %p196 = scmp.le.s32.totalorder 1, %s10
    %p197 = scmp.lt.s32.totalorder %s10, 5
    %p198 = pnand %p196, %p197
    %p199 = pneg %p198
    // Predicated region
    $region9: #{closed_call.22} parent=5 // pred_check
      _
    $region10: #{closed_call.22} parent=5 // pred_check_branch
      %201 = sbr.rel (%p198) target = $region12
    $region11: #{closed_call.22} parent=5 // pred_region
      %s202 = ssub.s32 %s10, 1
    $region12: #{closed_call.22} parent=5 // pred_fallthru
      _
    %p203 = scmp.lt.s32.totalorder %s10, 4
    // Predicated region
    $region13: #{closed_call.22} parent=5 // pred_check
      %p204 = pneg %p203
    $region14: #{closed_call.22} parent=5 // pred_check_branch
      %206 = sbr.rel (%p204) target = $region16
    $region15: #{closed_call.22} parent=5 // pred_region
      // Predicated region
      $region17: #{closed_call.22} parent=15 // pred_check
        %p207 = pneg %p60
      $region18: #{closed_call.22} parent=15 // pred_check_branch
        %209 = sbr.rel (%p207) target = $region20
      $region19: #{closed_call.22} parent=15 // pred_region
        %s210 = sadd.s32 %s17, %s19
        %p211 = scmp.lt.s32.totalorder %s210, 1
        %s212 = scalar_select %p211, %s210, 1
        %p213 = scmp.lt.s32.totalorder %s18, 5
        %s214 = scalar_select %p213, %s18, 5
        %s215 = smul.addr %s212, 6
        %s216 = sadd.s32 %s214, %s215
        %s217 = smul.addr %s216, 4
        %s218 = scalar_lea.vmem %s0, %s217
        %s219 = sadd.s32 %s17, %s19
      $region20: #{closed_call.22} parent=15 // pred_fallthru
        _
      // Predicated region
      $region21: #{closed_call.22} parent=15 // pred_check
        %p220 = pneg %p92
      $region22: #{closed_call.22} parent=15 // pred_check_branch
        %222 = sbr.rel (%p220) target = $region24
      $region23: #{closed_call.22} parent=15 // pred_region
        %s223 = sadd.s32 %s17, %s20
        %s224 = sadd.s32 %s18, 2
        %p225 = scmp.lt.s32.totalorder %s223, 1
        %s226 = scalar_select %p225, %s223, 1
        %p227 = scmp.lt.s32.totalorder %s224, 5
        %s228 = scalar_select %p227, %s224, 5
        %s229 = smul.addr %s226, 6
        %s230 = sadd.s32 %s228, %s229
        %s231 = smul.addr %s230, 4
        %s232 = scalar_lea.vmem %s1, %s231
        %s233 = sadd.s32 %s17, %s20
        %s234 = sadd.s32 %s18, 2
      $region24: #{closed_call.22} parent=15 // pred_fallthru
        _
      // Predicated region
      $region25: #{closed_call.22} parent=15 // pred_check
        %p235 = pneg %p124
      $region26: #{closed_call.22} parent=15 // pred_check_branch
        %237 = sbr.rel (%p235) target = $region28
      $region27: #{closed_call.22} parent=15 // pred_region
        %s238 = sadd.s32 %s17, %s20
        %s239 = sadd.s32 %s18, 4
        %p240 = scmp.lt.s32.totalorder %s238, 1
        %s241 = scalar_select %p240, %s238, 1
        %p242 = scmp.lt.s32.totalorder %s239, 5
        %s243 = scalar_select %p242, %s239, 5
        %s244 = smul.addr %s241, 6
        %s245 = sadd.s32 %s243, %s244
        %s246 = smul.addr %s245, 4
        %s247 = scalar_lea.vmem %s2, %s246
        %s248 = sadd.s32 %s17, %s20
        %s249 = sadd.s32 %s18, 4
      $region28: #{closed_call.22} parent=15 // pred_fallthru
        _
      // Predicated region
      $region29: #{closed_call.22} parent=15 // pred_check
        %p250 = pneg %p152
      $region30: #{closed_call.22} parent=15 // pred_check_branch
        %252 = sbr.rel (%p250) target = $region32
      $region31: #{closed_call.22} parent=15 // pred_region
        %p253 = scmp.lt.s32.totalorder %s17, 1
        %s254 = scalar_select %p253, %s17, 1
        %p255 = scmp.lt.s32.totalorder %s20, 0
        %s256 = scalar_select %p255, %s20, 0
        %s257 = sadd.s32 %s256, %s254
        %s258 = scalar_lea.vmem %s3, %s257
      $region32: #{closed_call.22} parent=15 // pred_fallthru
        _
    $region16: #{closed_call.22} parent=5 // pred_fallthru
      _
    %p259 = scmp.le.s32.totalorder 1, %s10
    %p260 = scmp.lt.s32.totalorder %s10, 5
    %p261 = pnand %p259, %p260
    %p262 = pneg %p261
    // Predicated region
    $region33: #{closed_call.22} parent=5 // pred_check
      _
    $region34: #{closed_call.22} parent=5 // pred_check_branch
      %264 = sbr.rel (%p261) target = $region36
    $region35: #{closed_call.22} parent=5 // pred_region
      %s265 = ssub.s32 %s10, 1
      %s266 = sadd.s32 %s21, %s23
      %p267 = scmp.lt.s32.totalorder %s266, 1
      %s268 = scalar_select %p267, %s266, 1
      %p269 = scmp.lt.s32.totalorder %s22, 5
      %s270 = scalar_select %p269, %s22, 5
      %s271 = smul.addr %s268, 6
      %s272 = sadd.s32 %s270, %s271
      %s273 = smul.addr %s272, 4
      %s274 = scalar_lea.vmem %s0, %s273
      %p275 = pneg %p66
      %p276 = pneg %p63
      %s277 = sadd.s32 %s21, %s24
      %s278 = sadd.s32 %s22, 2
      %p279 = scmp.lt.s32.totalorder %s277, 1
      %s280 = scalar_select %p279, %s277, 1
      %p281 = scmp.lt.s32.totalorder %s278, 5
      %s282 = scalar_select %p281, %s278, 5
      %s283 = smul.addr %s280, 6
      %s284 = sadd.s32 %s282, %s283
      %s285 = smul.addr %s284, 4
      %s286 = scalar_lea.vmem %s1, %s285
      %p287 = pneg %p98
      %p288 = pneg %p95
      %s289 = sadd.s32 %s21, %s24
      %s290 = sadd.s32 %s22, 4
      %p291 = scmp.lt.s32.totalorder %s289, 1
      %s292 = scalar_select %p291, %s289, 1
      %p293 = scmp.lt.s32.totalorder %s290, 5
      %s294 = scalar_select %p293, %s290, 5
      %s295 = smul.addr %s292, 6
      %s296 = sadd.s32 %s294, %s295
      %s297 = smul.addr %s296, 4
      %s298 = scalar_lea.vmem %s2, %s297
      %p299 = pneg %p130
      %p300 = pneg %p127
      %p301 = scmp.lt.s32.totalorder %s21, 1
      %s302 = scalar_select %p301, %s21, 1
      %p303 = scmp.lt.s32.totalorder %s24, 0
      %s304 = scalar_select %p303, %s24, 0
      %s305 = sadd.s32 %s304, %s302
      %s306 = scalar_lea.vmem %s3, %s305
      %p307 = pneg %p158
      %p308 = pneg %p155
      %p309 = pneg %p188
      %p310 = pneg %p185
      %s311 = sadd.s32 %s21, %s23
      %p312 = scmp.lt.s32.totalorder %s311, 1
      %s313 = scalar_select %p312, %s311, 1
      %p314 = scmp.lt.s32.totalorder %s22, 1
      %s315 = scalar_select %p314, %s22, 1
      %s316 = smul.addr %s313, 2
      %s317 = sadd.s32 %s315, %s316
      %s318 = smul.addr %s317, 4
      %s319 = scalar_lea.vmem %s4, %s318
      %s320 = sadd.s32 %s21, %s23
      %p321 = scmp.lt.s32.totalorder %s320, 1
      %s322 = scalar_select %p321, %s320, 1
      %p323 = scmp.lt.s32.totalorder %s22, 5
      %s324 = scalar_select %p323, %s22, 5
      %s325 = smul.addr %s322, 6
      %s326 = sadd.s32 %s324, %s325
      %s327 = smul.addr %s326, 4
      %s328 = scalar_lea.vmem %s0, %s327
      %s329 = sadd.s32 %s21, %s23
      %s330 = sadd.s32 %s21, %s24
      %s331 = sadd.s32 %s22, 2
      %p332 = scmp.lt.s32.totalorder %s330, 1
      %s333 = scalar_select %p332, %s330, 1
      %p334 = scmp.lt.s32.totalorder %s331, 5
      %s335 = scalar_select %p334, %s331, 5
      %s336 = smul.addr %s333, 6
      %s337 = sadd.s32 %s335, %s336
      %s338 = smul.addr %s337, 4
      %s339 = scalar_lea.vmem %s1, %s338
      %s340 = sadd.s32 %s21, %s24
      %s341 = sadd.s32 %s22, 2
      %s342 = sadd.s32 %s21, %s24
      %s343 = sadd.s32 %s22, 4
      %p344 = scmp.lt.s32.totalorder %s342, 1
      %s345 = scalar_select %p344, %s342, 1
      %p346 = scmp.lt.s32.totalorder %s343, 5
      %s347 = scalar_select %p346, %s343, 5
      %s348 = smul.addr %s345, 6
      %s349 = sadd.s32 %s347, %s348
      %s350 = smul.addr %s349, 4
      %s351 = scalar_lea.vmem %s2, %s350
      %s352 = sadd.s32 %s21, %s24
      %s353 = sadd.s32 %s22, 4
      %p354 = scmp.lt.s32.totalorder %s21, 1
      %s355 = scalar_select %p354, %s21, 1
      %p356 = scmp.lt.s32.totalorder %s24, 0
      %s357 = scalar_select %p356, %s24, 0
      %s358 = sadd.s32 %s357, %s355
      %s359 = scalar_lea.vmem %s3, %s358
      %s360 = sadd.s32 %s21, %s23
      %p361 = scmp.lt.s32.totalorder %s360, 1
      %s362 = scalar_select %p361, %s360, 1
      %p363 = scmp.lt.s32.totalorder %s22, 1
      %s364 = scalar_select %p363, %s22, 1
      %s365 = smul.addr %s362, 2
      %s366 = sadd.s32 %s364, %s365
      %s367 = smul.addr %s366, 4
      %s368 = scalar_lea.vmem %s4, %s367
      %s369 = sadd.s32 %s21, %s23
      %p371 = scmp.eq.s32.totalorder %s24, 0
      // Predicated region
      $region37: #{closed_call.22} parent=35 // pred_check
        %p372 = pneg %p371
      $region38: #{closed_call.22} parent=35 // pred_check_branch
        %374 = sbr.rel (%p372) target = $region40
      $region39: #{closed_call.22} parent=35 // pred_region
        %vm375 = vcmask 7168
        %376 = vst.msk [vmem:[#allocation2] sm:$0xff] %vm375, -inf
        %377 = vst.msk [vmem:[#allocation3] sm:$0xff] %vm375, 0.0
        %378 = vst [vmem:[#allocation4] sm:$0xff] 0.0
      $region40: #{closed_call.22} parent=35 // pred_fallthru
        _
      %v379 = vld [vmem:[%s328] sm:$0xf]
      %v380 = vld [vmem:[%s339] sm:$0xf]
      %v381 = vld [vmem:[%s359] sm:$0x1]
      %v383 = vperm.slane %v381, 0
      %385 = vmatpush.bf16.xpose.msra.mxu0 0
      %386 = vmatpush.bf16.xpose.msra.mxu0 0
      %387 = vmatpush.bf16.xpose.msra.mxu0 0
      %388 = vmatpush.bf16.xpose.msra.mxu0 0
      %389 = vmatpush.bf16.xpose.msra.mxu0 0
      %390 = vmatpush.bf16.xpose.msra.mxu0 0
      %391 = vmatpush.bf16.xpose.msra.mxu0 0
      %392 = vmatpush.bf16.xpose.msra.mxu0 %v380
      %393 = vmatmul.bf16.gmra.mxu0 %v379
      %v394 = vpop.f32.mrf.mxu0
      %v395 = vadd.f32 %v383, %v394
      %v396 = vpop.f32.mrf.mxu0
      %397 = vdwg.mxu0
      %v398 = vld [vmem:[#allocation2] sm:$0xff]
      %vm399 = vcmask 64512
      %v400 = vsel %vm399, %v395, -inf
      %401 = vmax.xlane.f32.xlu0 %v400
      %v402 = vpop.xlane.xlu0 %401
      %v403 = vmax.f32 %v398, %v402
      %v404 = vsub.f32 %v398, %v403
      %v405 = vmul.f32 %v404, 1.442695
      %v406 = vpow.pop %v405
      %408 = vset.pattern.permute.xlu0 0
      %409 = vperm.xlu0 %408, %v403
      %v410 = vpop.permute.xlu0 %409
      %v412 = vsub.f32 %v395, %v410
      %v413 = vpack.c.bf16 %v412, %v412
      %v414 = vunpack.c.l.bf16 %v413
      %v415 = vmul.f32 %v414, 1.442695
      %v416 = vpow.pop %v415
      %v417 = vpack.c.bf16 %v416, %v416
      %v418 = vld [vmem:[#allocation3] sm:$0xff]
      %v419 = vmul.f32 %v406, %v418
      %v420 = vunpack.c.l.bf16 %v417
      %v421 = vsel %vm399, %v420, 0.0
      %422 = vadd.xlane.f32.xlu0 %v421
      %v423 = vpop.xlane.xlu0 %422
      %v424 = vadd.f32 %v419, %v423
      %vm425 = vcmask 7168
      %426 = vst.msk [vmem:[#allocation3] sm:$0xff] %vm425, %v424
      %v427 = vld [vmem:[#allocation4] sm:$0xff]
      %429 = vset.pattern.permute.xlu0 0
      %430 = vperm.xlu0 %429, %v406
      %v431 = vpop.permute.xlu0 %430
      %v433 = vmul.f32 %v431, %v427
      %v434 = vld [vmem:[%s351] sm:$0xf]
      %v436 = vsel %vm399, %v417, 0
      %vm438 = vcmask 1043456
      %v440 = vsel %vm438, %v434, 0
      %442 = vmatpush.bf16.msra.mxu0 0
      %443 = vmatpush.bf16.msra.mxu0 0
      %444 = vmatpush.bf16.msra.mxu0 0
      %445 = vmatpush.bf16.msra.mxu0 0
      %446 = vmatpush.bf16.msra.mxu0 0
      %447 = vmatpush.bf16.msra.mxu0 0
      %448 = vmatpush.bf16.msra.mxu0 0
      %449 = vmatpush.bf16.msra.mxu0 %v440
      %450 = vmatmul.bf16.gmra.mxu0 %v436
      %v451 = vpop.f32.mrf.mxu0
      %v452 = vadd.f32 0.0, %v451
      %v453 = vpop.f32.mrf.mxu0
      %454 = vdwg.mxu0
      %v455 = vadd.f32 %v433, %v452
      %456 = vst [vmem:[#allocation4] sm:$0xff] %v455
      %457 = vst.msk [vmem:[#allocation2] sm:$0xff] %vm425, %v403
      // Predicated region
      $region41: #{closed_call.22} parent=35 // pred_check
        %p458 = pneg %p371
      $region42: #{closed_call.22} parent=35 // pred_check_branch
        %460 = sbr.rel (%p458) target = $region44
      $region43: #{closed_call.22} parent=35 // pred_region
        %v461 = vld [vmem:[#allocation4] sm:$0xff]
        %v462 = vld [vmem:[#allocation3] sm:$0xff]
        %v463 = vrcp.pop %v462
        %465 = vset.pattern.permute.xlu0 0
        %466 = vperm.xlu0 %465, %v463
        %v467 = vpop.permute.xlu0 %466
        %v469 = vmul.f32 %v461, %v467
        %v470 = vpack.c.bf16 %v469, %v469
        %471 = vst [vmem:[%s368] sm:$0xf] %v470
      $region44: #{closed_call.22} parent=35 // pred_fallthru
        _
      %s472 = sadd.s32 %s21, %s23
      %p473 = scmp.lt.s32.totalorder %s472, 1
      %s474 = scalar_select %p473, %s472, 1
      %p475 = scmp.lt.s32.totalorder %s22, 1
      %s476 = scalar_select %p475, %s22, 1
      %s477 = smul.addr %s474, 2
      %s478 = sadd.s32 %s476, %s477
      %s479 = smul.addr %s478, 4
      %s480 = scalar_lea.vmem %s4, %s479
      // Predicated region
      $region45: #{closed_call.22} parent=35 // pred_check
        %p481 = pneg %p185
      $region46: #{closed_call.22} parent=35 // pred_check_branch
        %483 = sbr.rel (%p481) target = $region48
      $region47: #{closed_call.22} parent=35 // pred_region
        %s484 = sadd.s32 %s21, %s23
      $region48: #{closed_call.22} parent=35 // pred_fallthru
        _
    $region36: #{closed_call.22} parent=5 // pred_fallthru
      _
    %p485 = scmp.le.s32.totalorder 2, %s10
    // Predicated region
    $region49: #{closed_call.22} parent=5 // pred_check
      %p486 = pneg %p485
    $region50: #{closed_call.22} parent=5 // pred_check_branch
      %488 = sbr.rel (%p486) target = $region52
    $region51: #{closed_call.22} parent=5 // pred_region
      %s489 = ssub.s32 %s10, 2
      // Predicated region
      $region53: #{closed_call.22} parent=51 // pred_check
        %p490 = pneg %p191
      $region54: #{closed_call.22} parent=51 // pred_check_branch
        %492 = sbr.rel (%p490) target = $region56
      $region55: #{closed_call.22} parent=51 // pred_region
        %s493 = sadd.s32 %s25, %s27
        %p494 = scmp.lt.s32.totalorder %s493, 1
        %s495 = scalar_select %p494, %s493, 1
        %p496 = scmp.lt.s32.totalorder %s26, 1
        %s497 = scalar_select %p496, %s26, 1
        %s498 = smul.addr %s495, 2
        %s499 = sadd.s32 %s497, %s498
        %s500 = smul.addr %s499, 4
        %s501 = scalar_lea.vmem %s4, %s500
      $region56: #{closed_call.22} parent=51 // pred_fallthru
        _
    $region52: #{closed_call.22} parent=5 // pred_fallthru
      _
  $region6: #{closed_call.22} parent=0 // loop_footer
    %s14 = sadd.s32 1, %s10
  $region7: #{closed_call.22} parent=0 // loop_footer_branch
    %9 = sbr.rel target = $region3
  $region8: #{closed_call.22} parent=0 // loop_exit
    _

// kernel: closed_call.21
$region0: #{closed_call.21}
  #allocation0 [shape = 'u32[]', space=smem, size = 0x4, offset = 0x4, fixed_abs, tag = 'smem constant byte address 0x4 - core index']
  #allocation1 [shape = 'u32[72,128]{1,0:T(1,128)}', space=vmem, size = 0x9000, scoped, tag = 'internal scratch']
  #allocation2 [shape = 'f32[16,768]{1,0:T(8,128)}', space=vmem, size = 0xc000, scoped, tag = 'scratch operand']
  %s0 = inlined_call_operand.vmem [shape: bf16[16,256], index: 0, kind: input, shape index: {}]
  %s1 = inlined_call_operand.vmem [shape: bf16[256,768], index: 1, kind: input, shape index: {}]
  %s2 = inlined_call_operand.vmem [shape: f32[1,768], index: 2, kind: input, shape index: {}]
  %s3 = inlined_call_operand.vmem [shape: bf16[16,768], index: 3, kind: output, shape index: {}]
  %s4 = sld [smem:[#allocation0]]
  $region30: #{closed_call.21} parent=0
    _
  %s6 = ssub.s32 1, %s4
  %s7 = scalar_select 0, %s6, %s4
  // Predicated region
  $region2: #{closed_call.21} parent=0 // pred_check
    _
  $region3: #{closed_call.21} parent=0 // pred_check_branch
    %9 = sbr.rel (0) target = $region5
  $region4: #{closed_call.21} parent=0 // pred_region
    _
  $region5: #{closed_call.21} parent=0 // pred_fallthru
    _
  // Predicated region
  $region6: #{closed_call.21} parent=0 // pred_check
    _
  $region7: #{closed_call.21} parent=0 // pred_check_branch
    %11 = sbr.rel (0) target = $region9
  $region8: #{closed_call.21} parent=0 // pred_region
    _
  $region9: #{closed_call.21} parent=0 // pred_fallthru
    _
  // Predicated region
  $region10: #{closed_call.21} parent=0 // pred_check
    _
  $region11: #{closed_call.21} parent=0 // pred_check_branch
    %13 = sbr.rel (0) target = $region13
  $region12: #{closed_call.21} parent=0 // pred_region
    _
  $region13: #{closed_call.21} parent=0 // pred_fallthru
    _
  %p14 = scmp.eq.s32.totalorder 0, 0
  // Predicated region
  $region14: #{closed_call.21} parent=0 // pred_check
    %p15 = pneg %p14
  $region15: #{closed_call.21} parent=0 // pred_check_branch
    %17 = sbr.rel (%p15) target = $region17
  $region16: #{closed_call.21} parent=0 // pred_region
    %18 = vst [vmem:[#allocation2] sm:$0xff] 0.0
    %19 = vst [vmem:[#allocation2 + $0x8] sm:$0xff] 0.0
    %20 = vst [vmem:[#allocation2 + $0x10] sm:$0xff] 0.0
    %21 = vst [vmem:[#allocation2 + $0x18] sm:$0xff] 0.0
    %22 = vst [vmem:[#allocation2 + $0x20] sm:$0xff] 0.0
    %23 = vst [vmem:[#allocation2 + $0x28] sm:$0xff] 0.0
    %24 = vst [vmem:[#allocation2 + $0x30] sm:$0xff] 0.0
    %25 = vst [vmem:[#allocation2 + $0x38] sm:$0xff] 0.0
    %26 = vst [vmem:[#allocation2 + $0x40] sm:$0xff] 0.0
    %27 = vst [vmem:[#allocation2 + $0x48] sm:$0xff] 0.0
    %28 = vst [vmem:[#allocation2 + $0x50] sm:$0xff] 0.0
    %29 = vst [vmem:[#allocation2 + $0x58] sm:$0xff] 0.0
  $region17: #{closed_call.21} parent=0 // pred_fallthru
    _
  %v30 = vld [vmem:[#allocation2] sm:$0xff]
  %v31 = vld [vmem:[#allocation2 + $0x8] sm:$0xff]
  %v32 = vld [vmem:[#allocation2 + $0x10] sm:$0xff]
  %v33 = vld [vmem:[#allocation2 + $0x18] sm:$0xff]
  %v34 = vld [vmem:[#allocation2 + $0x20] sm:$0xff]
  %v35 = vld [vmem:[#allocation2 + $0x28] sm:$0xff]
  %v36 = vld [vmem:[#allocation2 + $0x30] sm:$0xff]
  %v37 = vld [vmem:[#allocation2 + $0x38] sm:$0xff]
  %v38 = vld [vmem:[#allocation2 + $0x40] sm:$0xff]
  %v39 = vld [vmem:[#allocation2 + $0x48] sm:$0xff]
  %v40 = vld [vmem:[#allocation2 + $0x50] sm:$0xff]
  %v41 = vld [vmem:[#allocation2 + $0x58] sm:$0xff]
  %v42 = vld [vmem:[%s0] sm:$0xff]
  %v43 = vld [vmem:[%s0 + $0x8] sm:$0xff]
  %v44 = vld [vmem:[%s1] sm:$0xff]
  %v45 = vld [vmem:[%s1 + $0x8] sm:$0xff]
  %v46 = vld [vmem:[%s1 + $0x10] sm:$0xff]
  %v47 = vld [vmem:[%s1 + $0x18] sm:$0xff]
  %v48 = vld [vmem:[%s1 + $0x20] sm:$0xff]
  %v49 = vld [vmem:[%s1 + $0x28] sm:$0xff]
  %v50 = vld [vmem:[%s1 + $0x30] sm:$0xff]
  %v51 = vld [vmem:[%s1 + $0x38] sm:$0xff]
  %v52 = vld [vmem:[%s1 + $0x40] sm:$0xff]
  %v53 = vld [vmem:[%s1 + $0x48] sm:$0xff]
  %v54 = vld [vmem:[%s1 + $0x50] sm:$0xff]
  %v55 = vld [vmem:[%s1 + $0x58] sm:$0xff]
  %v56 = vld [vmem:[%s1 + $0x60] sm:$0xff]
  %v57 = vld [vmem:[%s1 + $0x68] sm:$0xff]
  %v58 = vld [vmem:[%s1 + $0x70] sm:$0xff]
  %v59 = vld [vmem:[%s1 + $0x78] sm:$0xff]
  %v60 = vld [vmem:[%s1 + $0x80] sm:$0xff]
  %v61 = vld [vmem:[%s1 + $0x88] sm:$0xff]
  %v62 = vld [vmem:[%s1 + $0x90] sm:$0xff]
  %v63 = vld [vmem:[%s1 + $0x98] sm:$0xff]
  %v64 = vld [vmem:[%s1 + $0xa0] sm:$0xff]
  %v65 = vld [vmem:[%s1 + $0xa8] sm:$0xff]
  %v66 = vld [vmem:[%s1 + $0xb0] sm:$0xff]
  %v67 = vld [vmem:[%s1 + $0xb8] sm:$0xff]
  %v68 = vld [vmem:[%s1 + $0xc0] sm:$0xff]
  %v69 = vld [vmem:[%s1 + $0xc8] sm:$0xff]
  %v70 = vld [vmem:[%s1 + $0xd0] sm:$0xff]
  %v71 = vld [vmem:[%s1 + $0xd8] sm:$0xff]
  %v72 = vld [vmem:[%s1 + $0xe0] sm:$0xff]
  %v73 = vld [vmem:[%s1 + $0xe8] sm:$0xff]
  %v74 = vld [vmem:[%s1 + $0xf0] sm:$0xff]
  %v75 = vld [vmem:[%s1 + $0xf8] sm:$0xff]
  %v76 = vld [vmem:[%s1 + $0x100] sm:$0xff]
  %v77 = vld [vmem:[%s1 + $0x108] sm:$0xff]
  %v78 = vld [vmem:[%s1 + $0x110] sm:$0xff]
  %v79 = vld [vmem:[%s1 + $0x118] sm:$0xff]
  %v80 = vld [vmem:[%s1 + $0x120] sm:$0xff]
  %v81 = vld [vmem:[%s1 + $0x128] sm:$0xff]
  %v82 = vld [vmem:[%s1 + $0x130] sm:$0xff]
  %v83 = vld [vmem:[%s1 + $0x138] sm:$0xff]
  %v84 = vld [vmem:[%s1 + $0x140] sm:$0xff]
  %v85 = vld [vmem:[%s1 + $0x148] sm:$0xff]
  %v86 = vld [vmem:[%s1 + $0x150] sm:$0xff]
  %v87 = vld [vmem:[%s1 + $0x158] sm:$0xff]
  %v88 = vld [vmem:[%s1 + $0x160] sm:$0xff]
  %v89 = vld [vmem:[%s1 + $0x168] sm:$0xff]
  %v90 = vld [vmem:[%s1 + $0x170] sm:$0xff]
  %v91 = vld [vmem:[%s1 + $0x178] sm:$0xff]
  %v92 = vld [vmem:[%s1 + $0x180] sm:$0xff]
  %v93 = vld [vmem:[%s1 + $0x188] sm:$0xff]
  %v94 = vld [vmem:[%s1 + $0x190] sm:$0xff]
  %v95 = vld [vmem:[%s1 + $0x198] sm:$0xff]
  %v96 = vld [vmem:[%s1 + $0x1a0] sm:$0xff]
  %v97 = vld [vmem:[%s1 + $0x1a8] sm:$0xff]
  %v98 = vld [vmem:[%s1 + $0x1b0] sm:$0xff]
  %v99 = vld [vmem:[%s1 + $0x1b8] sm:$0xff]
  %v100 = vld [vmem:[%s1 + $0x1c0] sm:$0xff]
  %v101 = vld [vmem:[%s1 + $0x1c8] sm:$0xff]
  %v102 = vld [vmem:[%s1 + $0x1d0] sm:$0xff]
  %v103 = vld [vmem:[%s1 + $0x1d8] sm:$0xff]
  %v104 = vld [vmem:[%s1 + $0x1e0] sm:$0xff]
  %v105 = vld [vmem:[%s1 + $0x1e8] sm:$0xff]
  %v106 = vld [vmem:[%s1 + $0x1f0] sm:$0xff]
  %v107 = vld [vmem:[%s1 + $0x1f8] sm:$0xff]
  %v108 = vld [vmem:[%s1 + $0x200] sm:$0xff]
  %v109 = vld [vmem:[%s1 + $0x208] sm:$0xff]
  %v110 = vld [vmem:[%s1 + $0x210] sm:$0xff]
  %v111 = vld [vmem:[%s1 + $0x218] sm:$0xff]
  %v112 = vld [vmem:[%s1 + $0x220] sm:$0xff]
  %v113 = vld [vmem:[%s1 + $0x228] sm:$0xff]
  %v114 = vld [vmem:[%s1 + $0x230] sm:$0xff]
  %v115 = vld [vmem:[%s1 + $0x238] sm:$0xff]
  %v116 = vld [vmem:[%s1 + $0x240] sm:$0xff]
  %v117 = vld [vmem:[%s1 + $0x248] sm:$0xff]
  %v118 = vld [vmem:[%s1 + $0x250] sm:$0xff]
  %v119 = vld [vmem:[%s1 + $0x258] sm:$0xff]
  %v120 = vld [vmem:[%s1 + $0x260] sm:$0xff]
  %v121 = vld [vmem:[%s1 + $0x268] sm:$0xff]
  %v122 = vld [vmem:[%s1 + $0x270] sm:$0xff]
  %v123 = vld [vmem:[%s1 + $0x278] sm:$0xff]
  %v124 = vld [vmem:[%s1 + $0x280] sm:$0xff]
  %v125 = vld [vmem:[%s1 + $0x288] sm:$0xff]
  %v126 = vld [vmem:[%s1 + $0x290] sm:$0xff]
  %v127 = vld [vmem:[%s1 + $0x298] sm:$0xff]
  %v128 = vld [vmem:[%s1 + $0x2a0] sm:$0xff]
  %v129 = vld [vmem:[%s1 + $0x2a8] sm:$0xff]
  %v130 = vld [vmem:[%s1 + $0x2b0] sm:$0xff]
  %v131 = vld [vmem:[%s1 + $0x2b8] sm:$0xff]
  %v132 = vld [vmem:[%s1 + $0x2c0] sm:$0xff]
  %v133 = vld [vmem:[%s1 + $0x2c8] sm:$0xff]
  %v134 = vld [vmem:[%s1 + $0x2d0] sm:$0xff]
  %v135 = vld [vmem:[%s1 + $0x2d8] sm:$0xff]
  %v136 = vld [vmem:[%s1 + $0x2e0] sm:$0xff]
  %v137 = vld [vmem:[%s1 + $0x2e8] sm:$0xff]
  %v138 = vld [vmem:[%s1 + $0x2f0] sm:$0xff]
  %v139 = vld [vmem:[%s1 + $0x2f8] sm:$0xff]
  %v142 = vunpack.c.l.b16 %v42
  %v143 = vunpack.c.h.b16 %v42
  %v144 = vunpack.c.l.b16 %v43
  %v145 = vunpack.c.h.b16 %v43
  %v146 = vpack.c.b16 %v144, %v142
  %v147 = vpack.c.b16 %v145, %v143
  %v246 = vunpack.c.l.b16 %v44
  %v247 = vunpack.c.h.b16 %v44
  %v248 = vunpack.c.l.b16 %v45
  %v249 = vunpack.c.h.b16 %v45
  %v250 = vunpack.c.l.b16 %v46
  %v251 = vunpack.c.h.b16 %v46
  %v252 = vunpack.c.l.b16 %v47
  %v253 = vunpack.c.h.b16 %v47
  %v254 = vunpack.c.l.b16 %v48
  %v255 = vunpack.c.h.b16 %v48
  %v256 = vunpack.c.l.b16 %v49
  %v257 = vunpack.c.h.b16 %v49
  %v258 = vunpack.c.l.b16 %v50
  %v259 = vunpack.c.h.b16 %v50
  %v260 = vunpack.c.l.b16 %v51
  %v261 = vunpack.c.h.b16 %v51
  %v262 = vunpack.c.l.b16 %v52
  %v263 = vunpack.c.h.b16 %v52
  %v264 = vunpack.c.l.b16 %v53
  %v265 = vunpack.c.h.b16 %v53
  %v266 = vunpack.c.l.b16 %v54
  %v267 = vunpack.c.h.b16 %v54
  %v268 = vunpack.c.l.b16 %v55
  %v269 = vunpack.c.h.b16 %v55
  %v270 = vunpack.c.l.b16 %v56
  %v271 = vunpack.c.h.b16 %v56
  %v272 = vunpack.c.l.b16 %v57
  %v273 = vunpack.c.h.b16 %v57
  %v274 = vunpack.c.l.b16 %v58
  %v275 = vunpack.c.h.b16 %v58
  %v276 = vunpack.c.l.b16 %v59
  %v277 = vunpack.c.h.b16 %v59
  %v278 = vunpack.c.l.b16 %v60
  %v279 = vunpack.c.h.b16 %v60
  %v280 = vunpack.c.l.b16 %v61
  %v281 = vunpack.c.h.b16 %v61
  %v282 = vunpack.c.l.b16 %v62
  %v283 = vunpack.c.h.b16 %v62
  %v284 = vunpack.c.l.b16 %v63
  %v285 = vunpack.c.h.b16 %v63
  %v286 = vunpack.c.l.b16 %v64
  %v287 = vunpack.c.h.b16 %v64
  %v288 = vunpack.c.l.b16 %v65
  %v289 = vunpack.c.h.b16 %v65
  %v290 = vunpack.c.l.b16 %v66
  %v291 = vunpack.c.h.b16 %v66
  %v292 = vunpack.c.l.b16 %v67
  %v293 = vunpack.c.h.b16 %v67
  %v294 = vunpack.c.l.b16 %v68
  %v295 = vunpack.c.h.b16 %v68
  %v296 = vunpack.c.l.b16 %v69
  %v297 = vunpack.c.h.b16 %v69
  %v298 = vunpack.c.l.b16 %v70
  %v299 = vunpack.c.h.b16 %v70
  %v300 = vunpack.c.l.b16 %v71
  %v301 = vunpack.c.h.b16 %v71
  %v302 = vunpack.c.l.b16 %v72
  %v303 = vunpack.c.h.b16 %v72
  %v304 = vunpack.c.l.b16 %v73
  %v305 = vunpack.c.h.b16 %v73
  %v306 = vunpack.c.l.b16 %v74
  %v307 = vunpack.c.h.b16 %v74
  %v308 = vunpack.c.l.b16 %v75
  %v309 = vunpack.c.h.b16 %v75
  %v310 = vunpack.c.l.b16 %v76
  %v311 = vunpack.c.h.b16 %v76
  %v312 = vunpack.c.l.b16 %v77
  %v313 = vunpack.c.h.b16 %v77
  %v314 = vunpack.c.l.b16 %v78
  %v315 = vunpack.c.h.b16 %v78
  %v316 = vunpack.c.l.b16 %v79
  %v317 = vunpack.c.h.b16 %v79
  %v318 = vunpack.c.l.b16 %v80
  %v319 = vunpack.c.h.b16 %v80
  %v320 = vunpack.c.l.b16 %v81
  %v321 = vunpack.c.h.b16 %v81
  %v322 = vunpack.c.l.b16 %v82
  %v323 = vunpack.c.h.b16 %v82
  %v324 = vunpack.c.l.b16 %v83
  %v325 = vunpack.c.h.b16 %v83
  %v326 = vunpack.c.l.b16 %v84
  %v327 = vunpack.c.h.b16 %v84
  %v328 = vunpack.c.l.b16 %v85
  %v329 = vunpack.c.h.b16 %v85
  %v330 = vunpack.c.l.b16 %v86
  %v331 = vunpack.c.h.b16 %v86
  %v332 = vunpack.c.l.b16 %v87
  %v333 = vunpack.c.h.b16 %v87
  %v334 = vunpack.c.l.b16 %v88
  %v335 = vunpack.c.h.b16 %v88
  %v336 = vunpack.c.l.b16 %v89
  %v337 = vunpack.c.h.b16 %v89
  %v338 = vunpack.c.l.b16 %v90
  %v339 = vunpack.c.h.b16 %v90
  %v340 = vunpack.c.l.b16 %v91
  %v341 = vunpack.c.h.b16 %v91
  %v342 = vunpack.c.l.b16 %v92
  %v343 = vunpack.c.h.b16 %v92
  %v344 = vunpack.c.l.b16 %v93
  %v345 = vunpack.c.h.b16 %v93
  %v346 = vunpack.c.l.b16 %v94
  %v347 = vunpack.c.h.b16 %v94
  %v348 = vunpack.c.l.b16 %v95
  %v349 = vunpack.c.h.b16 %v95
  %v350 = vunpack.c.l.b16 %v96
  %v351 = vunpack.c.h.b16 %v96
  %v352 = vunpack.c.l.b16 %v97
  %v353 = vunpack.c.h.b16 %v97
  %v354 = vunpack.c.l.b16 %v98
  %v355 = vunpack.c.h.b16 %v98
  %v356 = vunpack.c.l.b16 %v99
  %v357 = vunpack.c.h.b16 %v99
  %v358 = vunpack.c.l.b16 %v100
  %v359 = vunpack.c.h.b16 %v100
  %v360 = vunpack.c.l.b16 %v101
  %v361 = vunpack.c.h.b16 %v101
  %v362 = vunpack.c.l.b16 %v102
  %v363 = vunpack.c.h.b16 %v102
  %v364 = vunpack.c.l.b16 %v103
  %v365 = vunpack.c.h.b16 %v103
  %v366 = vunpack.c.l.b16 %v104
  %v367 = vunpack.c.h.b16 %v104
  %v368 = vunpack.c.l.b16 %v105
  %v369 = vunpack.c.h.b16 %v105
  %v370 = vunpack.c.l.b16 %v106
  %v371 = vunpack.c.h.b16 %v106
  %v372 = vunpack.c.l.b16 %v107
  %v373 = vunpack.c.h.b16 %v107
  %v374 = vunpack.c.l.b16 %v108
  %v375 = vunpack.c.h.b16 %v108
  %v376 = vunpack.c.l.b16 %v109
  %v377 = vunpack.c.h.b16 %v109
  %v378 = vunpack.c.l.b16 %v110
  %v379 = vunpack.c.h.b16 %v110
  %v380 = vunpack.c.l.b16 %v111
  %v381 = vunpack.c.h.b16 %v111
  %v382 = vunpack.c.l.b16 %v112
  %v383 = vunpack.c.h.b16 %v112
  %v384 = vunpack.c.l.b16 %v113
  %v385 = vunpack.c.h.b16 %v113
  %v386 = vunpack.c.l.b16 %v114
  %v387 = vunpack.c.h.b16 %v114
  %v388 = vunpack.c.l.b16 %v115
  %v389 = vunpack.c.h.b16 %v115
  %v390 = vunpack.c.l.b16 %v116
  %v391 = vunpack.c.h.b16 %v116
  %v392 = vunpack.c.l.b16 %v117
  %v393 = vunpack.c.h.b16 %v117
  %v394 = vunpack.c.l.b16 %v118
  %v395 = vunpack.c.h.b16 %v118
  %v396 = vunpack.c.l.b16 %v119
  %v397 = vunpack.c.h.b16 %v119
  %v398 = vunpack.c.l.b16 %v120
  %v399 = vunpack.c.h.b16 %v120
  %v400 = vunpack.c.l.b16 %v121
  %v401 = vunpack.c.h.b16 %v121
  %v402 = vunpack.c.l.b16 %v122
  %v403 = vunpack.c.h.b16 %v122
  %v404 = vunpack.c.l.b16 %v123
  %v405 = vunpack.c.h.b16 %v123
  %v406 = vunpack.c.l.b16 %v124
  %v407 = vunpack.c.h.b16 %v124
  %v408 = vunpack.c.l.b16 %v125
  %v409 = vunpack.c.h.b16 %v125
  %v410 = vunpack.c.l.b16 %v126
  %v411 = vunpack.c.h.b16 %v126
  %v412 = vunpack.c.l.b16 %v127
  %v413 = vunpack.c.h.b16 %v127
  %v414 = vunpack.c.l.b16 %v128
  %v415 = vunpack.c.h.b16 %v128
  %v416 = vunpack.c.l.b16 %v129
  %v417 = vunpack.c.h.b16 %v129
  %v418 = vunpack.c.l.b16 %v130
  %v419 = vunpack.c.h.b16 %v130
  %v420 = vunpack.c.l.b16 %v131
  %v421 = vunpack.c.h.b16 %v131
  %v422 = vunpack.c.l.b16 %v132
  %v423 = vunpack.c.h.b16 %v132
  %v424 = vunpack.c.l.b16 %v133
  %v425 = vunpack.c.h.b16 %v133
  %v426 = vunpack.c.l.b16 %v134
  %v427 = vunpack.c.h.b16 %v134
  %v428 = vunpack.c.l.b16 %v135
  %v429 = vunpack.c.h.b16 %v135
  %v430 = vunpack.c.l.b16 %v136
  %v431 = vunpack.c.h.b16 %v136
  %v432 = vunpack.c.l.b16 %v137
  %v433 = vunpack.c.h.b16 %v137
  %v434 = vunpack.c.l.b16 %v138
  %v435 = vunpack.c.h.b16 %v138
  %v436 = vunpack.c.l.b16 %v139
  %v437 = vunpack.c.h.b16 %v139
  %v438 = vpack.c.b16 %v252, %v246
  %v439 = vpack.c.b16 %v253, %v247
  %v440 = vpack.c.b16 %v254, %v248
  %v441 = vpack.c.b16 %v255, %v249
  %v442 = vpack.c.b16 %v256, %v250
  %v443 = vpack.c.b16 %v257, %v251
  %v444 = vpack.c.b16 %v264, %v258
  %v445 = vpack.c.b16 %v265, %v259
  %v446 = vpack.c.b16 %v266, %v260
  %v447 = vpack.c.b16 %v267, %v261
  %v448 = vpack.c.b16 %v268, %v262
  %v449 = vpack.c.b16 %v269, %v263
  %v450 = vpack.c.b16 %v276, %v270
  %v451 = vpack.c.b16 %v277, %v271
  %v452 = vpack.c.b16 %v278, %v272
  %v453 = vpack.c.b16 %v279, %v273
  %v454 = vpack.c.b16 %v280, %v274
  %v455 = vpack.c.b16 %v281, %v275
  %v456 = vpack.c.b16 %v288, %v282
  %v457 = vpack.c.b16 %v289, %v283
  %v458 = vpack.c.b16 %v290, %v284
  %v459 = vpack.c.b16 %v291, %v285
  %v460 = vpack.c.b16 %v292, %v286
  %v461 = vpack.c.b16 %v293, %v287
  %v462 = vpack.c.b16 %v300, %v294
  %v463 = vpack.c.b16 %v301, %v295
  %v464 = vpack.c.b16 %v302, %v296
  %v465 = vpack.c.b16 %v303, %v297
  %v466 = vpack.c.b16 %v304, %v298
  %v467 = vpack.c.b16 %v305, %v299
  %v468 = vpack.c.b16 %v312, %v306
  %v469 = vpack.c.b16 %v313, %v307
  %v470 = vpack.c.b16 %v314, %v308
  %v471 = vpack.c.b16 %v315, %v309
  %v472 = vpack.c.b16 %v316, %v310
  %v473 = vpack.c.b16 %v317, %v311
  %v474 = vpack.c.b16 %v324, %v318
  %v475 = vpack.c.b16 %v325, %v319
  %v476 = vpack.c.b16 %v326, %v320
  %v477 = vpack.c.b16 %v327, %v321
  %v478 = vpack.c.b16 %v328, %v322
  %v479 = vpack.c.b16 %v329, %v323
  %v480 = vpack.c.b16 %v336, %v330
  %v481 = vpack.c.b16 %v337, %v331
  %v482 = vpack.c.b16 %v338, %v332
  %v483 = vpack.c.b16 %v339, %v333
  %v484 = vpack.c.b16 %v340, %v334
  %v485 = vpack.c.b16 %v341, %v335
  %v486 = vpack.c.b16 %v348, %v342
  %v487 = vpack.c.b16 %v349, %v343
  %v488 = vpack.c.b16 %v350, %v344
  %v489 = vpack.c.b16 %v351, %v345
  %v490 = vpack.c.b16 %v352, %v346
  %v491 = vpack.c.b16 %v353, %v347
  %v492 = vpack.c.b16 %v360, %v354
  %v493 = vpack.c.b16 %v361, %v355
  %v494 = vpack.c.b16 %v362, %v356
  %v495 = vpack.c.b16 %v363, %v357
  %v496 = vpack.c.b16 %v364, %v358
  %v497 = vpack.c.b16 %v365, %v359
  %v498 = vpack.c.b16 %v372, %v366
  %v499 = vpack.c.b16 %v373, %v367
  %v500 = vpack.c.b16 %v374, %v368
  %v501 = vpack.c.b16 %v375, %v369
  %v502 = vpack.c.b16 %v376, %v370
  %v503 = vpack.c.b16 %v377, %v371
  %v504 = vpack.c.b16 %v384, %v378
  %v505 = vpack.c.b16 %v385, %v379
  %v506 = vpack.c.b16 %v386, %v380
  %v507 = vpack.c.b16 %v387, %v381
  %v508 = vpack.c.b16 %v388, %v382
  %v509 = vpack.c.b16 %v389, %v383
  %v510 = vpack.c.b16 %v396, %v390
  %v511 = vpack.c.b16 %v397, %v391
  %v512 = vpack.c.b16 %v398, %v392
  %v513 = vpack.c.b16 %v399, %v393
  %v514 = vpack.c.b16 %v400, %v394
  %v515 = vpack.c.b16 %v401, %v395
  %v516 = vpack.c.b16 %v408, %v402
  %v517 = vpack.c.b16 %v409, %v403
  %v518 = vpack.c.b16 %v410, %v404
  %v519 = vpack.c.b16 %v411, %v405
  %v520 = vpack.c.b16 %v412, %v406
  %v521 = vpack.c.b16 %v413, %v407
  %v522 = vpack.c.b16 %v420, %v414
  %v523 = vpack.c.b16 %v421, %v415
  %v524 = vpack.c.b16 %v422, %v416
  %v525 = vpack.c.b16 %v423, %v417
  %v526 = vpack.c.b16 %v424, %v418
  %v527 = vpack.c.b16 %v425, %v419
  %v528 = vpack.c.b16 %v432, %v426
  %v529 = vpack.c.b16 %v433, %v427
  %v530 = vpack.c.b16 %v434, %v428
  %v531 = vpack.c.b16 %v435, %v429
  %v532 = vpack.c.b16 %v436, %v430
  %v533 = vpack.c.b16 %v437, %v431
  %630 = vmatpush.bf16.msra.mxu0 %v480
  %631 = vmatpush.bf16.msra.mxu0 %v474
  %632 = vmatpush.bf16.msra.mxu0 %v468
  %633 = vmatpush.bf16.msra.mxu0 %v462
  %634 = vmatpush.bf16.msra.mxu0 %v456
  %635 = vmatpush.bf16.msra.mxu0 %v450
  %636 = vmatpush.bf16.msra.mxu0 %v444
  %637 = vmatpush.bf16.msra.mxu0 %v438
  %638 = vmatmul.bf16.gmra.mxu0 %v146
  %v639 = vpop.f32.mrf.mxu0
  %v640 = vadd.f32 0.0, %v639
  %v641 = vpop.f32.mrf.mxu0
  %v642 = vadd.f32 0.0, %v641
  %643 = vdwg.mxu0
  %644 = vmatpush.bf16.msra.mxu0 %v528
  %645 = vmatpush.bf16.msra.mxu0 %v522
  %646 = vmatpush.bf16.msra.mxu0 %v516
  %647 = vmatpush.bf16.msra.mxu0 %v510
  %648 = vmatpush.bf16.msra.mxu0 %v504
  %649 = vmatpush.bf16.msra.mxu0 %v498
  %650 = vmatpush.bf16.msra.mxu0 %v492
  %651 = vmatpush.bf16.msra.mxu0 %v486
  %652 = vmatmul.bf16.gmra.mxu0 %v147
  %v653 = vpop.f32.mrf.mxu0
  %v654 = vadd.f32 %v640, %v653
  %v655 = vpop.f32.mrf.mxu0
  %v656 = vadd.f32 %v642, %v655
  %657 = vdwg.mxu0
  %658 = vmatpush.bf16.msra.mxu0 %v481
  %659 = vmatpush.bf16.msra.mxu0 %v475
  %660 = vmatpush.bf16.msra.mxu0 %v469
  %661 = vmatpush.bf16.msra.mxu0 %v463
  %662 = vmatpush.bf16.msra.mxu0 %v457
  %663 = vmatpush.bf16.msra.mxu0 %v451
  %664 = vmatpush.bf16.msra.mxu0 %v445
  %665 = vmatpush.bf16.msra.mxu0 %v439
  %666 = vmatmul.bf16.gmra.mxu0 %v146
  %v667 = vpop.f32.mrf.mxu0
  %v668 = vadd.f32 0.0, %v667
  %v669 = vpop.f32.mrf.mxu0
  %v670 = vadd.f32 0.0, %v669
  %671 = vdwg.mxu0
  %672 = vmatpush.bf16.msra.mxu0 %v529
  %673 = vmatpush.bf16.msra.mxu0 %v523
  %674 = vmatpush.bf16.msra.mxu0 %v517
  %675 = vmatpush.bf16.msra.mxu0 %v511
  %676 = vmatpush.bf16.msra.mxu0 %v505
  %677 = vmatpush.bf16.msra.mxu0 %v499
  %678 = vmatpush.bf16.msra.mxu0 %v493
  %679 = vmatpush.bf16.msra.mxu0 %v487
  %680 = vmatmul.bf16.gmra.mxu0 %v147
  %v681 = vpop.f32.mrf.mxu0
  %v682 = vadd.f32 %v668, %v681
  %v683 = vpop.f32.mrf.mxu0
  %v684 = vadd.f32 %v670, %v683
  %685 = vdwg.mxu0
  %686 = vmatpush.bf16.msra.mxu0 %v482
  %687 = vmatpush.bf16.msra.mxu0 %v476
  %688 = vmatpush.bf16.msra.mxu0 %v470
  %689 = vmatpush.bf16.msra.mxu0 %v464
  %690 = vmatpush.bf16.msra.mxu0 %v458
  %691 = vmatpush.bf16.msra.mxu0 %v452
  %692 = vmatpush.bf16.msra.mxu0 %v446
  %693 = vmatpush.bf16.msra.mxu0 %v440
  %694 = vmatmul.bf16.gmra.mxu0 %v146
  %v695 = vpop.f32.mrf.mxu0
  %v696 = vadd.f32 0.0, %v695
  %v697 = vpop.f32.mrf.mxu0
  %v698 = vadd.f32 0.0, %v697
  %699 = vdwg.mxu0
  %700 = vmatpush.bf16.msra.mxu0 %v530
  %701 = vmatpush.bf16.msra.mxu0 %v524
  %702 = vmatpush.bf16.msra.mxu0 %v518
  %703 = vmatpush.bf16.msra.mxu0 %v512
  %704 = vmatpush.bf16.msra.mxu0 %v506
  %705 = vmatpush.bf16.msra.mxu0 %v500
  %706 = vmatpush.bf16.msra.mxu0 %v494
  %707 = vmatpush.bf16.msra.mxu0 %v488
  %708 = vmatmul.bf16.gmra.mxu0 %v147
  %v709 = vpop.f32.mrf.mxu0
  %v710 = vadd.f32 %v696, %v709
  %v711 = vpop.f32.mrf.mxu0
  %v712 = vadd.f32 %v698, %v711
  %713 = vdwg.mxu0
  %714 = vmatpush.bf16.msra.mxu0 %v483
  %715 = vmatpush.bf16.msra.mxu0 %v477
  %716 = vmatpush.bf16.msra.mxu0 %v471
  %717 = vmatpush.bf16.msra.mxu0 %v465
  %718 = vmatpush.bf16.msra.mxu0 %v459
  %719 = vmatpush.bf16.msra.mxu0 %v453
  %720 = vmatpush.bf16.msra.mxu0 %v447
  %721 = vmatpush.bf16.msra.mxu0 %v441
  %722 = vmatmul.bf16.gmra.mxu0 %v146
  %v723 = vpop.f32.mrf.mxu0
  %v724 = vadd.f32 0.0, %v723
  %v725 = vpop.f32.mrf.mxu0
  %v726 = vadd.f32 0.0, %v725
  %727 = vdwg.mxu0
  %728 = vmatpush.bf16.msra.mxu0 %v531
  %729 = vmatpush.bf16.msra.mxu0 %v525
  %730 = vmatpush.bf16.msra.mxu0 %v519
  %731 = vmatpush.bf16.msra.mxu0 %v513
  %732 = vmatpush.bf16.msra.mxu0 %v507
  %733 = vmatpush.bf16.msra.mxu0 %v501
  %734 = vmatpush.bf16.msra.mxu0 %v495
  %735 = vmatpush.bf16.msra.mxu0 %v489
  %736 = vmatmul.bf16.gmra.mxu0 %v147
  %v737 = vpop.f32.mrf.mxu0
  %v738 = vadd.f32 %v724, %v737
  %v739 = vpop.f32.mrf.mxu0
  %v740 = vadd.f32 %v726, %v739
  %741 = vdwg.mxu0
  %742 = vmatpush.bf16.msra.mxu0 %v484
  %743 = vmatpush.bf16.msra.mxu0 %v478
  %744 = vmatpush.bf16.msra.mxu0 %v472
  %745 = vmatpush.bf16.msra.mxu0 %v466
  %746 = vmatpush.bf16.msra.mxu0 %v460
  %747 = vmatpush.bf16.msra.mxu0 %v454
  %748 = vmatpush.bf16.msra.mxu0 %v448
  %749 = vmatpush.bf16.msra.mxu0 %v442
  %750 = vmatmul.bf16.gmra.mxu0 %v146
  %v751 = vpop.f32.mrf.mxu0
  %v752 = vadd.f32 0.0, %v751
  %v753 = vpop.f32.mrf.mxu0
  %v754 = vadd.f32 0.0, %v753
  %755 = vdwg.mxu0
  %756 = vmatpush.bf16.msra.mxu0 %v532
  %757 = vmatpush.bf16.msra.mxu0 %v526
  %758 = vmatpush.bf16.msra.mxu0 %v520
  %759 = vmatpush.bf16.msra.mxu0 %v514
  %760 = vmatpush.bf16.msra.mxu0 %v508
  %761 = vmatpush.bf16.msra.mxu0 %v502
  %762 = vmatpush.bf16.msra.mxu0 %v496
  %763 = vmatpush.bf16.msra.mxu0 %v490
  %764 = vmatmul.bf16.gmra.mxu0 %v147
  %v765 = vpop.f32.mrf.mxu0
  %v766 = vadd.f32 %v752, %v765
  %v767 = vpop.f32.mrf.mxu0
  %v768 = vadd.f32 %v754, %v767
  %769 = vdwg.mxu0
  %770 = vmatpush.bf16.msra.mxu0 %v485
  %771 = vmatpush.bf16.msra.mxu0 %v479
  %772 = vmatpush.bf16.msra.mxu0 %v473
  %773 = vmatpush.bf16.msra.mxu0 %v467
  %774 = vmatpush.bf16.msra.mxu0 %v461
  %775 = vmatpush.bf16.msra.mxu0 %v455
  %776 = vmatpush.bf16.msra.mxu0 %v449
  %777 = vmatpush.bf16.msra.mxu0 %v443
  %778 = vmatmul.bf16.gmra.mxu0 %v146
  %v779 = vpop.f32.mrf.mxu0
  %v780 = vadd.f32 0.0, %v779
  %v781 = vpop.f32.mrf.mxu0
  %v782 = vadd.f32 0.0, %v781
  %783 = vdwg.mxu0
  %784 = vmatpush.bf16.msra.mxu0 %v533
  %785 = vmatpush.bf16.msra.mxu0 %v527
  %786 = vmatpush.bf16.msra.mxu0 %v521
  %787 = vmatpush.bf16.msra.mxu0 %v515
  %788 = vmatpush.bf16.msra.mxu0 %v509
  %789 = vmatpush.bf16.msra.mxu0 %v503
  %790 = vmatpush.bf16.msra.mxu0 %v497
  %791 = vmatpush.bf16.msra.mxu0 %v491
  %792 = vmatmul.bf16.gmra.mxu0 %v147
  %v793 = vpop.f32.mrf.mxu0
  %v794 = vadd.f32 %v780, %v793
  %v795 = vpop.f32.mrf.mxu0
  %v796 = vadd.f32 %v782, %v795
  %797 = vdwg.mxu0
  %v798 = vadd.f32 %v30, %v654
  %v799 = vadd.f32 %v31, %v682
  %v800 = vadd.f32 %v32, %v710
  %v801 = vadd.f32 %v33, %v738
  %v802 = vadd.f32 %v34, %v766
  %v803 = vadd.f32 %v35, %v794
  %v804 = vadd.f32 %v36, %v656
  %v805 = vadd.f32 %v37, %v684
  %v806 = vadd.f32 %v38, %v712
  %v807 = vadd.f32 %v39, %v740
  %v808 = vadd.f32 %v40, %v768
  %v809 = vadd.f32 %v41, %v796
  %810 = vst [vmem:[#allocation2] sm:$0xff] %v798
  %811 = vst [vmem:[#allocation2 + $0x8] sm:$0xff] %v799
  %812 = vst [vmem:[#allocation2 + $0x10] sm:$0xff] %v800
  %813 = vst [vmem:[#allocation2 + $0x18] sm:$0xff] %v801
  %814 = vst [vmem:[#allocation2 + $0x20] sm:$0xff] %v802
  %815 = vst [vmem:[#allocation2 + $0x28] sm:$0xff] %v803
  %816 = vst [vmem:[#allocation2 + $0x30] sm:$0xff] %v804
  %817 = vst [vmem:[#allocation2 + $0x38] sm:$0xff] %v805
  %818 = vst [vmem:[#allocation2 + $0x40] sm:$0xff] %v806
  %819 = vst [vmem:[#allocation2 + $0x48] sm:$0xff] %v807
  %820 = vst [vmem:[#allocation2 + $0x50] sm:$0xff] %v808
  %821 = vst [vmem:[#allocation2 + $0x58] sm:$0xff] %v809
  // Predicated region
  $region18: #{closed_call.21} parent=0 // pred_check
    %p822 = pneg %p14
  $region19: #{closed_call.21} parent=0 // pred_check_branch
    %824 = sbr.rel (%p822) target = $region21
  $region20: #{closed_call.21} parent=0 // pred_region
    %v825 = vld [vmem:[#allocation2] sm:$0xff]
    %v826 = vld [vmem:[#allocation2 + $0x8] sm:$0xff]
    %v827 = vld [vmem:[#allocation2 + $0x10] sm:$0xff]
    %v828 = vld [vmem:[#allocation2 + $0x18] sm:$0xff]
    %v829 = vld [vmem:[#allocation2 + $0x20] sm:$0xff]
    %v830 = vld [vmem:[#allocation2 + $0x28] sm:$0xff]
    %v831 = vld [vmem:[#allocation2 + $0x30] sm:$0xff]
    %v832 = vld [vmem:[#allocation2 + $0x38] sm:$0xff]
    %v833 = vld [vmem:[#allocation2 + $0x40] sm:$0xff]
    %v834 = vld [vmem:[#allocation2 + $0x48] sm:$0xff]
    %v835 = vld [vmem:[#allocation2 + $0x50] sm:$0xff]
    %v836 = vld [vmem:[#allocation2 + $0x58] sm:$0xff]
    %v837 = vld [vmem:[%s2] sm:$0x3f]
    %v839 = vperm.slane %v837, 0
    %v840 = vperm.slane %v837, 1
    %v841 = vperm.slane %v837, 2
    %v842 = vperm.slane %v837, 3
    %v843 = vperm.slane %v837, 4
    %v844 = vperm.slane %v837, 5
    %v851 = vadd.f32 %v825, %v839
    %v852 = vadd.f32 %v826, %v840
    %v853 = vadd.f32 %v827, %v841
    %v854 = vadd.f32 %v828, %v842
    %v855 = vadd.f32 %v829, %v843
    %v856 = vadd.f32 %v830, %v844
    %v857 = vadd.f32 %v831, %v839
    %v858 = vadd.f32 %v832, %v840
    %v859 = vadd.f32 %v833, %v841
    %v860 = vadd.f32 %v834, %v842
    %v861 = vadd.f32 %v835, %v843
    %v862 = vadd.f32 %v836, %v844
    %v863 = vpack.c.bf16 %v852, %v851
    %v864 = vpack.c.bf16 %v854, %v853
    %v865 = vpack.c.bf16 %v856, %v855
    %v866 = vpack.c.bf16 %v858, %v857
    %v867 = vpack.c.bf16 %v860, %v859
    %v868 = vpack.c.bf16 %v862, %v861
    %869 = vst [vmem:[%s3] sm:$0xff] %v863
    %870 = vst [vmem:[%s3 + $0x8] sm:$0xff] %v864
    %871 = vst [vmem:[%s3 + $0x10] sm:$0xff] %v865
    %872 = vst [vmem:[%s3 + $0x18] sm:$0xff] %v866
    %873 = vst [vmem:[%s3 + $0x20] sm:$0xff] %v867
    %874 = vst [vmem:[%s3 + $0x28] sm:$0xff] %v868
  $region21: #{closed_call.21} parent=0 // pred_fallthru
    _
  // Predicated region
  $region22: #{closed_call.21} parent=0 // pred_check
    _
  $region23: #{closed_call.21} parent=0 // pred_check_branch
    %876 = sbr.rel (0) target = $region25
  $region24: #{closed_call.21} parent=0 // pred_region
    _
  $region25: #{closed_call.21} parent=0 // pred_fallthru
    _
  // Predicated region
  $region26: #{closed_call.21} parent=0 // pred_check
    _
  $region27: #{closed_call.21} parent=0 // pred_check_branch
    %878 = sbr.rel (0) target = $region29
  $region28: #{closed_call.21} parent=0 // pred_region
    _
  $region29: #{closed_call.21} parent=0 // pred_fallthru
    _

// kernel: closed_call.23
$region0: #{closed_call.23}
  #allocation0 [shape = 'u32[]', space=smem, size = 0x4, offset = 0x4, fixed_abs, tag = 'smem constant byte address 0x4 - core index']
  #allocation1 [shape = 'u32[72,128]{1,0:T(1,128)}', space=vmem, size = 0x9000, scoped, tag = 'internal scratch']
  #allocation2 [shape = 'f32[16,256]{1,0:T(8,128)}', space=vmem, size = 0x4000, scoped, tag = 'scratch operand']
  %s0 = inlined_call_operand.vmem [shape: bf16[16,256], index: 0, kind: input, shape index: {}]
  %s1 = inlined_call_operand.vmem [shape: bf16[256,256], index: 1, kind: input, shape index: {}]
  %s2 = inlined_call_operand.vmem [shape: f32[1,256], index: 2, kind: input, shape index: {}]
  %s3 = inlined_call_operand.vmem [shape: bf16[16,256], index: 3, kind: input, shape index: {}]
  %s4 = inlined_call_operand.vmem [shape: f32[1,256], index: 4, kind: input, shape index: {}]
  %s5 = inlined_call_operand.vmem [shape: f32[1,256], index: 5, kind: input, shape index: {}]
  %s6 = inlined_call_operand.vmem [shape: bf16[16,256], index: 6, kind: output, shape index: {}]
  %s7 = sld [smem:[#allocation0]]
  $region42: #{closed_call.23} parent=0
    _
  %s9 = ssub.s32 1, %s7
  %s10 = scalar_select 0, %s9, %s7
  // Predicated region
  $region2: #{closed_call.23} parent=0 // pred_check
    _
  $region3: #{closed_call.23} parent=0 // pred_check_branch
    %12 = sbr.rel (0) target = $region5
  $region4: #{closed_call.23} parent=0 // pred_region
    _
  $region5: #{closed_call.23} parent=0 // pred_fallthru
    _
  // Predicated region
  $region6: #{closed_call.23} parent=0 // pred_check
    _
  $region7: #{closed_call.23} parent=0 // pred_check_branch
    %14 = sbr.rel (0) target = $region9
  $region8: #{closed_call.23} parent=0 // pred_region
    _
  $region9: #{closed_call.23} parent=0 // pred_fallthru
    _
  // Predicated region
  $region10: #{closed_call.23} parent=0 // pred_check
    _
  $region11: #{closed_call.23} parent=0 // pred_check_branch
    %16 = sbr.rel (0) target = $region13
  $region12: #{closed_call.23} parent=0 // pred_region
    _
  $region13: #{closed_call.23} parent=0 // pred_fallthru
    _
  // Predicated region
  $region14: #{closed_call.23} parent=0 // pred_check
    _
  $region15: #{closed_call.23} parent=0 // pred_check_branch
    %18 = sbr.rel (0) target = $region17
  $region16: #{closed_call.23} parent=0 // pred_region
    _
  $region17: #{closed_call.23} parent=0 // pred_fallthru
    _
  // Predicated region
  $region18: #{closed_call.23} parent=0 // pred_check
    _
  $region19: #{closed_call.23} parent=0 // pred_check_branch
    %20 = sbr.rel (0) target = $region21
  $region20: #{closed_call.23} parent=0 // pred_region
    _
  $region21: #{closed_call.23} parent=0 // pred_fallthru
    _
  // Predicated region
  $region22: #{closed_call.23} parent=0 // pred_check
    _
  $region23: #{closed_call.23} parent=0 // pred_check_branch
    %22 = sbr.rel (0) target = $region25
  $region24: #{closed_call.23} parent=0 // pred_region
    _
  $region25: #{closed_call.23} parent=0 // pred_fallthru
    _
  %p23 = scmp.eq.s32.totalorder 0, 0
  // Predicated region
  $region26: #{closed_call.23} parent=0 // pred_check
    %p24 = pneg %p23
  $region27: #{closed_call.23} parent=0 // pred_check_branch
    %26 = sbr.rel (%p24) target = $region29
  $region28: #{closed_call.23} parent=0 // pred_region
    %27 = vst [vmem:[#allocation2] sm:$0xff] 0.0
    %28 = vst [vmem:[#allocation2 + $0x8] sm:$0xff] 0.0
    %29 = vst [vmem:[#allocation2 + $0x10] sm:$0xff] 0.0
    %30 = vst [vmem:[#allocation2 + $0x18] sm:$0xff] 0.0
  $region29: #{closed_call.23} parent=0 // pred_fallthru
    _
  %v31 = vld [vmem:[#allocation2] sm:$0xff]
  %v32 = vld [vmem:[#allocation2 + $0x8] sm:$0xff]
  %v33 = vld [vmem:[#allocation2 + $0x10] sm:$0xff]
  %v34 = vld [vmem:[#allocation2 + $0x18] sm:$0xff]
  %v35 = vld [vmem:[%s0] sm:$0xff]
  %v36 = vld [vmem:[%s0 + $0x8] sm:$0xff]
  %v37 = vld [vmem:[%s1] sm:$0xff]
  %v38 = vld [vmem:[%s1 + $0x8] sm:$0xff]
  %v39 = vld [vmem:[%s1 + $0x10] sm:$0xff]
  %v40 = vld [vmem:[%s1 + $0x18] sm:$0xff]
  %v41 = vld [vmem:[%s1 + $0x20] sm:$0xff]
  %v42 = vld [vmem:[%s1 + $0x28] sm:$0xff]
  %v43 = vld [vmem:[%s1 + $0x30] sm:$0xff]
  %v44 = vld [vmem:[%s1 + $0x38] sm:$0xff]
  %v45 = vld [vmem:[%s1 + $0x40] sm:$0xff]
  %v46 = vld [vmem:[%s1 + $0x48] sm:$0xff]
  %v47 = vld [vmem:[%s1 + $0x50] sm:$0xff]
  %v48 = vld [vmem:[%s1 + $0x58] sm:$0xff]
  %v49 = vld [vmem:[%s1 + $0x60] sm:$0xff]
  %v50 = vld [vmem:[%s1 + $0x68] sm:$0xff]
  %v51 = vld [vmem:[%s1 + $0x70] sm:$0xff]
  %v52 = vld [vmem:[%s1 + $0x78] sm:$0xff]
  %v53 = vld [vmem:[%s1 + $0x80] sm:$0xff]
  %v54 = vld [vmem:[%s1 + $0x88] sm:$0xff]
  %v55 = vld [vmem:[%s1 + $0x90] sm:$0xff]
  %v56 = vld [vmem:[%s1 + $0x98] sm:$0xff]
  %v57 = vld [vmem:[%s1 + $0xa0] sm:$0xff]
  %v58 = vld [vmem:[%s1 + $0xa8] sm:$0xff]
  %v59 = vld [vmem:[%s1 + $0xb0] sm:$0xff]
  %v60 = vld [vmem:[%s1 + $0xb8] sm:$0xff]
  %v61 = vld [vmem:[%s1 + $0xc0] sm:$0xff]
  %v62 = vld [vmem:[%s1 + $0xc8] sm:$0xff]
  %v63 = vld [vmem:[%s1 + $0xd0] sm:$0xff]
  %v64 = vld [vmem:[%s1 + $0xd8] sm:$0xff]
  %v65 = vld [vmem:[%s1 + $0xe0] sm:$0xff]
  %v66 = vld [vmem:[%s1 + $0xe8] sm:$0xff]
  %v67 = vld [vmem:[%s1 + $0xf0] sm:$0xff]
  %v68 = vld [vmem:[%s1 + $0xf8] sm:$0xff]
  %v71 = vunpack.c.l.b16 %v35
  %v72 = vunpack.c.h.b16 %v35
  %v73 = vunpack.c.l.b16 %v36
  %v74 = vunpack.c.h.b16 %v36
  %v75 = vpack.c.b16 %v73, %v71
  %v76 = vpack.c.b16 %v74, %v72
  %v111 = vunpack.c.l.b16 %v37
  %v112 = vunpack.c.h.b16 %v37
  %v113 = vunpack.c.l.b16 %v38
  %v114 = vunpack.c.h.b16 %v38
  %v115 = vunpack.c.l.b16 %v39
  %v116 = vunpack.c.h.b16 %v39
  %v117 = vunpack.c.l.b16 %v40
  %v118 = vunpack.c.h.b16 %v40
  %v119 = vunpack.c.l.b16 %v41
  %v120 = vunpack.c.h.b16 %v41
  %v121 = vunpack.c.l.b16 %v42
  %v122 = vunpack.c.h.b16 %v42
  %v123 = vunpack.c.l.b16 %v43
  %v124 = vunpack.c.h.b16 %v43
  %v125 = vunpack.c.l.b16 %v44
  %v126 = vunpack.c.h.b16 %v44
  %v127 = vunpack.c.l.b16 %v45
  %v128 = vunpack.c.h.b16 %v45
  %v129 = vunpack.c.l.b16 %v46
  %v130 = vunpack.c.h.b16 %v46
  %v131 = vunpack.c.l.b16 %v47
  %v132 = vunpack.c.h.b16 %v47
  %v133 = vunpack.c.l.b16 %v48
  %v134 = vunpack.c.h.b16 %v48
  %v135 = vunpack.c.l.b16 %v49
  %v136 = vunpack.c.h.b16 %v49
  %v137 = vunpack.c.l.b16 %v50
  %v138 = vunpack.c.h.b16 %v50
  %v139 = vunpack.c.l.b16 %v51
  %v140 = vunpack.c.h.b16 %v51
  %v141 = vunpack.c.l.b16 %v52
  %v142 = vunpack.c.h.b16 %v52
  %v143 = vunpack.c.l.b16 %v53
  %v144 = vunpack.c.h.b16 %v53
  %v145 = vunpack.c.l.b16 %v54
  %v146 = vunpack.c.h.b16 %v54
  %v147 = vunpack.c.l.b16 %v55
  %v148 = vunpack.c.h.b16 %v55
  %v149 = vunpack.c.l.b16 %v56
  %v150 = vunpack.c.h.b16 %v56
  %v151 = vunpack.c.l.b16 %v57
  %v152 = vunpack.c.h.b16 %v57
  %v153 = vunpack.c.l.b16 %v58
  %v154 = vunpack.c.h.b16 %v58
  %v155 = vunpack.c.l.b16 %v59
  %v156 = vunpack.c.h.b16 %v59
  %v157 = vunpack.c.l.b16 %v60
  %v158 = vunpack.c.h.b16 %v60
  %v159 = vunpack.c.l.b16 %v61
  %v160 = vunpack.c.h.b16 %v61
  %v161 = vunpack.c.l.b16 %v62
  %v162 = vunpack.c.h.b16 %v62
  %v163 = vunpack.c.l.b16 %v63
  %v164 = vunpack.c.h.b16 %v63
  %v165 = vunpack.c.l.b16 %v64
  %v166 = vunpack.c.h.b16 %v64
  %v167 = vunpack.c.l.b16 %v65
  %v168 = vunpack.c.h.b16 %v65
  %v169 = vunpack.c.l.b16 %v66
  %v170 = vunpack.c.h.b16 %v66
  %v171 = vunpack.c.l.b16 %v67
  %v172 = vunpack.c.h.b16 %v67
  %v173 = vunpack.c.l.b16 %v68
  %v174 = vunpack.c.h.b16 %v68
  %v175 = vpack.c.b16 %v113, %v111
  %v176 = vpack.c.b16 %v114, %v112
  %v177 = vpack.c.b16 %v117, %v115
  %v178 = vpack.c.b16 %v118, %v116
  %v179 = vpack.c.b16 %v121, %v119
  %v180 = vpack.c.b16 %v122, %v120
  %v181 = vpack.c.b16 %v125, %v123
  %v182 = vpack.c.b16 %v126, %v124
  %v183 = vpack.c.b16 %v129, %v127
  %v184 = vpack.c.b16 %v130, %v128
  %v185 = vpack.c.b16 %v133, %v131
  %v186 = vpack.c.b16 %v134, %v132
  %v187 = vpack.c.b16 %v137, %v135
  %v188 = vpack.c.b16 %v138, %v136
  %v189 = vpack.c.b16 %v141, %v139
  %v190 = vpack.c.b16 %v142, %v140
  %v191 = vpack.c.b16 %v145, %v143
  %v192 = vpack.c.b16 %v146, %v144
  %v193 = vpack.c.b16 %v149, %v147
  %v194 = vpack.c.b16 %v150, %v148
  %v195 = vpack.c.b16 %v153, %v151
  %v196 = vpack.c.b16 %v154, %v152
  %v197 = vpack.c.b16 %v157, %v155
  %v198 = vpack.c.b16 %v158, %v156
  %v199 = vpack.c.b16 %v161, %v159
  %v200 = vpack.c.b16 %v162, %v160
  %v201 = vpack.c.b16 %v165, %v163
  %v202 = vpack.c.b16 %v166, %v164
  %v203 = vpack.c.b16 %v169, %v167
  %v204 = vpack.c.b16 %v170, %v168
  %v205 = vpack.c.b16 %v173, %v171
  %v206 = vpack.c.b16 %v174, %v172
  %239 = vmatpush.bf16.msra.mxu0 %v189
  %240 = vmatpush.bf16.msra.mxu0 %v187
  %241 = vmatpush.bf16.msra.mxu0 %v185
  %242 = vmatpush.bf16.msra.mxu0 %v183
  %243 = vmatpush.bf16.msra.mxu0 %v181
  %244 = vmatpush.bf16.msra.mxu0 %v179
  %245 = vmatpush.bf16.msra.mxu0 %v177
  %246 = vmatpush.bf16.msra.mxu0 %v175
  %247 = vmatmul.bf16.gmra.mxu0 %v75
  %v248 = vpop.f32.mrf.mxu0
  %v249 = vadd.f32 0.0, %v248
  %v250 = vpop.f32.mrf.mxu0
  %v251 = vadd.f32 0.0, %v250
  %252 = vdwg.mxu0
  %253 = vmatpush.bf16.msra.mxu0 %v205
  %254 = vmatpush.bf16.msra.mxu0 %v203
  %255 = vmatpush.bf16.msra.mxu0 %v201
  %256 = vmatpush.bf16.msra.mxu0 %v199
  %257 = vmatpush.bf16.msra.mxu0 %v197
  %258 = vmatpush.bf16.msra.mxu0 %v195
  %259 = vmatpush.bf16.msra.mxu0 %v193
  %260 = vmatpush.bf16.msra.mxu0 %v191
  %261 = vmatmul.bf16.gmra.mxu0 %v76
  %v262 = vpop.f32.mrf.mxu0
  %v263 = vadd.f32 %v249, %v262
  %v264 = vpop.f32.mrf.mxu0
  %v265 = vadd.f32 %v251, %v264
  %266 = vdwg.mxu0
  %267 = vmatpush.bf16.msra.mxu0 %v190
  %268 = vmatpush.bf16.msra.mxu0 %v188
  %269 = vmatpush.bf16.msra.mxu0 %v186
  %270 = vmatpush.bf16.msra.mxu0 %v184
  %271 = vmatpush.bf16.msra.mxu0 %v182
  %272 = vmatpush.bf16.msra.mxu0 %v180
  %273 = vmatpush.bf16.msra.mxu0 %v178
  %274 = vmatpush.bf16.msra.mxu0 %v176
  %275 = vmatmul.bf16.gmra.mxu0 %v75
  %v276 = vpop.f32.mrf.mxu0
  %v277 = vadd.f32 0.0, %v276
  %v278 = vpop.f32.mrf.mxu0
  %v279 = vadd.f32 0.0, %v278
  %280 = vdwg.mxu0
  %281 = vmatpush.bf16.msra.mxu0 %v206
  %282 = vmatpush.bf16.msra.mxu0 %v204
  %283 = vmatpush.bf16.msra.mxu0 %v202
  %284 = vmatpush.bf16.msra.mxu0 %v200
  %285 = vmatpush.bf16.msra.mxu0 %v198
  %286 = vmatpush.bf16.msra.mxu0 %v196
  %287 = vmatpush.bf16.msra.mxu0 %v194
  %288 = vmatpush.bf16.msra.mxu0 %v192
  %289 = vmatmul.bf16.gmra.mxu0 %v76
  %v290 = vpop.f32.mrf.mxu0
  %v291 = vadd.f32 %v277, %v290
  %v292 = vpop.f32.mrf.mxu0
  %v293 = vadd.f32 %v279, %v292
  %294 = vdwg.mxu0
  %v295 = vadd.f32 %v31, %v263
  %v296 = vadd.f32 %v32, %v291
  %v297 = vadd.f32 %v33, %v265
  %v298 = vadd.f32 %v34, %v293
  %299 = vst [vmem:[#allocation2] sm:$0xff] %v295
  %300 = vst [vmem:[#allocation2 + $0x8] sm:$0xff] %v296
  %301 = vst [vmem:[#allocation2 + $0x10] sm:$0xff] %v297
  %302 = vst [vmem:[#allocation2 + $0x18] sm:$0xff] %v298
  // Predicated region
  $region30: #{closed_call.23} parent=0 // pred_check
    %p303 = pneg %p23
  $region31: #{closed_call.23} parent=0 // pred_check_branch
    %305 = sbr.rel (%p303) target = $region33
  $region32: #{closed_call.23} parent=0 // pred_region
    %v306 = vld [vmem:[#allocation2] sm:$0xff]
    %v307 = vld [vmem:[#allocation2 + $0x8] sm:$0xff]
    %v308 = vld [vmem:[#allocation2 + $0x10] sm:$0xff]
    %v309 = vld [vmem:[#allocation2 + $0x18] sm:$0xff]
    %v310 = vld [vmem:[%s2] sm:$0x3]
    %v312 = vperm.slane %v310, 0
    %v313 = vperm.slane %v310, 1
    %v316 = vadd.f32 %v306, %v312
    %v317 = vadd.f32 %v307, %v313
    %v318 = vadd.f32 %v308, %v312
    %v319 = vadd.f32 %v309, %v313
    %v320 = vld [vmem:[%s3] sm:$0xff]
    %v321 = vld [vmem:[%s3 + $0x8] sm:$0xff]
    %v322 = vunpack.c.l.bf16 %v320
    %v323 = vunpack.c.h.bf16 %v320
    %v324 = vunpack.c.l.bf16 %v321
    %v325 = vunpack.c.h.bf16 %v321
    %v326 = vadd.f32 %v316, %v322
    %v327 = vadd.f32 %v317, %v323
    %v328 = vadd.f32 %v318, %v324
    %v329 = vadd.f32 %v319, %v325
    %v330 = vadd.f32 %v326, %v327
    %331 = vadd.xlane.f32.xlu0 %v330
    %v332 = vpop.xlane.xlu0 %331
    %v333 = vadd.f32 %v328, %v329
    %334 = vadd.xlane.f32.xlu0 %v333
    %v335 = vpop.xlane.xlu0 %334
    %v336 = vrcp.pop 256.0
    %v337 = vmul.f32 256.0, %v336
    %v338 = vsub.f32 1.0, %v337
    %v339 = vmul.f32 %v336, %v338
    %v340 = vadd.f32 %v336, %v339
    %vm341 = vweird.f32 %v336
    %v342 = vsel %vm341, %v336, %v340
    %v343 = vmul.f32 %v332, %v342
    %v344 = vmul.f32 %v335, %v342
    %v345 = vsub.f32 %v326, %v343
    %v346 = vsub.f32 %v327, %v343
    %v347 = vsub.f32 %v328, %v344
    %v348 = vsub.f32 %v329, %v344
    %v349 = vmul.f32 %v345, %v345
    %v350 = vmul.f32 %v346, %v346
    %v351 = vmul.f32 %v347, %v347
    %v352 = vmul.f32 %v348, %v348
    %v353 = vadd.f32 %v349, %v350
    %354 = vadd.xlane.f32.xlu0 %v353
    %v355 = vpop.xlane.xlu0 %354
    %v356 = vadd.f32 %v351, %v352
    %357 = vadd.xlane.f32.xlu0 %v356
    %v358 = vpop.xlane.xlu0 %357
    %v359 = vmul.f32 %v355, %v342
    %v360 = vmul.f32 %v358, %v342
    %v361 = vadd.f32 %v359, 1e-12
    %v362 = vadd.f32 %v360, 1e-12
    %v363 = vrsqrt.pop %v361
    %v364 = vmul.f32 %v363, %v361
    %v365 = vmul.f32 %v364, %v363
    %v366 = vmul.f32 0.5, %v365
    %v367 = vsub.f32 1.5, %v366
    %v368 = vmul.f32 %v363, %v367
    %vm369 = vweird.f32 %v361
    %vm370 = vweird.f32 %v363
    %vm371 = vmor %vm369, %vm370
    %v372 = vsel %vm371, %v363, %v368
    %v373 = vrsqrt.pop %v362
    %v374 = vmul.f32 %v373, %v362
    %v375 = vmul.f32 %v374, %v373
    %v376 = vmul.f32 0.5, %v375
    %v377 = vsub.f32 1.5, %v376
    %v378 = vmul.f32 %v373, %v377
    %vm379 = vweird.f32 %v362
    %vm380 = vweird.f32 %v373
    %vm381 = vmor %vm379, %vm380
    %v382 = vsel %vm381, %v373, %v378
    %v383 = vmul.f32 %v345, %v372
    %v384 = vmul.f32 %v346, %v372
    %v385 = vmul.f32 %v347, %v382
    %v386 = vmul.f32 %v348, %v382
    %v387 = vld [vmem:[%s4] sm:$0x3]
    %v389 = vperm.slane %v387, 0
    %v390 = vperm.slane %v387, 1
    %v393 = vmul.f32 %v383, %v389
    %v394 = vmul.f32 %v384, %v390
    %v395 = vmul.f32 %v385, %v389
    %v396 = vmul.f32 %v386, %v390
    %v397 = vld [vmem:[%s5] sm:$0x3]
    %v399 = vperm.slane %v397, 0
    %v400 = vperm.slane %v397, 1
    %v403 = vadd.f32 %v393, %v399
    %v404 = vadd.f32 %v394, %v400
    %v405 = vadd.f32 %v395, %v399
    %v406 = vadd.f32 %v396, %v400
    %v407 = vpack.c.bf16 %v404, %v403
    %v408 = vpack.c.bf16 %v406, %v405
    %409 = vst [vmem:[%s6] sm:$0xff] %v407
    %410 = vst [vmem:[%s6 + $0x8] sm:$0xff] %v408
  $region33: #{closed_call.23} parent=0 // pred_fallthru
    _
  // Predicated region
  $region34: #{closed_call.23} parent=0 // pred_check
    _
  $region35: #{closed_call.23} parent=0 // pred_check_branch
    %412 = sbr.rel (0) target = $region37
  $region36: #{closed_call.23} parent=0 // pred_region
    _
  $region37: #{closed_call.23} parent=0 // pred_fallthru
    _
  // Predicated region
  $region38: #{closed_call.23} parent=0 // pred_check
    _
  $region39: #{closed_call.23} parent=0 // pred_check_branch
    %414 = sbr.rel (0) target = $region41
  $region40: #{closed_call.23} parent=0 // pred_region
    _
  $region41: #{closed_call.23} parent=0 // pred_fallthru
    _

// kernel: closed_call.24
$region0: #{closed_call.24}
  #allocation0 [shape = 'u32[]', space=smem, size = 0x4, offset = 0x4, fixed_abs, tag = 'smem constant byte address 0x4 - core index']
  #allocation1 [shape = 'u32[72,128]{1,0:T(1,128)}', space=vmem, size = 0x9000, scoped, tag = 'internal scratch']
  #allocation2 [shape = 'f32[16,512]{1,0:T(8,128)}', space=vmem, size = 0x8000, scoped, tag = 'scratch operand']
  %s0 = inlined_call_operand.vmem [shape: bf16[16,256], index: 0, kind: input, shape index: {}]
  %s1 = inlined_call_operand.vmem [shape: bf16[256,512], index: 1, kind: input, shape index: {}]
  %s2 = inlined_call_operand.vmem [shape: f32[1,512], index: 2, kind: input, shape index: {}]
  %s3 = inlined_call_operand.vmem [shape: bf16[16,512], index: 3, kind: output, shape index: {}]
  %s4 = sld [smem:[#allocation0]]
  $region30: #{closed_call.24} parent=0
    _
  %s6 = ssub.s32 1, %s4
  %s7 = scalar_select 0, %s6, %s4
  // Predicated region
  $region2: #{closed_call.24} parent=0 // pred_check
    _
  $region3: #{closed_call.24} parent=0 // pred_check_branch
    %9 = sbr.rel (0) target = $region5
  $region4: #{closed_call.24} parent=0 // pred_region
    _
  $region5: #{closed_call.24} parent=0 // pred_fallthru
    _
  // Predicated region
  $region6: #{closed_call.24} parent=0 // pred_check
    _
  $region7: #{closed_call.24} parent=0 // pred_check_branch
    %11 = sbr.rel (0) target = $region9
  $region8: #{closed_call.24} parent=0 // pred_region
    _
  $region9: #{closed_call.24} parent=0 // pred_fallthru
    _
  // Predicated region
  $region10: #{closed_call.24} parent=0 // pred_check
    _
  $region11: #{closed_call.24} parent=0 // pred_check_branch
    %13 = sbr.rel (0) target = $region13
  $region12: #{closed_call.24} parent=0 // pred_region
    _
  $region13: #{closed_call.24} parent=0 // pred_fallthru
    _
  %p14 = scmp.eq.s32.totalorder 0, 0
  // Predicated region
  $region14: #{closed_call.24} parent=0 // pred_check
    %p15 = pneg %p14
  $region15: #{closed_call.24} parent=0 // pred_check_branch
    %17 = sbr.rel (%p15) target = $region17
  $region16: #{closed_call.24} parent=0 // pred_region
    %18 = vst [vmem:[#allocation2] sm:$0xff] 0.0
    %19 = vst [vmem:[#allocation2 + $0x8] sm:$0xff] 0.0
    %20 = vst [vmem:[#allocation2 + $0x10] sm:$0xff] 0.0
    %21 = vst [vmem:[#allocation2 + $0x18] sm:$0xff] 0.0
    %22 = vst [vmem:[#allocation2 + $0x20] sm:$0xff] 0.0
    %23 = vst [vmem:[#allocation2 + $0x28] sm:$0xff] 0.0
    %24 = vst [vmem:[#allocation2 + $0x30] sm:$0xff] 0.0
    %25 = vst [vmem:[#allocation2 + $0x38] sm:$0xff] 0.0
  $region17: #{closed_call.24} parent=0 // pred_fallthru
    _
  %v26 = vld [vmem:[#allocation2] sm:$0xff]
  %v27 = vld [vmem:[#allocation2 + $0x8] sm:$0xff]
  %v28 = vld [vmem:[#allocation2 + $0x10] sm:$0xff]
  %v29 = vld [vmem:[#allocation2 + $0x18] sm:$0xff]
  %v30 = vld [vmem:[#allocation2 + $0x20] sm:$0xff]
  %v31 = vld [vmem:[#allocation2 + $0x28] sm:$0xff]
  %v32 = vld [vmem:[#allocation2 + $0x30] sm:$0xff]
  %v33 = vld [vmem:[#allocation2 + $0x38] sm:$0xff]
  %v34 = vld [vmem:[%s0] sm:$0xff]
  %v35 = vld [vmem:[%s0 + $0x8] sm:$0xff]
  %v36 = vld [vmem:[%s1] sm:$0xff]
  %v37 = vld [vmem:[%s1 + $0x8] sm:$0xff]
  %v38 = vld [vmem:[%s1 + $0x10] sm:$0xff]
  %v39 = vld [vmem:[%s1 + $0x18] sm:$0xff]
  %v40 = vld [vmem:[%s1 + $0x20] sm:$0xff]
  %v41 = vld [vmem:[%s1 + $0x28] sm:$0xff]
  %v42 = vld [vmem:[%s1 + $0x30] sm:$0xff]
  %v43 = vld [vmem:[%s1 + $0x38] sm:$0xff]
  %v44 = vld [vmem:[%s1 + $0x40] sm:$0xff]
  %v45 = vld [vmem:[%s1 + $0x48] sm:$0xff]
  %v46 = vld [vmem:[%s1 + $0x50] sm:$0xff]
  %v47 = vld [vmem:[%s1 + $0x58] sm:$0xff]
  %v48 = vld [vmem:[%s1 + $0x60] sm:$0xff]
  %v49 = vld [vmem:[%s1 + $0x68] sm:$0xff]
  %v50 = vld [vmem:[%s1 + $0x70] sm:$0xff]
  %v51 = vld [vmem:[%s1 + $0x78] sm:$0xff]
  %v52 = vld [vmem:[%s1 + $0x80] sm:$0xff]
  %v53 = vld [vmem:[%s1 + $0x88] sm:$0xff]
  %v54 = vld [vmem:[%s1 + $0x90] sm:$0xff]
  %v55 = vld [vmem:[%s1 + $0x98] sm:$0xff]
  %v56 = vld [vmem:[%s1 + $0xa0] sm:$0xff]
  %v57 = vld [vmem:[%s1 + $0xa8] sm:$0xff]
  %v58 = vld [vmem:[%s1 + $0xb0] sm:$0xff]
  %v59 = vld [vmem:[%s1 + $0xb8] sm:$0xff]
  %v60 = vld [vmem:[%s1 + $0xc0] sm:$0xff]
  %v61 = vld [vmem:[%s1 + $0xc8] sm:$0xff]
  %v62 = vld [vmem:[%s1 + $0xd0] sm:$0xff]
  %v63 = vld [vmem:[%s1 + $0xd8] sm:$0xff]
  %v64 = vld [vmem:[%s1 + $0xe0] sm:$0xff]
  %v65 = vld [vmem:[%s1 + $0xe8] sm:$0xff]
  %v66 = vld [vmem:[%s1 + $0xf0] sm:$0xff]
  %v67 = vld [vmem:[%s1 + $0xf8] sm:$0xff]
  %v68 = vld [vmem:[%s1 + $0x100] sm:$0xff]
  %v69 = vld [vmem:[%s1 + $0x108] sm:$0xff]
  %v70 = vld [vmem:[%s1 + $0x110] sm:$0xff]
  %v71 = vld [vmem:[%s1 + $0x118] sm:$0xff]
  %v72 = vld [vmem:[%s1 + $0x120] sm:$0xff]
  %v73 = vld [vmem:[%s1 + $0x128] sm:$0xff]
  %v74 = vld [vmem:[%s1 + $0x130] sm:$0xff]
  %v75 = vld [vmem:[%s1 + $0x138] sm:$0xff]
  %v76 = vld [vmem:[%s1 + $0x140] sm:$0xff]
  %v77 = vld [vmem:[%s1 + $0x148] sm:$0xff]
  %v78 = vld [vmem:[%s1 + $0x150] sm:$0xff]
  %v79 = vld [vmem:[%s1 + $0x158] sm:$0xff]
  %v80 = vld [vmem:[%s1 + $0x160] sm:$0xff]
  %v81 = vld [vmem:[%s1 + $0x168] sm:$0xff]
  %v82 = vld [vmem:[%s1 + $0x170] sm:$0xff]
  %v83 = vld [vmem:[%s1 + $0x178] sm:$0xff]
  %v84 = vld [vmem:[%s1 + $0x180] sm:$0xff]
  %v85 = vld [vmem:[%s1 + $0x188] sm:$0xff]
  %v86 = vld [vmem:[%s1 + $0x190] sm:$0xff]
  %v87 = vld [vmem:[%s1 + $0x198] sm:$0xff]
  %v88 = vld [vmem:[%s1 + $0x1a0] sm:$0xff]
  %v89 = vld [vmem:[%s1 + $0x1a8] sm:$0xff]
  %v90 = vld [vmem:[%s1 + $0x1b0] sm:$0xff]
  %v91 = vld [vmem:[%s1 + $0x1b8] sm:$0xff]
  %v92 = vld [vmem:[%s1 + $0x1c0] sm:$0xff]
  %v93 = vld [vmem:[%s1 + $0x1c8] sm:$0xff]
  %v94 = vld [vmem:[%s1 + $0x1d0] sm:$0xff]
  %v95 = vld [vmem:[%s1 + $0x1d8] sm:$0xff]
  %v96 = vld [vmem:[%s1 + $0x1e0] sm:$0xff]
  %v97 = vld [vmem:[%s1 + $0x1e8] sm:$0xff]
  %v98 = vld [vmem:[%s1 + $0x1f0] sm:$0xff]
  %v99 = vld [vmem:[%s1 + $0x1f8] sm:$0xff]
  %v102 = vunpack.c.l.b16 %v34
  %v103 = vunpack.c.h.b16 %v34
  %v104 = vunpack.c.l.b16 %v35
  %v105 = vunpack.c.h.b16 %v35
  %v106 = vpack.c.b16 %v104, %v102
  %v107 = vpack.c.b16 %v105, %v103
  %v174 = vunpack.c.l.b16 %v36
  %v175 = vunpack.c.h.b16 %v36
  %v176 = vunpack.c.l.b16 %v37
  %v177 = vunpack.c.h.b16 %v37
  %v178 = vunpack.c.l.b16 %v38
  %v179 = vunpack.c.h.b16 %v38
  %v180 = vunpack.c.l.b16 %v39
  %v181 = vunpack.c.h.b16 %v39
  %v182 = vunpack.c.l.b16 %v40
  %v183 = vunpack.c.h.b16 %v40
  %v184 = vunpack.c.l.b16 %v41
  %v185 = vunpack.c.h.b16 %v41
  %v186 = vunpack.c.l.b16 %v42
  %v187 = vunpack.c.h.b16 %v42
  %v188 = vunpack.c.l.b16 %v43
  %v189 = vunpack.c.h.b16 %v43
  %v190 = vunpack.c.l.b16 %v44
  %v191 = vunpack.c.h.b16 %v44
  %v192 = vunpack.c.l.b16 %v45
  %v193 = vunpack.c.h.b16 %v45
  %v194 = vunpack.c.l.b16 %v46
  %v195 = vunpack.c.h.b16 %v46
  %v196 = vunpack.c.l.b16 %v47
  %v197 = vunpack.c.h.b16 %v47
  %v198 = vunpack.c.l.b16 %v48
  %v199 = vunpack.c.h.b16 %v48
  %v200 = vunpack.c.l.b16 %v49
  %v201 = vunpack.c.h.b16 %v49
  %v202 = vunpack.c.l.b16 %v50
  %v203 = vunpack.c.h.b16 %v50
  %v204 = vunpack.c.l.b16 %v51
  %v205 = vunpack.c.h.b16 %v51
  %v206 = vunpack.c.l.b16 %v52
  %v207 = vunpack.c.h.b16 %v52
  %v208 = vunpack.c.l.b16 %v53
  %v209 = vunpack.c.h.b16 %v53
  %v210 = vunpack.c.l.b16 %v54
  %v211 = vunpack.c.h.b16 %v54
  %v212 = vunpack.c.l.b16 %v55
  %v213 = vunpack.c.h.b16 %v55
  %v214 = vunpack.c.l.b16 %v56
  %v215 = vunpack.c.h.b16 %v56
  %v216 = vunpack.c.l.b16 %v57
  %v217 = vunpack.c.h.b16 %v57
  %v218 = vunpack.c.l.b16 %v58
  %v219 = vunpack.c.h.b16 %v58
  %v220 = vunpack.c.l.b16 %v59
  %v221 = vunpack.c.h.b16 %v59
  %v222 = vunpack.c.l.b16 %v60
  %v223 = vunpack.c.h.b16 %v60
  %v224 = vunpack.c.l.b16 %v61
  %v225 = vunpack.c.h.b16 %v61
  %v226 = vunpack.c.l.b16 %v62
  %v227 = vunpack.c.h.b16 %v62
  %v228 = vunpack.c.l.b16 %v63
  %v229 = vunpack.c.h.b16 %v63
  %v230 = vunpack.c.l.b16 %v64
  %v231 = vunpack.c.h.b16 %v64
  %v232 = vunpack.c.l.b16 %v65
  %v233 = vunpack.c.h.b16 %v65
  %v234 = vunpack.c.l.b16 %v66
  %v235 = vunpack.c.h.b16 %v66
  %v236 = vunpack.c.l.b16 %v67
  %v237 = vunpack.c.h.b16 %v67
  %v238 = vunpack.c.l.b16 %v68
  %v239 = vunpack.c.h.b16 %v68
  %v240 = vunpack.c.l.b16 %v69
  %v241 = vunpack.c.h.b16 %v69
  %v242 = vunpack.c.l.b16 %v70
  %v243 = vunpack.c.h.b16 %v70
  %v244 = vunpack.c.l.b16 %v71
  %v245 = vunpack.c.h.b16 %v71
  %v246 = vunpack.c.l.b16 %v72
  %v247 = vunpack.c.h.b16 %v72
  %v248 = vunpack.c.l.b16 %v73
  %v249 = vunpack.c.h.b16 %v73
  %v250 = vunpack.c.l.b16 %v74
  %v251 = vunpack.c.h.b16 %v74
  %v252 = vunpack.c.l.b16 %v75
  %v253 = vunpack.c.h.b16 %v75
  %v254 = vunpack.c.l.b16 %v76
  %v255 = vunpack.c.h.b16 %v76
  %v256 = vunpack.c.l.b16 %v77
  %v257 = vunpack.c.h.b16 %v77
  %v258 = vunpack.c.l.b16 %v78
  %v259 = vunpack.c.h.b16 %v78
  %v260 = vunpack.c.l.b16 %v79
  %v261 = vunpack.c.h.b16 %v79
  %v262 = vunpack.c.l.b16 %v80
  %v263 = vunpack.c.h.b16 %v80
  %v264 = vunpack.c.l.b16 %v81
  %v265 = vunpack.c.h.b16 %v81
  %v266 = vunpack.c.l.b16 %v82
  %v267 = vunpack.c.h.b16 %v82
  %v268 = vunpack.c.l.b16 %v83
  %v269 = vunpack.c.h.b16 %v83
  %v270 = vunpack.c.l.b16 %v84
  %v271 = vunpack.c.h.b16 %v84
  %v272 = vunpack.c.l.b16 %v85
  %v273 = vunpack.c.h.b16 %v85
  %v274 = vunpack.c.l.b16 %v86
  %v275 = vunpack.c.h.b16 %v86
  %v276 = vunpack.c.l.b16 %v87
  %v277 = vunpack.c.h.b16 %v87
  %v278 = vunpack.c.l.b16 %v88
  %v279 = vunpack.c.h.b16 %v88
  %v280 = vunpack.c.l.b16 %v89
  %v281 = vunpack.c.h.b16 %v89
  %v282 = vunpack.c.l.b16 %v90
  %v283 = vunpack.c.h.b16 %v90
  %v284 = vunpack.c.l.b16 %v91
  %v285 = vunpack.c.h.b16 %v91
  %v286 = vunpack.c.l.b16 %v92
  %v287 = vunpack.c.h.b16 %v92
  %v288 = vunpack.c.l.b16 %v93
  %v289 = vunpack.c.h.b16 %v93
  %v290 = vunpack.c.l.b16 %v94
  %v291 = vunpack.c.h.b16 %v94
  %v292 = vunpack.c.l.b16 %v95
  %v293 = vunpack.c.h.b16 %v95
  %v294 = vunpack.c.l.b16 %v96
  %v295 = vunpack.c.h.b16 %v96
  %v296 = vunpack.c.l.b16 %v97
  %v297 = vunpack.c.h.b16 %v97
  %v298 = vunpack.c.l.b16 %v98
  %v299 = vunpack.c.h.b16 %v98
  %v300 = vunpack.c.l.b16 %v99
  %v301 = vunpack.c.h.b16 %v99
  %v302 = vpack.c.b16 %v178, %v174
  %v303 = vpack.c.b16 %v179, %v175
  %v304 = vpack.c.b16 %v180, %v176
  %v305 = vpack.c.b16 %v181, %v177
  %v306 = vpack.c.b16 %v186, %v182
  %v307 = vpack.c.b16 %v187, %v183
  %v308 = vpack.c.b16 %v188, %v184
  %v309 = vpack.c.b16 %v189, %v185
  %v310 = vpack.c.b16 %v194, %v190
  %v311 = vpack.c.b16 %v195, %v191
  %v312 = vpack.c.b16 %v196, %v192
  %v313 = vpack.c.b16 %v197, %v193
  %v314 = vpack.c.b16 %v202, %v198
  %v315 = vpack.c.b16 %v203, %v199
  %v316 = vpack.c.b16 %v204, %v200
  %v317 = vpack.c.b16 %v205, %v201
  %v318 = vpack.c.b16 %v210, %v206
  %v319 = vpack.c.b16 %v211, %v207
  %v320 = vpack.c.b16 %v212, %v208
  %v321 = vpack.c.b16 %v213, %v209
  %v322 = vpack.c.b16 %v218, %v214
  %v323 = vpack.c.b16 %v219, %v215
  %v324 = vpack.c.b16 %v220, %v216
  %v325 = vpack.c.b16 %v221, %v217
  %v326 = vpack.c.b16 %v226, %v222
  %v327 = vpack.c.b16 %v227, %v223
  %v328 = vpack.c.b16 %v228, %v224
  %v329 = vpack.c.b16 %v229, %v225
  %v330 = vpack.c.b16 %v234, %v230
  %v331 = vpack.c.b16 %v235, %v231
  %v332 = vpack.c.b16 %v236, %v232
  %v333 = vpack.c.b16 %v237, %v233
  %v334 = vpack.c.b16 %v242, %v238
  %v335 = vpack.c.b16 %v243, %v239
  %v336 = vpack.c.b16 %v244, %v240
  %v337 = vpack.c.b16 %v245, %v241
  %v338 = vpack.c.b16 %v250, %v246
  %v339 = vpack.c.b16 %v251, %v247
  %v340 = vpack.c.b16 %v252, %v248
  %v341 = vpack.c.b16 %v253, %v249
  %v342 = vpack.c.b16 %v258, %v254
  %v343 = vpack.c.b16 %v259, %v255
  %v344 = vpack.c.b16 %v260, %v256
  %v345 = vpack.c.b16 %v261, %v257
  %v346 = vpack.c.b16 %v266, %v262
  %v347 = vpack.c.b16 %v267, %v263
  %v348 = vpack.c.b16 %v268, %v264
  %v349 = vpack.c.b16 %v269, %v265
  %v350 = vpack.c.b16 %v274, %v270
  %v351 = vpack.c.b16 %v275, %v271
  %v352 = vpack.c.b16 %v276, %v272
  %v353 = vpack.c.b16 %v277, %v273
  %v354 = vpack.c.b16 %v282, %v278
  %v355 = vpack.c.b16 %v283, %v279
  %v356 = vpack.c.b16 %v284, %v280
  %v357 = vpack.c.b16 %v285, %v281
  %v358 = vpack.c.b16 %v290, %v286
  %v359 = vpack.c.b16 %v291, %v287
  %v360 = vpack.c.b16 %v292, %v288
  %v361 = vpack.c.b16 %v293, %v289
  %v362 = vpack.c.b16 %v298, %v294
  %v363 = vpack.c.b16 %v299, %v295
  %v364 = vpack.c.b16 %v300, %v296
  %v365 = vpack.c.b16 %v301, %v297
  %430 = vmatpush.bf16.msra.mxu0 %v330
  %431 = vmatpush.bf16.msra.mxu0 %v326
  %432 = vmatpush.bf16.msra.mxu0 %v322
  %433 = vmatpush.bf16.msra.mxu0 %v318
  %434 = vmatpush.bf16.msra.mxu0 %v314
  %435 = vmatpush.bf16.msra.mxu0 %v310
  %436 = vmatpush.bf16.msra.mxu0 %v306
  %437 = vmatpush.bf16.msra.mxu0 %v302
  %438 = vmatmul.bf16.gmra.mxu0 %v106
  %v439 = vpop.f32.mrf.mxu0
  %v440 = vadd.f32 0.0, %v439
  %v441 = vpop.f32.mrf.mxu0
  %v442 = vadd.f32 0.0, %v441
  %443 = vdwg.mxu0
  %444 = vmatpush.bf16.msra.mxu0 %v362
  %445 = vmatpush.bf16.msra.mxu0 %v358
  %446 = vmatpush.bf16.msra.mxu0 %v354
  %447 = vmatpush.bf16.msra.mxu0 %v350
  %448 = vmatpush.bf16.msra.mxu0 %v346
  %449 = vmatpush.bf16.msra.mxu0 %v342
  %450 = vmatpush.bf16.msra.mxu0 %v338
  %451 = vmatpush.bf16.msra.mxu0 %v334
  %452 = vmatmul.bf16.gmra.mxu0 %v107
  %v453 = vpop.f32.mrf.mxu0
  %v454 = vadd.f32 %v440, %v453
  %v455 = vpop.f32.mrf.mxu0
  %v456 = vadd.f32 %v442, %v455
  %457 = vdwg.mxu0
  %458 = vmatpush.bf16.msra.mxu0 %v331
  %459 = vmatpush.bf16.msra.mxu0 %v327
  %460 = vmatpush.bf16.msra.mxu0 %v323
  %461 = vmatpush.bf16.msra.mxu0 %v319
  %462 = vmatpush.bf16.msra.mxu0 %v315
  %463 = vmatpush.bf16.msra.mxu0 %v311
  %464 = vmatpush.bf16.msra.mxu0 %v307
  %465 = vmatpush.bf16.msra.mxu0 %v303
  %466 = vmatmul.bf16.gmra.mxu0 %v106
  %v467 = vpop.f32.mrf.mxu0
  %v468 = vadd.f32 0.0, %v467
  %v469 = vpop.f32.mrf.mxu0
  %v470 = vadd.f32 0.0, %v469
  %471 = vdwg.mxu0
  %472 = vmatpush.bf16.msra.mxu0 %v363
  %473 = vmatpush.bf16.msra.mxu0 %v359
  %474 = vmatpush.bf16.msra.mxu0 %v355
  %475 = vmatpush.bf16.msra.mxu0 %v351
  %476 = vmatpush.bf16.msra.mxu0 %v347
  %477 = vmatpush.bf16.msra.mxu0 %v343
  %478 = vmatpush.bf16.msra.mxu0 %v339
  %479 = vmatpush.bf16.msra.mxu0 %v335
  %480 = vmatmul.bf16.gmra.mxu0 %v107
  %v481 = vpop.f32.mrf.mxu0
  %v482 = vadd.f32 %v468, %v481
  %v483 = vpop.f32.mrf.mxu0
  %v484 = vadd.f32 %v470, %v483
  %485 = vdwg.mxu0
  %486 = vmatpush.bf16.msra.mxu0 %v332
  %487 = vmatpush.bf16.msra.mxu0 %v328
  %488 = vmatpush.bf16.msra.mxu0 %v324
  %489 = vmatpush.bf16.msra.mxu0 %v320
  %490 = vmatpush.bf16.msra.mxu0 %v316
  %491 = vmatpush.bf16.msra.mxu0 %v312
  %492 = vmatpush.bf16.msra.mxu0 %v308
  %493 = vmatpush.bf16.msra.mxu0 %v304
  %494 = vmatmul.bf16.gmra.mxu0 %v106
  %v495 = vpop.f32.mrf.mxu0
  %v496 = vadd.f32 0.0, %v495
  %v497 = vpop.f32.mrf.mxu0
  %v498 = vadd.f32 0.0, %v497
  %499 = vdwg.mxu0
  %500 = vmatpush.bf16.msra.mxu0 %v364
  %501 = vmatpush.bf16.msra.mxu0 %v360
  %502 = vmatpush.bf16.msra.mxu0 %v356
  %503 = vmatpush.bf16.msra.mxu0 %v352
  %504 = vmatpush.bf16.msra.mxu0 %v348
  %505 = vmatpush.bf16.msra.mxu0 %v344
  %506 = vmatpush.bf16.msra.mxu0 %v340
  %507 = vmatpush.bf16.msra.mxu0 %v336
  %508 = vmatmul.bf16.gmra.mxu0 %v107
  %v509 = vpop.f32.mrf.mxu0
  %v510 = vadd.f32 %v496, %v509
  %v511 = vpop.f32.mrf.mxu0
  %v512 = vadd.f32 %v498, %v511
  %513 = vdwg.mxu0
  %514 = vmatpush.bf16.msra.mxu0 %v333
  %515 = vmatpush.bf16.msra.mxu0 %v329
  %516 = vmatpush.bf16.msra.mxu0 %v325
  %517 = vmatpush.bf16.msra.mxu0 %v321
  %518 = vmatpush.bf16.msra.mxu0 %v317
  %519 = vmatpush.bf16.msra.mxu0 %v313
  %520 = vmatpush.bf16.msra.mxu0 %v309
  %521 = vmatpush.bf16.msra.mxu0 %v305
  %522 = vmatmul.bf16.gmra.mxu0 %v106
  %v523 = vpop.f32.mrf.mxu0
  %v524 = vadd.f32 0.0, %v523
  %v525 = vpop.f32.mrf.mxu0
  %v526 = vadd.f32 0.0, %v525
  %527 = vdwg.mxu0
  %528 = vmatpush.bf16.msra.mxu0 %v365
  %529 = vmatpush.bf16.msra.mxu0 %v361
  %530 = vmatpush.bf16.msra.mxu0 %v357
  %531 = vmatpush.bf16.msra.mxu0 %v353
  %532 = vmatpush.bf16.msra.mxu0 %v349
  %533 = vmatpush.bf16.msra.mxu0 %v345
  %534 = vmatpush.bf16.msra.mxu0 %v341
  %535 = vmatpush.bf16.msra.mxu0 %v337
  %536 = vmatmul.bf16.gmra.mxu0 %v107
  %v537 = vpop.f32.mrf.mxu0
  %v538 = vadd.f32 %v524, %v537
  %v539 = vpop.f32.mrf.mxu0
  %v540 = vadd.f32 %v526, %v539
  %541 = vdwg.mxu0
  %v542 = vadd.f32 %v26, %v454
  %v543 = vadd.f32 %v27, %v482
  %v544 = vadd.f32 %v28, %v510
  %v545 = vadd.f32 %v29, %v538
  %v546 = vadd.f32 %v30, %v456
  %v547 = vadd.f32 %v31, %v484
  %v548 = vadd.f32 %v32, %v512
  %v549 = vadd.f32 %v33, %v540
  %550 = vst [vmem:[#allocation2] sm:$0xff] %v542
  %551 = vst [vmem:[#allocation2 + $0x8] sm:$0xff] %v543
  %552 = vst [vmem:[#allocation2 + $0x10] sm:$0xff] %v544
  %553 = vst [vmem:[#allocation2 + $0x18] sm:$0xff] %v545
  %554 = vst [vmem:[#allocation2 + $0x20] sm:$0xff] %v546
  %555 = vst [vmem:[#allocation2 + $0x28] sm:$0xff] %v547
  %556 = vst [vmem:[#allocation2 + $0x30] sm:$0xff] %v548
  %557 = vst [vmem:[#allocation2 + $0x38] sm:$0xff] %v549
  // Predicated region
  $region18: #{closed_call.24} parent=0 // pred_check
    %p558 = pneg %p14
  $region19: #{closed_call.24} parent=0 // pred_check_branch
    %560 = sbr.rel (%p558) target = $region21
  $region20: #{closed_call.24} parent=0 // pred_region
    %v561 = vld [vmem:[#allocation2] sm:$0xff]
    %v562 = vld [vmem:[#allocation2 + $0x8] sm:$0xff]
    %v563 = vld [vmem:[#allocation2 + $0x10] sm:$0xff]
    %v564 = vld [vmem:[#allocation2 + $0x18] sm:$0xff]
    %v565 = vld [vmem:[#allocation2 + $0x20] sm:$0xff]
    %v566 = vld [vmem:[#allocation2 + $0x28] sm:$0xff]
    %v567 = vld [vmem:[#allocation2 + $0x30] sm:$0xff]
    %v568 = vld [vmem:[#allocation2 + $0x38] sm:$0xff]
    %v569 = vld [vmem:[%s2] sm:$0xf]
    %v571 = vperm.slane %v569, 0
    %v572 = vperm.slane %v569, 1
    %v573 = vperm.slane %v569, 2
    %v574 = vperm.slane %v569, 3
    %v579 = vadd.f32 %v561, %v571
    %v580 = vadd.f32 %v562, %v572
    %v581 = vadd.f32 %v563, %v573
    %v582 = vadd.f32 %v564, %v574
    %v583 = vadd.f32 %v565, %v571
    %v584 = vadd.f32 %v566, %v572
    %v585 = vadd.f32 %v567, %v573
    %v586 = vadd.f32 %v568, %v574
    %v587 = vmul.f32 %v579, 0.5
    %v588 = vmul.f32 %v580, 0.5
    %v589 = vmul.f32 %v581, 0.5
    %v590 = vmul.f32 %v582, 0.5
    %v591 = vmul.f32 %v583, 0.5
    %v592 = vmul.f32 %v584, 0.5
    %v593 = vmul.f32 %v585, 0.5
    %v594 = vmul.f32 %v586, 0.5
    %v595 = vmul.f32 %v579, 0.044715
    %v596 = vmul.f32 %v580, 0.044715
    %v597 = vmul.f32 %v581, 0.044715
    %v598 = vmul.f32 %v582, 0.044715
    %v599 = vmul.f32 %v583, 0.044715
    %v600 = vmul.f32 %v584, 0.044715
    %v601 = vmul.f32 %v585, 0.044715
    %v602 = vmul.f32 %v586, 0.044715
    %v603 = vmul.f32 %v595, %v579
    %v604 = vmul.f32 %v596, %v580
    %v605 = vmul.f32 %v597, %v581
    %v606 = vmul.f32 %v598, %v582
    %v607 = vmul.f32 %v599, %v583
    %v608 = vmul.f32 %v600, %v584
    %v609 = vmul.f32 %v601, %v585
    %v610 = vmul.f32 %v602, %v586
    %v611 = vmul.f32 %v603, %v579
    %v612 = vmul.f32 %v604, %v580
    %v613 = vmul.f32 %v605, %v581
    %v614 = vmul.f32 %v606, %v582
    %v615 = vmul.f32 %v607, %v583
    %v616 = vmul.f32 %v608, %v584
    %v617 = vmul.f32 %v609, %v585
    %v618 = vmul.f32 %v610, %v586
    %v619 = vadd.f32 %v579, %v611
    %v620 = vadd.f32 %v580, %v612
    %v621 = vadd.f32 %v581, %v613
    %v622 = vadd.f32 %v582, %v614
    %v623 = vadd.f32 %v583, %v615
    %v624 = vadd.f32 %v584, %v616
    %v625 = vadd.f32 %v585, %v617
    %v626 = vadd.f32 %v586, %v618
    %v627 = vmul.f32 %v619, 0.7978845
    %v628 = vmul.f32 %v620, 0.7978845
    %v629 = vmul.f32 %v621, 0.7978845
    %v630 = vmul.f32 %v622, 0.7978845
    %v631 = vmul.f32 %v623, 0.7978845
    %v632 = vmul.f32 %v624, 0.7978845
    %v633 = vmul.f32 %v625, 0.7978845
    %v634 = vmul.f32 %v626, 0.7978845
    %v635 = vtanh.pop %v627
    %v636 = vtanh.pop %v628
    %v637 = vtanh.pop %v629
    %v638 = vtanh.pop %v630
    %v639 = vtanh.pop %v631
    %v640 = vtanh.pop %v632
    %v641 = vtanh.pop %v633
    %v642 = vtanh.pop %v634
    %v643 = vadd.f32 %v635, 1.0
    %v644 = vadd.f32 %v636, 1.0
    %v645 = vadd.f32 %v637, 1.0
    %v646 = vadd.f32 %v638, 1.0
    %v647 = vadd.f32 %v639, 1.0
    %v648 = vadd.f32 %v640, 1.0
    %v649 = vadd.f32 %v641, 1.0
    %v650 = vadd.f32 %v642, 1.0
    %v651 = vmul.f32 %v587, %v643
    %v652 = vmul.f32 %v588, %v644
    %v653 = vmul.f32 %v589, %v645
    %v654 = vmul.f32 %v590, %v646
    %v655 = vmul.f32 %v591, %v647
    %v656 = vmul.f32 %v592, %v648
    %v657 = vmul.f32 %v593, %v649
    %v658 = vmul.f32 %v594, %v650
    %v659 = vpack.c.bf16 %v652, %v651
    %v660 = vpack.c.bf16 %v654, %v653
    %v661 = vpack.c.bf16 %v656, %v655
    %v662 = vpack.c.bf16 %v658, %v657
    %663 = vst [vmem:[%s3] sm:$0xff] %v659
    %664 = vst [vmem:[%s3 + $0x8] sm:$0xff] %v660
    %665 = vst [vmem:[%s3 + $0x10] sm:$0xff] %v661
    %666 = vst [vmem:[%s3 + $0x18] sm:$0xff] %v662
  $region21: #{closed_call.24} parent=0 // pred_fallthru
    _
  // Predicated region
  $region22: #{closed_call.24} parent=0 // pred_check
    _
  $region23: #{closed_call.24} parent=0 // pred_check_branch
    %668 = sbr.rel (0) target = $region25
  $region24: #{closed_call.24} parent=0 // pred_region
    _
  $region25: #{closed_call.24} parent=0 // pred_fallthru
    _
  // Predicated region
  $region26: #{closed_call.24} parent=0 // pred_check
    _
  $region27: #{closed_call.24} parent=0 // pred_check_branch
    %670 = sbr.rel (0) target = $region29
  $region28: #{closed_call.24} parent=0 // pred_region
    _
  $region29: #{closed_call.24} parent=0 // pred_fallthru
    _

// kernel: closed_call.25
$region0: #{closed_call.25}
  #allocation0 [shape = 'u32[]', space=smem, size = 0x4, offset = 0x4, fixed_abs, tag = 'smem constant byte address 0x4 - core index']
  #allocation1 [shape = 'u32[72,128]{1,0:T(1,128)}', space=vmem, size = 0x9000, scoped, tag = 'internal scratch']
  #allocation2 [shape = 'f32[16,256]{1,0:T(8,128)}', space=vmem, size = 0x4000, scoped, tag = 'scratch operand']
  %s0 = inlined_call_operand.vmem [shape: bf16[16,512], index: 0, kind: input, shape index: {}]
  %s1 = inlined_call_operand.vmem [shape: bf16[512,256], index: 1, kind: input, shape index: {}]
  %s2 = inlined_call_operand.vmem [shape: f32[1,256], index: 2, kind: input, shape index: {}]
  %s3 = inlined_call_operand.vmem [shape: bf16[16,256], index: 3, kind: input, shape index: {}]
  %s4 = inlined_call_operand.vmem [shape: f32[1,256], index: 4, kind: input, shape index: {}]
  %s5 = inlined_call_operand.vmem [shape: f32[1,256], index: 5, kind: input, shape index: {}]
  %s6 = inlined_call_operand.vmem [shape: bf16[16,256], index: 6, kind: output, shape index: {}]
  %s7 = sld [smem:[#allocation0]]
  $region42: #{closed_call.25} parent=0
    _
  %s9 = ssub.s32 1, %s7
  %s10 = scalar_select 0, %s9, %s7
  // Predicated region
  $region2: #{closed_call.25} parent=0 // pred_check
    _
  $region3: #{closed_call.25} parent=0 // pred_check_branch
    %12 = sbr.rel (0) target = $region5
  $region4: #{closed_call.25} parent=0 // pred_region
    _
  $region5: #{closed_call.25} parent=0 // pred_fallthru
    _
  // Predicated region
  $region6: #{closed_call.25} parent=0 // pred_check
    _
  $region7: #{closed_call.25} parent=0 // pred_check_branch
    %14 = sbr.rel (0) target = $region9
  $region8: #{closed_call.25} parent=0 // pred_region
    _
  $region9: #{closed_call.25} parent=0 // pred_fallthru
    _
  // Predicated region
  $region10: #{closed_call.25} parent=0 // pred_check
    _
  $region11: #{closed_call.25} parent=0 // pred_check_branch
    %16 = sbr.rel (0) target = $region13
  $region12: #{closed_call.25} parent=0 // pred_region
    _
  $region13: #{closed_call.25} parent=0 // pred_fallthru
    _
  // Predicated region
  $region14: #{closed_call.25} parent=0 // pred_check
    _
  $region15: #{closed_call.25} parent=0 // pred_check_branch
    %18 = sbr.rel (0) target = $region17
  $region16: #{closed_call.25} parent=0 // pred_region
    _
  $region17: #{closed_call.25} parent=0 // pred_fallthru
    _
  // Predicated region
  $region18: #{closed_call.25} parent=0 // pred_check
    _
  $region19: #{closed_call.25} parent=0 // pred_check_branch
    %20 = sbr.rel (0) target = $region21
  $region20: #{closed_call.25} parent=0 // pred_region
    _
  $region21: #{closed_call.25} parent=0 // pred_fallthru
    _
  // Predicated region
  $region22: #{closed_call.25} parent=0 // pred_check
    _
  $region23: #{closed_call.25} parent=0 // pred_check_branch
    %22 = sbr.rel (0) target = $region25
  $region24: #{closed_call.25} parent=0 // pred_region
    _
  $region25: #{closed_call.25} parent=0 // pred_fallthru
    _
  %p23 = scmp.eq.s32.totalorder 0, 0
  // Predicated region
  $region26: #{closed_call.25} parent=0 // pred_check
    %p24 = pneg %p23
  $region27: #{closed_call.25} parent=0 // pred_check_branch
    %26 = sbr.rel (%p24) target = $region29
  $region28: #{closed_call.25} parent=0 // pred_region
    %27 = vst [vmem:[#allocation2] sm:$0xff] 0.0
    %28 = vst [vmem:[#allocation2 + $0x8] sm:$0xff] 0.0
    %29 = vst [vmem:[#allocation2 + $0x10] sm:$0xff] 0.0
    %30 = vst [vmem:[#allocation2 + $0x18] sm:$0xff] 0.0
  $region29: #{closed_call.25} parent=0 // pred_fallthru
    _
  %v31 = vld [vmem:[#allocation2] sm:$0xff]
  %v32 = vld [vmem:[#allocation2 + $0x8] sm:$0xff]
  %v33 = vld [vmem:[#allocation2 + $0x10] sm:$0xff]
  %v34 = vld [vmem:[#allocation2 + $0x18] sm:$0xff]
  %v35 = vld [vmem:[%s0] sm:$0xff]
  %v36 = vld [vmem:[%s0 + $0x8] sm:$0xff]
  %v37 = vld [vmem:[%s0 + $0x10] sm:$0xff]
  %v38 = vld [vmem:[%s0 + $0x18] sm:$0xff]
  %v39 = vld [vmem:[%s1] sm:$0xff]
  %v40 = vld [vmem:[%s1 + $0x8] sm:$0xff]
  %v41 = vld [vmem:[%s1 + $0x10] sm:$0xff]
  %v42 = vld [vmem:[%s1 + $0x18] sm:$0xff]
  %v43 = vld [vmem:[%s1 + $0x20] sm:$0xff]
  %v44 = vld [vmem:[%s1 + $0x28] sm:$0xff]
  %v45 = vld [vmem:[%s1 + $0x30] sm:$0xff]
  %v46 = vld [vmem:[%s1 + $0x38] sm:$0xff]
  %v47 = vld [vmem:[%s1 + $0x40] sm:$0xff]
  %v48 = vld [vmem:[%s1 + $0x48] sm:$0xff]
  %v49 = vld [vmem:[%s1 + $0x50] sm:$0xff]
  %v50 = vld [vmem:[%s1 + $0x58] sm:$0xff]
  %v51 = vld [vmem:[%s1 + $0x60] sm:$0xff]
  %v52 = vld [vmem:[%s1 + $0x68] sm:$0xff]
  %v53 = vld [vmem:[%s1 + $0x70] sm:$0xff]
  %v54 = vld [vmem:[%s1 + $0x78] sm:$0xff]
  %v55 = vld [vmem:[%s1 + $0x80] sm:$0xff]
  %v56 = vld [vmem:[%s1 + $0x88] sm:$0xff]
  %v57 = vld [vmem:[%s1 + $0x90] sm:$0xff]
  %v58 = vld [vmem:[%s1 + $0x98] sm:$0xff]
  %v59 = vld [vmem:[%s1 + $0xa0] sm:$0xff]
  %v60 = vld [vmem:[%s1 + $0xa8] sm:$0xff]
  %v61 = vld [vmem:[%s1 + $0xb0] sm:$0xff]
  %v62 = vld [vmem:[%s1 + $0xb8] sm:$0xff]
  %v63 = vld [vmem:[%s1 + $0xc0] sm:$0xff]
  %v64 = vld [vmem:[%s1 + $0xc8] sm:$0xff]
  %v65 = vld [vmem:[%s1 + $0xd0] sm:$0xff]
  %v66 = vld [vmem:[%s1 + $0xd8] sm:$0xff]
  %v67 = vld [vmem:[%s1 + $0xe0] sm:$0xff]
  %v68 = vld [vmem:[%s1 + $0xe8] sm:$0xff]
  %v69 = vld [vmem:[%s1 + $0xf0] sm:$0xff]
  %v70 = vld [vmem:[%s1 + $0xf8] sm:$0xff]
  %v71 = vld [vmem:[%s1 + $0x100] sm:$0xff]
  %v72 = vld [vmem:[%s1 + $0x108] sm:$0xff]
  %v73 = vld [vmem:[%s1 + $0x110] sm:$0xff]
  %v74 = vld [vmem:[%s1 + $0x118] sm:$0xff]
  %v75 = vld [vmem:[%s1 + $0x120] sm:$0xff]
  %v76 = vld [vmem:[%s1 + $0x128] sm:$0xff]
  %v77 = vld [vmem:[%s1 + $0x130] sm:$0xff]
  %v78 = vld [vmem:[%s1 + $0x138] sm:$0xff]
  %v79 = vld [vmem:[%s1 + $0x140] sm:$0xff]
  %v80 = vld [vmem:[%s1 + $0x148] sm:$0xff]
  %v81 = vld [vmem:[%s1 + $0x150] sm:$0xff]
  %v82 = vld [vmem:[%s1 + $0x158] sm:$0xff]
  %v83 = vld [vmem:[%s1 + $0x160] sm:$0xff]
  %v84 = vld [vmem:[%s1 + $0x168] sm:$0xff]
  %v85 = vld [vmem:[%s1 + $0x170] sm:$0xff]
  %v86 = vld [vmem:[%s1 + $0x178] sm:$0xff]
  %v87 = vld [vmem:[%s1 + $0x180] sm:$0xff]
  %v88 = vld [vmem:[%s1 + $0x188] sm:$0xff]
  %v89 = vld [vmem:[%s1 + $0x190] sm:$0xff]
  %v90 = vld [vmem:[%s1 + $0x198] sm:$0xff]
  %v91 = vld [vmem:[%s1 + $0x1a0] sm:$0xff]
  %v92 = vld [vmem:[%s1 + $0x1a8] sm:$0xff]
  %v93 = vld [vmem:[%s1 + $0x1b0] sm:$0xff]
  %v94 = vld [vmem:[%s1 + $0x1b8] sm:$0xff]
  %v95 = vld [vmem:[%s1 + $0x1c0] sm:$0xff]
  %v96 = vld [vmem:[%s1 + $0x1c8] sm:$0xff]
  %v97 = vld [vmem:[%s1 + $0x1d0] sm:$0xff]
  %v98 = vld [vmem:[%s1 + $0x1d8] sm:$0xff]
  %v99 = vld [vmem:[%s1 + $0x1e0] sm:$0xff]
  %v100 = vld [vmem:[%s1 + $0x1e8] sm:$0xff]
  %v101 = vld [vmem:[%s1 + $0x1f0] sm:$0xff]
  %v102 = vld [vmem:[%s1 + $0x1f8] sm:$0xff]
  %v107 = vunpack.c.l.b16 %v35
  %v108 = vunpack.c.h.b16 %v35
  %v109 = vunpack.c.l.b16 %v36
  %v110 = vunpack.c.h.b16 %v36
  %v111 = vunpack.c.l.b16 %v37
  %v112 = vunpack.c.h.b16 %v37
  %v113 = vunpack.c.l.b16 %v38
  %v114 = vunpack.c.h.b16 %v38
  %v115 = vpack.c.b16 %v111, %v107
  %v116 = vpack.c.b16 %v112, %v108
  %v117 = vpack.c.b16 %v113, %v109
  %v118 = vpack.c.b16 %v114, %v110
  %v187 = vunpack.c.l.b16 %v39
  %v188 = vunpack.c.h.b16 %v39
  %v189 = vunpack.c.l.b16 %v40
  %v190 = vunpack.c.h.b16 %v40
  %v191 = vunpack.c.l.b16 %v41
  %v192 = vunpack.c.h.b16 %v41
  %v193 = vunpack.c.l.b16 %v42
  %v194 = vunpack.c.h.b16 %v42
  %v195 = vunpack.c.l.b16 %v43
  %v196 = vunpack.c.h.b16 %v43
  %v197 = vunpack.c.l.b16 %v44
  %v198 = vunpack.c.h.b16 %v44
  %v199 = vunpack.c.l.b16 %v45
  %v200 = vunpack.c.h.b16 %v45
  %v201 = vunpack.c.l.b16 %v46
  %v202 = vunpack.c.h.b16 %v46
  %v203 = vunpack.c.l.b16 %v47
  %v204 = vunpack.c.h.b16 %v47
  %v205 = vunpack.c.l.b16 %v48
  %v206 = vunpack.c.h.b16 %v48
  %v207 = vunpack.c.l.b16 %v49
  %v208 = vunpack.c.h.b16 %v49
  %v209 = vunpack.c.l.b16 %v50
  %v210 = vunpack.c.h.b16 %v50
  %v211 = vunpack.c.l.b16 %v51
  %v212 = vunpack.c.h.b16 %v51
  %v213 = vunpack.c.l.b16 %v52
  %v214 = vunpack.c.h.b16 %v52
  %v215 = vunpack.c.l.b16 %v53
  %v216 = vunpack.c.h.b16 %v53
  %v217 = vunpack.c.l.b16 %v54
  %v218 = vunpack.c.h.b16 %v54
  %v219 = vunpack.c.l.b16 %v55
  %v220 = vunpack.c.h.b16 %v55
  %v221 = vunpack.c.l.b16 %v56
  %v222 = vunpack.c.h.b16 %v56
  %v223 = vunpack.c.l.b16 %v57
  %v224 = vunpack.c.h.b16 %v57
  %v225 = vunpack.c.l.b16 %v58
  %v226 = vunpack.c.h.b16 %v58
  %v227 = vunpack.c.l.b16 %v59
  %v228 = vunpack.c.h.b16 %v59
  %v229 = vunpack.c.l.b16 %v60
  %v230 = vunpack.c.h.b16 %v60
  %v231 = vunpack.c.l.b16 %v61
  %v232 = vunpack.c.h.b16 %v61
  %v233 = vunpack.c.l.b16 %v62
  %v234 = vunpack.c.h.b16 %v62
  %v235 = vunpack.c.l.b16 %v63
  %v236 = vunpack.c.h.b16 %v63
  %v237 = vunpack.c.l.b16 %v64
  %v238 = vunpack.c.h.b16 %v64
  %v239 = vunpack.c.l.b16 %v65
  %v240 = vunpack.c.h.b16 %v65
  %v241 = vunpack.c.l.b16 %v66
  %v242 = vunpack.c.h.b16 %v66
  %v243 = vunpack.c.l.b16 %v67
  %v244 = vunpack.c.h.b16 %v67
  %v245 = vunpack.c.l.b16 %v68
  %v246 = vunpack.c.h.b16 %v68
  %v247 = vunpack.c.l.b16 %v69
  %v248 = vunpack.c.h.b16 %v69
  %v249 = vunpack.c.l.b16 %v70
  %v250 = vunpack.c.h.b16 %v70
  %v251 = vunpack.c.l.b16 %v71
  %v252 = vunpack.c.h.b16 %v71
  %v253 = vunpack.c.l.b16 %v72
  %v254 = vunpack.c.h.b16 %v72
  %v255 = vunpack.c.l.b16 %v73
  %v256 = vunpack.c.h.b16 %v73
  %v257 = vunpack.c.l.b16 %v74
  %v258 = vunpack.c.h.b16 %v74
  %v259 = vunpack.c.l.b16 %v75
  %v260 = vunpack.c.h.b16 %v75
  %v261 = vunpack.c.l.b16 %v76
  %v262 = vunpack.c.h.b16 %v76
  %v263 = vunpack.c.l.b16 %v77
  %v264 = vunpack.c.h.b16 %v77
  %v265 = vunpack.c.l.b16 %v78
  %v266 = vunpack.c.h.b16 %v78
  %v267 = vunpack.c.l.b16 %v79
  %v268 = vunpack.c.h.b16 %v79
  %v269 = vunpack.c.l.b16 %v80
  %v270 = vunpack.c.h.b16 %v80
  %v271 = vunpack.c.l.b16 %v81
  %v272 = vunpack.c.h.b16 %v81
  %v273 = vunpack.c.l.b16 %v82
  %v274 = vunpack.c.h.b16 %v82
  %v275 = vunpack.c.l.b16 %v83
  %v276 = vunpack.c.h.b16 %v83
  %v277 = vunpack.c.l.b16 %v84
  %v278 = vunpack.c.h.b16 %v84
  %v279 = vunpack.c.l.b16 %v85
  %v280 = vunpack.c.h.b16 %v85
  %v281 = vunpack.c.l.b16 %v86
  %v282 = vunpack.c.h.b16 %v86
  %v283 = vunpack.c.l.b16 %v87
  %v284 = vunpack.c.h.b16 %v87
  %v285 = vunpack.c.l.b16 %v88
  %v286 = vunpack.c.h.b16 %v88
  %v287 = vunpack.c.l.b16 %v89
  %v288 = vunpack.c.h.b16 %v89
  %v289 = vunpack.c.l.b16 %v90
  %v290 = vunpack.c.h.b16 %v90
  %v291 = vunpack.c.l.b16 %v91
  %v292 = vunpack.c.h.b16 %v91
  %v293 = vunpack.c.l.b16 %v92
  %v294 = vunpack.c.h.b16 %v92
  %v295 = vunpack.c.l.b16 %v93
  %v296 = vunpack.c.h.b16 %v93
  %v297 = vunpack.c.l.b16 %v94
  %v298 = vunpack.c.h.b16 %v94
  %v299 = vunpack.c.l.b16 %v95
  %v300 = vunpack.c.h.b16 %v95
  %v301 = vunpack.c.l.b16 %v96
  %v302 = vunpack.c.h.b16 %v96
  %v303 = vunpack.c.l.b16 %v97
  %v304 = vunpack.c.h.b16 %v97
  %v305 = vunpack.c.l.b16 %v98
  %v306 = vunpack.c.h.b16 %v98
  %v307 = vunpack.c.l.b16 %v99
  %v308 = vunpack.c.h.b16 %v99
  %v309 = vunpack.c.l.b16 %v100
  %v310 = vunpack.c.h.b16 %v100
  %v311 = vunpack.c.l.b16 %v101
  %v312 = vunpack.c.h.b16 %v101
  %v313 = vunpack.c.l.b16 %v102
  %v314 = vunpack.c.h.b16 %v102
  %v315 = vpack.c.b16 %v189, %v187
  %v316 = vpack.c.b16 %v190, %v188
  %v317 = vpack.c.b16 %v193, %v191
  %v318 = vpack.c.b16 %v194, %v192
  %v319 = vpack.c.b16 %v197, %v195
  %v320 = vpack.c.b16 %v198, %v196
  %v321 = vpack.c.b16 %v201, %v199
  %v322 = vpack.c.b16 %v202, %v200
  %v323 = vpack.c.b16 %v205, %v203
  %v324 = vpack.c.b16 %v206, %v204
  %v325 = vpack.c.b16 %v209, %v207
  %v326 = vpack.c.b16 %v210, %v208
  %v327 = vpack.c.b16 %v213, %v211
  %v328 = vpack.c.b16 %v214, %v212
  %v329 = vpack.c.b16 %v217, %v215
  %v330 = vpack.c.b16 %v218, %v216
  %v331 = vpack.c.b16 %v221, %v219
  %v332 = vpack.c.b16 %v222, %v220
  %v333 = vpack.c.b16 %v225, %v223
  %v334 = vpack.c.b16 %v226, %v224
  %v335 = vpack.c.b16 %v229, %v227
  %v336 = vpack.c.b16 %v230, %v228
  %v337 = vpack.c.b16 %v233, %v231
  %v338 = vpack.c.b16 %v234, %v232
  %v339 = vpack.c.b16 %v237, %v235
  %v340 = vpack.c.b16 %v238, %v236
  %v341 = vpack.c.b16 %v241, %v239
  %v342 = vpack.c.b16 %v242, %v240
  %v343 = vpack.c.b16 %v245, %v243
  %v344 = vpack.c.b16 %v246, %v244
  %v345 = vpack.c.b16 %v249, %v247
  %v346 = vpack.c.b16 %v250, %v248
  %v347 = vpack.c.b16 %v253, %v251
  %v348 = vpack.c.b16 %v254, %v252
  %v349 = vpack.c.b16 %v257, %v255
  %v350 = vpack.c.b16 %v258, %v256
  %v351 = vpack.c.b16 %v261, %v259
  %v352 = vpack.c.b16 %v262, %v260
  %v353 = vpack.c.b16 %v265, %v263
  %v354 = vpack.c.b16 %v266, %v264
  %v355 = vpack.c.b16 %v269, %v267
  %v356 = vpack.c.b16 %v270, %v268
  %v357 = vpack.c.b16 %v273, %v271
  %v358 = vpack.c.b16 %v274, %v272
  %v359 = vpack.c.b16 %v277, %v275
  %v360 = vpack.c.b16 %v278, %v276
  %v361 = vpack.c.b16 %v281, %v279
  %v362 = vpack.c.b16 %v282, %v280
  %v363 = vpack.c.b16 %v285, %v283
  %v364 = vpack.c.b16 %v286, %v284
  %v365 = vpack.c.b16 %v289, %v287
  %v366 = vpack.c.b16 %v290, %v288
  %v367 = vpack.c.b16 %v293, %v291
  %v368 = vpack.c.b16 %v294, %v292
  %v369 = vpack.c.b16 %v297, %v295
  %v370 = vpack.c.b16 %v298, %v296
  %v371 = vpack.c.b16 %v301, %v299
  %v372 = vpack.c.b16 %v302, %v300
  %v373 = vpack.c.b16 %v305, %v303
  %v374 = vpack.c.b16 %v306, %v304
  %v375 = vpack.c.b16 %v309, %v307
  %v376 = vpack.c.b16 %v310, %v308
  %v377 = vpack.c.b16 %v313, %v311
  %v378 = vpack.c.b16 %v314, %v312
  %443 = vmatpush.bf16.msra.mxu0 %v329
  %444 = vmatpush.bf16.msra.mxu0 %v327
  %445 = vmatpush.bf16.msra.mxu0 %v325
  %446 = vmatpush.bf16.msra.mxu0 %v323
  %447 = vmatpush.bf16.msra.mxu0 %v321
  %448 = vmatpush.bf16.msra.mxu0 %v319
  %449 = vmatpush.bf16.msra.mxu0 %v317
  %450 = vmatpush.bf16.msra.mxu0 %v315
  %451 = vmatmul.bf16.gmra.mxu0 %v115
  %v452 = vpop.f32.mrf.mxu0
  %v453 = vadd.f32 0.0, %v452
  %v454 = vpop.f32.mrf.mxu0
  %v455 = vadd.f32 0.0, %v454
  %456 = vdwg.mxu0
  %457 = vmatpush.bf16.msra.mxu0 %v345
  %458 = vmatpush.bf16.msra.mxu0 %v343
  %459 = vmatpush.bf16.msra.mxu0 %v341
  %460 = vmatpush.bf16.msra.mxu0 %v339
  %461 = vmatpush.bf16.msra.mxu0 %v337
  %462 = vmatpush.bf16.msra.mxu0 %v335
  %463 = vmatpush.bf16.msra.mxu0 %v333
  %464 = vmatpush.bf16.msra.mxu0 %v331
  %465 = vmatmul.bf16.gmra.mxu0 %v116
  %v466 = vpop.f32.mrf.mxu0
  %v467 = vadd.f32 %v453, %v466
  %v468 = vpop.f32.mrf.mxu0
  %v469 = vadd.f32 %v455, %v468
  %470 = vdwg.mxu0
  %471 = vmatpush.bf16.msra.mxu0 %v361
  %472 = vmatpush.bf16.msra.mxu0 %v359
  %473 = vmatpush.bf16.msra.mxu0 %v357
  %474 = vmatpush.bf16.msra.mxu0 %v355
  %475 = vmatpush.bf16.msra.mxu0 %v353
  %476 = vmatpush.bf16.msra.mxu0 %v351
  %477 = vmatpush.bf16.msra.mxu0 %v349
  %478 = vmatpush.bf16.msra.mxu0 %v347
  %479 = vmatmul.bf16.gmra.mxu0 %v117
  %v480 = vpop.f32.mrf.mxu0
  %v481 = vadd.f32 %v467, %v480
  %v482 = vpop.f32.mrf.mxu0
  %v483 = vadd.f32 %v469, %v482
  %484 = vdwg.mxu0
  %485 = vmatpush.bf16.msra.mxu0 %v377
  %486 = vmatpush.bf16.msra.mxu0 %v375
  %487 = vmatpush.bf16.msra.mxu0 %v373
  %488 = vmatpush.bf16.msra.mxu0 %v371
  %489 = vmatpush.bf16.msra.mxu0 %v369
  %490 = vmatpush.bf16.msra.mxu0 %v367
  %491 = vmatpush.bf16.msra.mxu0 %v365
  %492 = vmatpush.bf16.msra.mxu0 %v363
  %493 = vmatmul.bf16.gmra.mxu0 %v118
  %v494 = vpop.f32.mrf.mxu0
  %v495 = vadd.f32 %v481, %v494
  %v496 = vpop.f32.mrf.mxu0
  %v497 = vadd.f32 %v483, %v496
  %498 = vdwg.mxu0
  %499 = vmatpush.bf16.msra.mxu0 %v330
  %500 = vmatpush.bf16.msra.mxu0 %v328
  %501 = vmatpush.bf16.msra.mxu0 %v326
  %502 = vmatpush.bf16.msra.mxu0 %v324
  %503 = vmatpush.bf16.msra.mxu0 %v322
  %504 = vmatpush.bf16.msra.mxu0 %v320
  %505 = vmatpush.bf16.msra.mxu0 %v318
  %506 = vmatpush.bf16.msra.mxu0 %v316
  %507 = vmatmul.bf16.gmra.mxu0 %v115
  %v508 = vpop.f32.mrf.mxu0
  %v509 = vadd.f32 0.0, %v508
  %v510 = vpop.f32.mrf.mxu0
  %v511 = vadd.f32 0.0, %v510
  %512 = vdwg.mxu0
  %513 = vmatpush.bf16.msra.mxu0 %v346
  %514 = vmatpush.bf16.msra.mxu0 %v344
  %515 = vmatpush.bf16.msra.mxu0 %v342
  %516 = vmatpush.bf16.msra.mxu0 %v340
  %517 = vmatpush.bf16.msra.mxu0 %v338
  %518 = vmatpush.bf16.msra.mxu0 %v336
  %519 = vmatpush.bf16.msra.mxu0 %v334
  %520 = vmatpush.bf16.msra.mxu0 %v332
  %521 = vmatmul.bf16.gmra.mxu0 %v116
  %v522 = vpop.f32.mrf.mxu0
  %v523 = vadd.f32 %v509, %v522
  %v524 = vpop.f32.mrf.mxu0
  %v525 = vadd.f32 %v511, %v524
  %526 = vdwg.mxu0
  %527 = vmatpush.bf16.msra.mxu0 %v362
  %528 = vmatpush.bf16.msra.mxu0 %v360
  %529 = vmatpush.bf16.msra.mxu0 %v358
  %530 = vmatpush.bf16.msra.mxu0 %v356
  %531 = vmatpush.bf16.msra.mxu0 %v354
  %532 = vmatpush.bf16.msra.mxu0 %v352
  %533 = vmatpush.bf16.msra.mxu0 %v350
  %534 = vmatpush.bf16.msra.mxu0 %v348
  %535 = vmatmul.bf16.gmra.mxu0 %v117
  %v536 = vpop.f32.mrf.mxu0
  %v537 = vadd.f32 %v523, %v536
  %v538 = vpop.f32.mrf.mxu0
  %v539 = vadd.f32 %v525, %v538
  %540 = vdwg.mxu0
  %541 = vmatpush.bf16.msra.mxu0 %v378
  %542 = vmatpush.bf16.msra.mxu0 %v376
  %543 = vmatpush.bf16.msra.mxu0 %v374
  %544 = vmatpush.bf16.msra.mxu0 %v372
  %545 = vmatpush.bf16.msra.mxu0 %v370
  %546 = vmatpush.bf16.msra.mxu0 %v368
  %547 = vmatpush.bf16.msra.mxu0 %v366
  %548 = vmatpush.bf16.msra.mxu0 %v364
  %549 = vmatmul.bf16.gmra.mxu0 %v118
  %v550 = vpop.f32.mrf.mxu0
  %v551 = vadd.f32 %v537, %v550
  %v552 = vpop.f32.mrf.mxu0
  %v553 = vadd.f32 %v539, %v552
  %554 = vdwg.mxu0
  %v555 = vadd.f32 %v31, %v495
  %v556 = vadd.f32 %v32, %v551
  %v557 = vadd.f32 %v33, %v497
  %v558 = vadd.f32 %v34, %v553
  %559 = vst [vmem:[#allocation2] sm:$0xff] %v555
  %560 = vst [vmem:[#allocation2 + $0x8] sm:$0xff] %v556
  %561 = vst [vmem:[#allocation2 + $0x10] sm:$0xff] %v557
  %562 = vst [vmem:[#allocation2 + $0x18] sm:$0xff] %v558
  // Predicated region
  $region30: #{closed_call.25} parent=0 // pred_check
    %p563 = pneg %p23
  $region31: #{closed_call.25} parent=0 // pred_check_branch
    %565 = sbr.rel (%p563) target = $region33
  $region32: #{closed_call.25} parent=0 // pred_region
    %v566 = vld [vmem:[#allocation2] sm:$0xff]
    %v567 = vld [vmem:[#allocation2 + $0x8] sm:$0xff]
    %v568 = vld [vmem:[#allocation2 + $0x10] sm:$0xff]
    %v569 = vld [vmem:[#allocation2 + $0x18] sm:$0xff]
    %v570 = vld [vmem:[%s2] sm:$0x3]
    %v572 = vperm.slane %v570, 0
    %v573 = vperm.slane %v570, 1
    %v576 = vadd.f32 %v566, %v572
    %v577 = vadd.f32 %v567, %v573
    %v578 = vadd.f32 %v568, %v572
    %v579 = vadd.f32 %v569, %v573
    %v580 = vld [vmem:[%s3] sm:$0xff]
    %v581 = vld [vmem:[%s3 + $0x8] sm:$0xff]
    %v582 = vunpack.c.l.bf16 %v580
    %v583 = vunpack.c.h.bf16 %v580
    %v584 = vunpack.c.l.bf16 %v581
    %v585 = vunpack.c.h.bf16 %v581
    %v586 = vadd.f32 %v576, %v582
    %v587 = vadd.f32 %v577, %v583
    %v588 = vadd.f32 %v578, %v584
    %v589 = vadd.f32 %v579, %v585
    %v590 = vadd.f32 %v586, %v587
    %591 = vadd.xlane.f32.xlu0 %v590
    %v592 = vpop.xlane.xlu0 %591
    %v593 = vadd.f32 %v588, %v589
    %594 = vadd.xlane.f32.xlu0 %v593
    %v595 = vpop.xlane.xlu0 %594
    %v596 = vrcp.pop 256.0
    %v597 = vmul.f32 256.0, %v596
    %v598 = vsub.f32 1.0, %v597
    %v599 = vmul.f32 %v596, %v598
    %v600 = vadd.f32 %v596, %v599
    %vm601 = vweird.f32 %v596
    %v602 = vsel %vm601, %v596, %v600
    %v603 = vmul.f32 %v592, %v602
    %v604 = vmul.f32 %v595, %v602
    %v605 = vsub.f32 %v586, %v603
    %v606 = vsub.f32 %v587, %v603
    %v607 = vsub.f32 %v588, %v604
    %v608 = vsub.f32 %v589, %v604
    %v609 = vmul.f32 %v605, %v605
    %v610 = vmul.f32 %v606, %v606
    %v611 = vmul.f32 %v607, %v607
    %v612 = vmul.f32 %v608, %v608
    %v613 = vadd.f32 %v609, %v610
    %614 = vadd.xlane.f32.xlu0 %v613
    %v615 = vpop.xlane.xlu0 %614
    %v616 = vadd.f32 %v611, %v612
    %617 = vadd.xlane.f32.xlu0 %v616
    %v618 = vpop.xlane.xlu0 %617
    %v619 = vmul.f32 %v615, %v602
    %v620 = vmul.f32 %v618, %v602
    %v621 = vadd.f32 %v619, 1e-12
    %v622 = vadd.f32 %v620, 1e-12
    %v623 = vrsqrt.pop %v621
    %v624 = vmul.f32 %v623, %v621
    %v625 = vmul.f32 %v624, %v623
    %v626 = vmul.f32 0.5, %v625
    %v627 = vsub.f32 1.5, %v626
    %v628 = vmul.f32 %v623, %v627
    %vm629 = vweird.f32 %v621
    %vm630 = vweird.f32 %v623
    %vm631 = vmor %vm629, %vm630
    %v632 = vsel %vm631, %v623, %v628
    %v633 = vrsqrt.pop %v622
    %v634 = vmul.f32 %v633, %v622
    %v635 = vmul.f32 %v634, %v633
    %v636 = vmul.f32 0.5, %v635
    %v637 = vsub.f32 1.5, %v636
    %v638 = vmul.f32 %v633, %v637
    %vm639 = vweird.f32 %v622
    %vm640 = vweird.f32 %v633
    %vm641 = vmor %vm639, %vm640
    %v642 = vsel %vm641, %v633, %v638
    %v643 = vmul.f32 %v605, %v632
    %v644 = vmul.f32 %v606, %v632
    %v645 = vmul.f32 %v607, %v642
    %v646 = vmul.f32 %v608, %v642
    %v647 = vld [vmem:[%s4] sm:$0x3]
    %v649 = vperm.slane %v647, 0
    %v650 = vperm.slane %v647, 1
    %v653 = vmul.f32 %v643, %v649
    %v654 = vmul.f32 %v644, %v650
    %v655 = vmul.f32 %v645, %v649
    %v656 = vmul.f32 %v646, %v650
    %v657 = vld [vmem:[%s5] sm:$0x3]
    %v659 = vperm.slane %v657, 0
    %v660 = vperm.slane %v657, 1
    %v663 = vadd.f32 %v653, %v659
    %v664 = vadd.f32 %v654, %v660
    %v665 = vadd.f32 %v655, %v659
    %v666 = vadd.f32 %v656, %v660
    %v667 = vpack.c.bf16 %v664, %v663
    %v668 = vpack.c.bf16 %v666, %v665
    %669 = vst [vmem:[%s6] sm:$0xff] %v667
    %670 = vst [vmem:[%s6 + $0x8] sm:$0xff] %v668
  $region33: #{closed_call.25} parent=0 // pred_fallthru
    _
  // Predicated region
  $region34: #{closed_call.25} parent=0 // pred_check
    _
  $region35: #{closed_call.25} parent=0 // pred_check_branch
    %672 = sbr.rel (0) target = $region37
  $region36: #{closed_call.25} parent=0 // pred_region
    _
  $region37: #{closed_call.25} parent=0 // pred_fallthru
    _
  // Predicated region
  $region38: #{closed_call.25} parent=0 // pred_check
    _
  $region39: #{closed_call.25} parent=0 // pred_check_branch
    %674 = sbr.rel (0) target = $region41
  $region40: #{closed_call.25} parent=0 // pred_region
    _
  $region41: #{closed_call.25} parent=0 // pred_fallthru
    _

// kernel: _lambda_.5
$region0: #{_lambda_.5}
  #allocation0 [shape = 'u32[]', space=smem, size = 0x4, offset = 0x4, fixed_abs, tag = 'smem constant byte address 0x4 - core index']
  #allocation1 [shape = 'u32[72,128]{1,0:T(1,128)}', space=vmem, size = 0x9000, scoped, tag = 'internal scratch']
  #allocation2 [shape = 'f32[1,1]{1,0:T(1,128)S(1)}', space=vmem, size = 0x200, scoped, tag = 'scoped memory for _lambda_.5']
  %s0 = inlined_call_operand.vmem [shape: bf16[2,256], index: 0, kind: input, shape index: {}]
  %s1 = inlined_call_operand.vmem [shape: bf16[256,256], index: 1, kind: input, shape index: {}]
  %s2 = inlined_call_operand.vmem [shape: f32[1,256], index: 2, kind: input, shape index: {}]
  %s3 = inlined_call_operand.vmem [shape: bf16[256,1], index: 3, kind: input, shape index: {}]
  %s4 = inlined_call_operand.<no memory space> [shape: f32[1,1], index: 4, kind: input, shape index: {}]
  %s5 = inlined_call_operand.vmem [shape: f32[2,1], index: 5, kind: output, shape index: {}]
  %s6 = sld [smem:[#allocation0]]
  $region30: #{_lambda_.5} parent=0
    _
  %s8 = ssub.s32 1, %s6
  %s9 = scalar_select 0, %s8, %s6
  %v10 = vstv %s4
  %11 = vst [vmem:[#allocation2] sm:$0x1] %v10
  // Predicated region
  $region2: #{_lambda_.5} parent=0 // pred_check
    _
  $region3: #{_lambda_.5} parent=0 // pred_check_branch
    %13 = sbr.rel (0) target = $region5
  $region4: #{_lambda_.5} parent=0 // pred_region
    _
  $region5: #{_lambda_.5} parent=0 // pred_fallthru
    _
  // Predicated region
  $region6: #{_lambda_.5} parent=0 // pred_check
    _
  $region7: #{_lambda_.5} parent=0 // pred_check_branch
    %15 = sbr.rel (0) target = $region9
  $region8: #{_lambda_.5} parent=0 // pred_region
    _
  $region9: #{_lambda_.5} parent=0 // pred_fallthru
    _
  // Predicated region
  $region10: #{_lambda_.5} parent=0 // pred_check
    _
  $region11: #{_lambda_.5} parent=0 // pred_check_branch
    %17 = sbr.rel (0) target = $region13
  $region12: #{_lambda_.5} parent=0 // pred_region
    _
  $region13: #{_lambda_.5} parent=0 // pred_fallthru
    _
  // Predicated region
  $region14: #{_lambda_.5} parent=0 // pred_check
    _
  $region15: #{_lambda_.5} parent=0 // pred_check_branch
    %19 = sbr.rel (0) target = $region17
  $region16: #{_lambda_.5} parent=0 // pred_region
    _
  $region17: #{_lambda_.5} parent=0 // pred_fallthru
    _
  // Predicated region
  $region18: #{_lambda_.5} parent=0 // pred_check
    _
  $region19: #{_lambda_.5} parent=0 // pred_check_branch
    %21 = sbr.rel (0) target = $region21
  $region20: #{_lambda_.5} parent=0 // pred_region
    _
  $region21: #{_lambda_.5} parent=0 // pred_fallthru
    _
  %v22 = vld [vmem:[%s0] sm:$0x3]
  %v23 = vld [vmem:[%s1] sm:$0xff]
  %v24 = vld [vmem:[%s1 + $0x8] sm:$0xff]
  %v25 = vld [vmem:[%s1 + $0x10] sm:$0xff]
  %v26 = vld [vmem:[%s1 + $0x18] sm:$0xff]
  %v27 = vld [vmem:[%s1 + $0x20] sm:$0xff]
  %v28 = vld [vmem:[%s1 + $0x28] sm:$0xff]
  %v29 = vld [vmem:[%s1 + $0x30] sm:$0xff]
  %v30 = vld [vmem:[%s1 + $0x38] sm:$0xff]
  %v31 = vld [vmem:[%s1 + $0x40] sm:$0xff]
  %v32 = vld [vmem:[%s1 + $0x48] sm:$0xff]
  %v33 = vld [vmem:[%s1 + $0x50] sm:$0xff]
  %v34 = vld [vmem:[%s1 + $0x58] sm:$0xff]
  %v35 = vld [vmem:[%s1 + $0x60] sm:$0xff]
  %v36 = vld [vmem:[%s1 + $0x68] sm:$0xff]
  %v37 = vld [vmem:[%s1 + $0x70] sm:$0xff]
  %v38 = vld [vmem:[%s1 + $0x78] sm:$0xff]
  %v39 = vld [vmem:[%s1 + $0x80] sm:$0xff]
  %v40 = vld [vmem:[%s1 + $0x88] sm:$0xff]
  %v41 = vld [vmem:[%s1 + $0x90] sm:$0xff]
  %v42 = vld [vmem:[%s1 + $0x98] sm:$0xff]
  %v43 = vld [vmem:[%s1 + $0xa0] sm:$0xff]
  %v44 = vld [vmem:[%s1 + $0xa8] sm:$0xff]
  %v45 = vld [vmem:[%s1 + $0xb0] sm:$0xff]
  %v46 = vld [vmem:[%s1 + $0xb8] sm:$0xff]
  %v47 = vld [vmem:[%s1 + $0xc0] sm:$0xff]
  %v48 = vld [vmem:[%s1 + $0xc8] sm:$0xff]
  %v49 = vld [vmem:[%s1 + $0xd0] sm:$0xff]
  %v50 = vld [vmem:[%s1 + $0xd8] sm:$0xff]
  %v51 = vld [vmem:[%s1 + $0xe0] sm:$0xff]
  %v52 = vld [vmem:[%s1 + $0xe8] sm:$0xff]
  %v53 = vld [vmem:[%s1 + $0xf0] sm:$0xff]
  %v54 = vld [vmem:[%s1 + $0xf8] sm:$0xff]
  %v55 = vld [vmem:[%s2] sm:$0x3]
  %v57 = vperm.slane %v55, 0
  %v58 = vperm.slane %v55, 1
  %62 = vst [vmem:[#allocation1] ss:$9 sm:$0xff] %v22
  %v63 = vld [vmem:[#allocation1] sm:$0xff]
  %v64 = vld [vmem:[#allocation1 + $0x9] sm:$0xff]
  %v99 = vunpack.c.l.b16 %v23
  %v100 = vunpack.c.h.b16 %v23
  %v101 = vunpack.c.l.b16 %v24
  %v102 = vunpack.c.h.b16 %v24
  %v103 = vunpack.c.l.b16 %v25
  %v104 = vunpack.c.h.b16 %v25
  %v105 = vunpack.c.l.b16 %v26
  %v106 = vunpack.c.h.b16 %v26
  %v107 = vunpack.c.l.b16 %v27
  %v108 = vunpack.c.h.b16 %v27
  %v109 = vunpack.c.l.b16 %v28
  %v110 = vunpack.c.h.b16 %v28
  %v111 = vunpack.c.l.b16 %v29
  %v112 = vunpack.c.h.b16 %v29
  %v113 = vunpack.c.l.b16 %v30
  %v114 = vunpack.c.h.b16 %v30
  %v115 = vunpack.c.l.b16 %v31
  %v116 = vunpack.c.h.b16 %v31
  %v117 = vunpack.c.l.b16 %v32
  %v118 = vunpack.c.h.b16 %v32
  %v119 = vunpack.c.l.b16 %v33
  %v120 = vunpack.c.h.b16 %v33
  %v121 = vunpack.c.l.b16 %v34
  %v122 = vunpack.c.h.b16 %v34
  %v123 = vunpack.c.l.b16 %v35
  %v124 = vunpack.c.h.b16 %v35
  %v125 = vunpack.c.l.b16 %v36
  %v126 = vunpack.c.h.b16 %v36
  %v127 = vunpack.c.l.b16 %v37
  %v128 = vunpack.c.h.b16 %v37
  %v129 = vunpack.c.l.b16 %v38
  %v130 = vunpack.c.h.b16 %v38
  %v131 = vunpack.c.l.b16 %v39
  %v132 = vunpack.c.h.b16 %v39
  %v133 = vunpack.c.l.b16 %v40
  %v134 = vunpack.c.h.b16 %v40
  %v135 = vunpack.c.l.b16 %v41
  %v136 = vunpack.c.h.b16 %v41
  %v137 = vunpack.c.l.b16 %v42
  %v138 = vunpack.c.h.b16 %v42
  %v139 = vunpack.c.l.b16 %v43
  %v140 = vunpack.c.h.b16 %v43
  %v141 = vunpack.c.l.b16 %v44
  %v142 = vunpack.c.h.b16 %v44
  %v143 = vunpack.c.l.b16 %v45
  %v144 = vunpack.c.h.b16 %v45
  %v145 = vunpack.c.l.b16 %v46
  %v146 = vunpack.c.h.b16 %v46
  %v147 = vunpack.c.l.b16 %v47
  %v148 = vunpack.c.h.b16 %v47
  %v149 = vunpack.c.l.b16 %v48
  %v150 = vunpack.c.h.b16 %v48
  %v151 = vunpack.c.l.b16 %v49
  %v152 = vunpack.c.h.b16 %v49
  %v153 = vunpack.c.l.b16 %v50
  %v154 = vunpack.c.h.b16 %v50
  %v155 = vunpack.c.l.b16 %v51
  %v156 = vunpack.c.h.b16 %v51
  %v157 = vunpack.c.l.b16 %v52
  %v158 = vunpack.c.h.b16 %v52
  %v159 = vunpack.c.l.b16 %v53
  %v160 = vunpack.c.h.b16 %v53
  %v161 = vunpack.c.l.b16 %v54
  %v162 = vunpack.c.h.b16 %v54
  %v163 = vpack.c.b16 %v101, %v99
  %v164 = vpack.c.b16 %v102, %v100
  %v165 = vpack.c.b16 %v105, %v103
  %v166 = vpack.c.b16 %v106, %v104
  %v167 = vpack.c.b16 %v109, %v107
  %v168 = vpack.c.b16 %v110, %v108
  %v169 = vpack.c.b16 %v113, %v111
  %v170 = vpack.c.b16 %v114, %v112
  %v171 = vpack.c.b16 %v117, %v115
  %v172 = vpack.c.b16 %v118, %v116
  %v173 = vpack.c.b16 %v121, %v119
  %v174 = vpack.c.b16 %v122, %v120
  %v175 = vpack.c.b16 %v125, %v123
  %v176 = vpack.c.b16 %v126, %v124
  %v177 = vpack.c.b16 %v129, %v127
  %v178 = vpack.c.b16 %v130, %v128
  %v179 = vpack.c.b16 %v133, %v131
  %v180 = vpack.c.b16 %v134, %v132
  %v181 = vpack.c.b16 %v137, %v135
  %v182 = vpack.c.b16 %v138, %v136
  %v183 = vpack.c.b16 %v141, %v139
  %v184 = vpack.c.b16 %v142, %v140
  %v185 = vpack.c.b16 %v145, %v143
  %v186 = vpack.c.b16 %v146, %v144
  %v187 = vpack.c.b16 %v149, %v147
  %v188 = vpack.c.b16 %v150, %v148
  %v189 = vpack.c.b16 %v153, %v151
  %v190 = vpack.c.b16 %v154, %v152
  %v191 = vpack.c.b16 %v157, %v155
  %v192 = vpack.c.b16 %v158, %v156
  %v193 = vpack.c.b16 %v161, %v159
  %v194 = vpack.c.b16 %v162, %v160
  %227 = vmatpush.bf16.msra.mxu0 %v177
  %228 = vmatpush.bf16.msra.mxu0 %v175
  %229 = vmatpush.bf16.msra.mxu0 %v173
  %230 = vmatpush.bf16.msra.mxu0 %v171
  %231 = vmatpush.bf16.msra.mxu0 %v169
  %232 = vmatpush.bf16.msra.mxu0 %v167
  %233 = vmatpush.bf16.msra.mxu0 %v165
  %234 = vmatpush.bf16.msra.mxu0 %v163
  %235 = vmatmul.bf16.gmra.mxu0 %v63
  %v236 = vpop.f32.mrf.mxu0
  %v237 = vadd.f32 %v57, %v236
  %v238 = vpop.f32.mrf.mxu0
  %239 = vdwg.mxu0
  %240 = vmatpush.bf16.msra.mxu0 %v193
  %241 = vmatpush.bf16.msra.mxu0 %v191
  %242 = vmatpush.bf16.msra.mxu0 %v189
  %243 = vmatpush.bf16.msra.mxu0 %v187
  %244 = vmatpush.bf16.msra.mxu0 %v185
  %245 = vmatpush.bf16.msra.mxu0 %v183
  %246 = vmatpush.bf16.msra.mxu0 %v181
  %247 = vmatpush.bf16.msra.mxu0 %v179
  %248 = vmatmul.bf16.gmra.mxu0 %v64
  %v249 = vpop.f32.mrf.mxu0
  %v250 = vadd.f32 %v237, %v249
  %v251 = vpop.f32.mrf.mxu0
  %252 = vdwg.mxu0
  %253 = vmatpush.bf16.msra.mxu0 %v178
  %254 = vmatpush.bf16.msra.mxu0 %v176
  %255 = vmatpush.bf16.msra.mxu0 %v174
  %256 = vmatpush.bf16.msra.mxu0 %v172
  %257 = vmatpush.bf16.msra.mxu0 %v170
  %258 = vmatpush.bf16.msra.mxu0 %v168
  %259 = vmatpush.bf16.msra.mxu0 %v166
  %260 = vmatpush.bf16.msra.mxu0 %v164
  %261 = vmatmul.bf16.gmra.mxu0 %v63
  %v262 = vpop.f32.mrf.mxu0
  %v263 = vadd.f32 %v58, %v262
  %v264 = vpop.f32.mrf.mxu0
  %265 = vdwg.mxu0
  %266 = vmatpush.bf16.msra.mxu0 %v194
  %267 = vmatpush.bf16.msra.mxu0 %v192
  %268 = vmatpush.bf16.msra.mxu0 %v190
  %269 = vmatpush.bf16.msra.mxu0 %v188
  %270 = vmatpush.bf16.msra.mxu0 %v186
  %271 = vmatpush.bf16.msra.mxu0 %v184
  %272 = vmatpush.bf16.msra.mxu0 %v182
  %273 = vmatpush.bf16.msra.mxu0 %v180
  %274 = vmatmul.bf16.gmra.mxu0 %v64
  %v275 = vpop.f32.mrf.mxu0
  %v276 = vadd.f32 %v263, %v275
  %v277 = vpop.f32.mrf.mxu0
  %278 = vdwg.mxu0
  %v279 = vtanh.pop %v250
  %v280 = vtanh.pop %v276
  %v281 = vpack.c.bf16 %v279, %v279
  %v282 = vpack.c.bf16 %v280, %v280
  %v283 = vld [vmem:[%s3] sm:$0xf]
  %v284 = vld [vmem:[%s3 + $0x4] sm:$0xf]
  %v285 = vld [vmem:[%s3 + $0x8] sm:$0xf]
  %v286 = vld [vmem:[%s3 + $0xc] sm:$0xf]
  %v287 = vld [vmem:[%s3 + $0x10] sm:$0xf]
  %v288 = vld [vmem:[%s3 + $0x14] sm:$0xf]
  %v289 = vld [vmem:[%s3 + $0x18] sm:$0xf]
  %v290 = vld [vmem:[%s3 + $0x1c] sm:$0xf]
  %v291 = vld [vmem:[%s3 + $0x20] sm:$0xf]
  %v292 = vld [vmem:[%s3 + $0x24] sm:$0xf]
  %v293 = vld [vmem:[%s3 + $0x28] sm:$0xf]
  %v294 = vld [vmem:[%s3 + $0x2c] sm:$0xf]
  %v295 = vld [vmem:[%s3 + $0x30] sm:$0xf]
  %v296 = vld [vmem:[%s3 + $0x34] sm:$0xf]
  %v297 = vld [vmem:[%s3 + $0x38] sm:$0xf]
  %v298 = vld [vmem:[%s3 + $0x3c] sm:$0xf]
  %v299 = vld [vmem:[%s3 + $0x40] sm:$0xf]
  %v300 = vld [vmem:[%s3 + $0x44] sm:$0xf]
  %v301 = vld [vmem:[%s3 + $0x48] sm:$0xf]
  %v302 = vld [vmem:[%s3 + $0x4c] sm:$0xf]
  %v303 = vld [vmem:[%s3 + $0x50] sm:$0xf]
  %v304 = vld [vmem:[%s3 + $0x54] sm:$0xf]
  %v305 = vld [vmem:[%s3 + $0x58] sm:$0xf]
  %v306 = vld [vmem:[%s3 + $0x5c] sm:$0xf]
  %v307 = vld [vmem:[%s3 + $0x60] sm:$0xf]
  %v308 = vld [vmem:[%s3 + $0x64] sm:$0xf]
  %v309 = vld [vmem:[%s3 + $0x68] sm:$0xf]
  %v310 = vld [vmem:[%s3 + $0x6c] sm:$0xf]
  %v311 = vld [vmem:[%s3 + $0x70] sm:$0xf]
  %v312 = vld [vmem:[%s3 + $0x74] sm:$0xf]
  %v313 = vld [vmem:[%s3 + $0x78] sm:$0xf]
  %v314 = vld [vmem:[%s3 + $0x7c] sm:$0xf]
  %v315 = vld [vmem:[#allocation2] sm:$0x1]
  %v317 = vperm.slane %v315, 0
  %v351 = vunpack.c.l.b16 %v283
  %v352 = vunpack.c.l.b16 %v284
  %v353 = vunpack.c.l.b16 %v285
  %v354 = vunpack.c.l.b16 %v286
  %v355 = vunpack.c.l.b16 %v287
  %v356 = vunpack.c.l.b16 %v288
  %v357 = vunpack.c.l.b16 %v289
  %v358 = vunpack.c.l.b16 %v290
  %v359 = vunpack.c.l.b16 %v291
  %v360 = vunpack.c.l.b16 %v292
  %v361 = vunpack.c.l.b16 %v293
  %v362 = vunpack.c.l.b16 %v294
  %v363 = vunpack.c.l.b16 %v295
  %v364 = vunpack.c.l.b16 %v296
  %v365 = vunpack.c.l.b16 %v297
  %v366 = vunpack.c.l.b16 %v298
  %v367 = vunpack.c.l.b16 %v299
  %v368 = vunpack.c.l.b16 %v300
  %v369 = vunpack.c.l.b16 %v301
  %v370 = vunpack.c.l.b16 %v302
  %v371 = vunpack.c.l.b16 %v303
  %v372 = vunpack.c.l.b16 %v304
  %v373 = vunpack.c.l.b16 %v305
  %v374 = vunpack.c.l.b16 %v306
  %v375 = vunpack.c.l.b16 %v307
  %v376 = vunpack.c.l.b16 %v308
  %v377 = vunpack.c.l.b16 %v309
  %v378 = vunpack.c.l.b16 %v310
  %v379 = vunpack.c.l.b16 %v311
  %v380 = vunpack.c.l.b16 %v312
  %v381 = vunpack.c.l.b16 %v313
  %v382 = vunpack.c.l.b16 %v314
  %v383 = vpack.c.b16 %v352, %v351
  %v384 = vpack.c.b16 %v354, %v353
  %v385 = vpack.c.b16 %v356, %v355
  %v386 = vpack.c.b16 %v358, %v357
  %v387 = vpack.c.b16 %v360, %v359
  %v388 = vpack.c.b16 %v362, %v361
  %v389 = vpack.c.b16 %v364, %v363
  %v390 = vpack.c.b16 %v366, %v365
  %v391 = vpack.c.b16 %v368, %v367
  %v392 = vpack.c.b16 %v370, %v369
  %v393 = vpack.c.b16 %v372, %v371
  %v394 = vpack.c.b16 %v374, %v373
  %v395 = vpack.c.b16 %v376, %v375
  %v396 = vpack.c.b16 %v378, %v377
  %v397 = vpack.c.b16 %v380, %v379
  %v398 = vpack.c.b16 %v382, %v381
  %415 = vmatpush.bf16.msra.mxu0 %v390
  %416 = vmatpush.bf16.msra.mxu0 %v389
  %417 = vmatpush.bf16.msra.mxu0 %v388
  %418 = vmatpush.bf16.msra.mxu0 %v387
  %419 = vmatpush.bf16.msra.mxu0 %v386
  %420 = vmatpush.bf16.msra.mxu0 %v385
  %421 = vmatpush.bf16.msra.mxu0 %v384
  %422 = vmatpush.bf16.msra.mxu0 %v383
  %423 = vmatmul.bf16.gmra.mxu0 %v281
  %v424 = vpop.f32.mrf.mxu0
  %v425 = vadd.f32 %v317, %v424
  %v426 = vpop.f32.mrf.mxu0
  %427 = vdwg.mxu0
  %428 = vmatpush.bf16.msra.mxu0 %v398
  %429 = vmatpush.bf16.msra.mxu0 %v397
  %430 = vmatpush.bf16.msra.mxu0 %v396
  %431 = vmatpush.bf16.msra.mxu0 %v395
  %432 = vmatpush.bf16.msra.mxu0 %v394
  %433 = vmatpush.bf16.msra.mxu0 %v393
  %434 = vmatpush.bf16.msra.mxu0 %v392
  %435 = vmatpush.bf16.msra.mxu0 %v391
  %436 = vmatmul.bf16.gmra.mxu0 %v282
  %v437 = vpop.f32.mrf.mxu0
  %v438 = vadd.f32 %v425, %v437
  %v439 = vpop.f32.mrf.mxu0
  %440 = vdwg.mxu0
  %vm441 = vcmask 1024
  %442 = vst.msk [vmem:[%s5] sm:$0x3] %vm441, %v438
  // Predicated region
  $region22: #{_lambda_.5} parent=0 // pred_check
    _
  $region23: #{_lambda_.5} parent=0 // pred_check_branch
    %444 = sbr.rel (0) target = $region25
  $region24: #{_lambda_.5} parent=0 // pred_region
    _
  $region25: #{_lambda_.5} parent=0 // pred_fallthru
    _
  // Predicated region
  $region26: #{_lambda_.5} parent=0 // pred_check
    _
  $region27: #{_lambda_.5} parent=0 // pred_check_branch
    %446 = sbr.rel (0) target = $region29
  $region28: #{_lambda_.5} parent=0 // pred_region
    _
  $region29: #{_lambda_.5} parent=0 // pred_fallthru
    _

</llo_original>
